<compile_context>
chip_gen: v6e
topology: v6e:2x2x1
jax: 0.10.0
libtpu: 0.0.40
codegen_flags: <defaults>
</compile_context>

<pallas_src>
import jax
import jax.numpy as jnp
from jax.experimental import pallas as pl
from jax.experimental.pallas import tpu as pltpu


_INV_SQRT2 = 0.7071067811865476


def _shift_by_one(x, axis):
    """result[.., i, ..] = x[.., i+1, ..] (wraps at the end; wrapped values are
    discarded by the wrapper).  Uses the XLU rotate when the 2-D tile is
    (8,128)-aligned, otherwise a safe concat-of-slices fallback (small test
    shapes)."""
    h, w = x.shape[-2], x.shape[-1]
    size = x.shape[axis]
    if h % 8 == 0 and w % 128 == 0:
        # XLU slot (idle in this kernel) instead of a VALU/ld-st relayout copy.
        return pltpu.roll(x, shift=size - 1, axis=axis)
    return jnp.roll(x, shift=-1, axis=axis)


def _erf(x):
    # Abramowitz & Stegun 7.1.26 rational approximation (max abs err ~1.5e-7,
    # i.e. float32-level accuracy).  Uses mul/add/exp + an EUP reciprocal
    # estimate refined by one Newton step, so the divide stays off the VALU.
    a1, a2, a3, a4, a5 = (0.254829592, -0.284496736, 1.421413741,
                          -1.453152027, 1.061405429)
    p = 0.3275911
    ax = jnp.abs(x)
    d = 1.0 + p * ax
    r = pl.reciprocal(d, approx=True)      # EUP estimate
    t = r * (2.0 - d * r)                  # one Newton step -> ~f32 accurate
    poly = ((((a5 * t + a4) * t + a3) * t + a2) * t + a1) * t
    e = 1.0 - poly * jnp.exp(-x * x)
    return jnp.where(x >= 0.0, e, -e)      # erf is odd: single select


def _gelu_erf(v):
    # exactly as written in the torch module:
    #   v2 = v*0.5 ; v3 = v/sqrt(2) ; v6 = v2 * (erf(v3) + 1)
    return (v * 0.5) * (_erf(v * _INV_SQRT2) + 1.0)


def _convt_gelu_kernel(x_ref, w_ref, b_ref, o_ref):
    # x_ref: (1, Cin, H, W)      f32 VMEM   one batch element, NCHW
    # w_ref: (Cout*kH*kW,)       f32 SMEM   flattened spatially-flipped taps
    # b_ref: (Cout,)             f32 SMEM
    # o_ref: (1, Cout, H, W)     f32 VMEM   last row/col garbage (sliced off
    #                                       by the wrapper) -> lane-dense store
    cin = x_ref.shape[1]
    cout = o_ref.shape[1]
    group_out = cout // cin

    for g in range(cin):                          # 4 groups, fully unrolled
        xg = x_ref[0, g]                          # (H, W)
        # the 2x2 shifted windows, shared by this group's 4 output channels
        x01 = _shift_by_one(xg, axis=1)           # x[y, x+1]
        x10 = _shift_by_one(xg, axis=0)           # x[y+1, x]
        x11 = _shift_by_one(x01, axis=0)          # x[y+1, x+1]
        for j in range(group_out):                # 4 output channels per group
            co = g * group_out + j
            acc = (b_ref[co]
                   + xg * w_ref[co * 4 + 0] + x01 * w_ref[co * 4 + 1]
                   + x10 * w_ref[co * 4 + 2] + x11 * w_ref[co * 4 + 3])
            o_ref[0, co] = _gelu_erf(acc)


def conv_transpose_gelu(x, weight, bias):
    """x: (N, 4, H, W) f32 NCHW.
    weight: (4, 4, 2, 2) torch ConvTranspose2d layout (in_ch, out_ch/groups, kH, kW).
    bias: (16,). Returns (N, 16, H-1, W-1) NCHW (stride=1, padding=1, k=2)."""
    N, Cin, H, W = x.shape
    if H < 2 or W < 2:
        raise ValueError("spatial dims must be >= 2 for kernel=2, padding=1")
    group_out, kH, kW = weight.shape[1], weight.shape[2], weight.shape[3]
    Cout = Cin * group_out
    # conv_transpose output size with stride=1, padding=1:
    Ho = (H - 1) - 2 * 1 + kH          # = H - 1
    Wo = (W - 1) - 2 * 1 + kW          # = W - 1

    # transposed conv (stride=1, pad=1) == VALID correlation with flipped taps.
    # w_taps[co*4 + dy*2 + dx] = weight[co//4, co%4, kH-1-dy, kW-1-dx]
    w_taps = (weight.reshape(Cout, kH, kW)[:, ::-1, ::-1]
              .reshape(Cout * kH * kW).astype(jnp.float32))
    b = bias.astype(jnp.float32)

    out_full = pl.pallas_call(
        _convt_gelu_kernel,
        out_shape=jax.ShapeDtypeStruct((N, Cout, H, W), jnp.float32),
        grid=(N,),
        in_specs=[
            pl.BlockSpec((1, Cin, H, W), lambda n: (n, 0, 0, 0)),
            pl.BlockSpec(memory_space=pltpu.MemorySpace.SMEM),   # weight taps
            pl.BlockSpec(memory_space=pltpu.MemorySpace.SMEM),   # bias
        ],
        out_specs=pl.BlockSpec((1, Cout, H, W), lambda n: (n, 0, 0, 0)),
        compiler_params=pltpu.CompilerParams(
            dimension_semantics=("parallel",)),
    )(x.astype(jnp.float32), w_taps, b)

    # drop the wrapped last row/column (the conv output is (H-1, W-1))
    return out_full[:, :, :Ho, :Wo]


if __name__ == "__main__":
    key = jax.random.PRNGKey(0)
    k1, k2, k3 = jax.random.split(key, 3)

    # small shapes consistent with the module (in_channels must be 4)
    N, Cin, H, W = 2, 4, 16, 16
    group_out, kH, kW = 4, 2, 2
    Cout = Cin * group_out

    x = jax.random.normal(k1, (N, Cin, H, W), dtype=jnp.float32)
    # deterministic synthetic parameters (torch ConvTranspose2d weight layout)
    weight = 0.3 * jax.random.normal(k2, (Cin, group_out, kH, kW),
                                     dtype=jnp.float32)
    bias = 0.1 * jax.random.normal(k3, (Cout,), dtype=jnp.float32)

    out = conv_transpose_gelu(x, weight, bias)
    out = jax.block_until_ready(out)

    # pure-JAX reference check
    w_flip = weight[:, :, ::-1, ::-1].reshape(Cout, 1, kH, kW)  # OIHW, I=1 (grouped)
    ref = jax.lax.conv_general_dilated(
        x, w_flip, window_strides=(1, 1), padding="VALID",
        dimension_numbers=("NCHW", "OIHW", "NCHW"),
        feature_group_count=Cin)
    ref = ref + bias.reshape(1, Cout, 1, 1)
    ref = (ref * 0.5) * (jax.scipy.special.erf(ref * 0.7071067811865476) + 1.0)

    assert out.shape == (N, Cout, H - 1, W - 1), out.shape
    assert jnp.allclose(out, ref, atol=1e-5, rtol=1e-5), float(
        jnp.max(jnp.abs(out - ref)))
    print("KERNEL_OK")
</pallas_src>

<mosaic_0001>
module attributes {stable_mosaic.version = 11 : i64} {
  func.func @_convt_gelu_kernel(%arg0: i32, %arg1: memref<1x4x16x16xf32, #tpu.memory_space<vmem>>, %arg2: memref<64xf32, #tpu.memory_space<smem>>, %arg3: memref<16xf32, #tpu.memory_space<smem>>, %arg4: memref<1x16x16x16xf32, #tpu.memory_space<vmem>>) attributes {dimension_semantics = [#tpu.dimension_semantics<parallel>], iteration_bounds = array<i64: 2>, scalar_prefetch = 0 : i64, scratch_operands = 0 : i64, tpu.core_type = #tpu.core_type<tc>, window_params = [{transform_indices = @transform_0, window_bounds = array<i64: 1, 4, 16, 16>}, {transform_indices = @transform_1, window_bounds = array<i64: 64>}, {transform_indices = @transform_2, window_bounds = array<i64: 16>}, {transform_indices = @transform_3, window_bounds = array<i64: 1, 16, 16, 16>}]} {
    %c0 = arith.constant 0 : index
    %c0_0 = arith.constant 0 : index
    %c0_1 = arith.constant 0 : index
    %c0_2 = arith.constant 0 : index
    %0 = vector.load %arg1[%c0, %c0_0, %c0_1, %c0_2] : memref<1x4x16x16xf32, #tpu.memory_space<vmem>>, vector<1x1x16x16xf32>
    %1 = vector.shape_cast %0 : vector<1x1x16x16xf32> to vector<16x16xf32>
    %2 = vector.extract_strided_slice %1 {offsets = [0, 1], sizes = [16, 15], strides = [1, 1]} : vector<16x16xf32> to vector<16x15xf32>
    %3 = vector.extract_strided_slice %1 {offsets = [0, 0], sizes = [16, 1], strides = [1, 1]} : vector<16x16xf32> to vector<16x1xf32>
    %4 = tpu.concatenate %2, %3 in 1 : vector<16x15xf32>, vector<16x1xf32> -> vector<16x16xf32>
    %5 = vector.extract_strided_slice %1 {offsets = [1, 0], sizes = [15, 16], strides = [1, 1]} : vector<16x16xf32> to vector<15x16xf32>
    %6 = vector.extract_strided_slice %1 {offsets = [0, 0], sizes = [1, 16], strides = [1, 1]} : vector<16x16xf32> to vector<1x16xf32>
    %7 = tpu.concatenate %5, %6 in 0 : vector<15x16xf32>, vector<1x16xf32> -> vector<16x16xf32>
    %8 = vector.extract_strided_slice %4 {offsets = [1, 0], sizes = [15, 16], strides = [1, 1]} : vector<16x16xf32> to vector<15x16xf32>
    %9 = vector.extract_strided_slice %4 {offsets = [0, 0], sizes = [1, 16], strides = [1, 1]} : vector<16x16xf32> to vector<1x16xf32>
    %10 = tpu.concatenate %8, %9 in 0 : vector<15x16xf32>, vector<1x16xf32> -> vector<16x16xf32>
    %c0_3 = arith.constant 0 : index
    %11 = memref.load %arg3[%c0_3] : memref<16xf32, #tpu.memory_space<smem>>
    %c0_4 = arith.constant 0 : index
    %12 = memref.load %arg2[%c0_4] : memref<64xf32, #tpu.memory_space<smem>>
    %13 = vector.broadcast %12 : f32 to vector<16x16xf32>
    %14 = arith.mulf %1, %13 : vector<16x16xf32>
    %15 = vector.broadcast %11 : f32 to vector<16x16xf32>
    %16 = arith.addf %15, %14 : vector<16x16xf32>
    %c1 = arith.constant 1 : index
    %17 = memref.load %arg2[%c1] : memref<64xf32, #tpu.memory_space<smem>>
    %18 = vector.broadcast %17 : f32 to vector<16x16xf32>
    %19 = arith.mulf %4, %18 : vector<16x16xf32>
    %20 = arith.addf %16, %19 : vector<16x16xf32>
    %c2 = arith.constant 2 : index
    %21 = memref.load %arg2[%c2] : memref<64xf32, #tpu.memory_space<smem>>
    %22 = vector.broadcast %21 : f32 to vector<16x16xf32>
    %23 = arith.mulf %7, %22 : vector<16x16xf32>
    %24 = arith.addf %20, %23 : vector<16x16xf32>
    %c3 = arith.constant 3 : index
    %25 = memref.load %arg2[%c3] : memref<64xf32, #tpu.memory_space<smem>>
    %26 = vector.broadcast %25 : f32 to vector<16x16xf32>
    %27 = arith.mulf %10, %26 : vector<16x16xf32>
    %28 = arith.addf %24, %27 : vector<16x16xf32>
    %cst = arith.constant 5.000000e-01 : f32
    %29 = vector.broadcast %cst : f32 to vector<16x16xf32>
    %30 = arith.mulf %28, %29 : vector<16x16xf32>
    %cst_5 = arith.constant 0.707106769 : f32
    %31 = vector.broadcast %cst_5 : f32 to vector<16x16xf32>
    %32 = arith.mulf %28, %31 : vector<16x16xf32>
    %33 = math.absf %32 : vector<16x16xf32>
    %cst_6 = arith.constant 0.327591091 : f32
    %34 = vector.broadcast %cst_6 : f32 to vector<16x16xf32>
    %35 = arith.mulf %34, %33 : vector<16x16xf32>
    %cst_7 = arith.constant 1.000000e+00 : f32
    %36 = vector.broadcast %cst_7 : f32 to vector<16x16xf32>
    %37 = arith.addf %36, %35 : vector<16x16xf32>
    %38 = tpu.reciprocal %37 {approx = true} : vector<16x16xf32> -> vector<16x16xf32>
    %39 = arith.mulf %37, %38 : vector<16x16xf32>
    %cst_8 = arith.constant 2.000000e+00 : f32
    %40 = vector.broadcast %cst_8 : f32 to vector<16x16xf32>
    %41 = arith.subf %40, %39 : vector<16x16xf32>
    %42 = arith.mulf %38, %41 : vector<16x16xf32>
    %cst_9 = arith.constant 1.06140542 : f32
    %43 = vector.broadcast %cst_9 : f32 to vector<16x16xf32>
    %44 = arith.mulf %43, %42 : vector<16x16xf32>
    %cst_10 = arith.constant -1.45315206 : f32
    %45 = vector.broadcast %cst_10 : f32 to vector<16x16xf32>
    %46 = arith.addf %44, %45 : vector<16x16xf32>
    %47 = arith.mulf %46, %42 : vector<16x16xf32>
    %cst_11 = arith.constant 1.42141378 : f32
    %48 = vector.broadcast %cst_11 : f32 to vector<16x16xf32>
    %49 = arith.addf %47, %48 : vector<16x16xf32>
    %50 = arith.mulf %49, %42 : vector<16x16xf32>
    %cst_12 = arith.constant -0.284496725 : f32
    %51 = vector.broadcast %cst_12 : f32 to vector<16x16xf32>
    %52 = arith.addf %50, %51 : vector<16x16xf32>
    %53 = arith.mulf %52, %42 : vector<16x16xf32>
    %cst_13 = arith.constant 0.254829586 : f32
    %54 = vector.broadcast %cst_13 : f32 to vector<16x16xf32>
    %55 = arith.addf %53, %54 : vector<16x16xf32>
    %56 = arith.mulf %55, %42 : vector<16x16xf32>
    %cst_14 = arith.constant 0.000000e+00 : f32
    %57 = vector.broadcast %cst_14 : f32 to vector<16x16xf32>
    %58 = arith.subf %57, %32 : vector<16x16xf32>
    %59 = arith.mulf %58, %32 : vector<16x16xf32>
    %60 = math.exp %59 : vector<16x16xf32>
    %61 = arith.mulf %56, %60 : vector<16x16xf32>
    %cst_15 = arith.constant 1.000000e+00 : f32
    %62 = vector.broadcast %cst_15 : f32 to vector<16x16xf32>
    %63 = arith.subf %62, %61 : vector<16x16xf32>
    %cst_16 = arith.constant 0.000000e+00 : f32
    %64 = vector.broadcast %cst_16 : f32 to vector<16x16xf32>
    %65 = arith.cmpf oge, %32, %64 : vector<16x16xf32>
    %cst_17 = arith.constant 0.000000e+00 : f32
    %66 = vector.broadcast %cst_17 : f32 to vector<16x16xf32>
    %67 = arith.subf %66, %63 : vector<16x16xf32>
    %68 = arith.select %65, %63, %67 : vector<16x16xi1>, vector<16x16xf32>
    %cst_18 = arith.constant 1.000000e+00 : f32
    %69 = vector.broadcast %cst_18 : f32 to vector<16x16xf32>
    %70 = arith.addf %68, %69 : vector<16x16xf32>
    %71 = arith.mulf %30, %70 : vector<16x16xf32>
    %c0_19 = arith.constant 0 : index
    %c0_20 = arith.constant 0 : index
    %c0_21 = arith.constant 0 : index
    %c0_22 = arith.constant 0 : index
    %72 = vector.load %arg4[%c0_19, %c0_20, %c0_21, %c0_22] : memref<1x16x16x16xf32, #tpu.memory_space<vmem>>, vector<1x1x16x16xf32>
    %73 = vector.shape_cast %72 : vector<1x1x16x16xf32> to vector<16x16xf32>
    %74 = vector.shape_cast %71 : vector<16x16xf32> to vector<1x1x16x16xf32>
    tpu.vector_store %arg4[%c0_19, %c0_20, %c0_21, %c0_22], %74 {strides = array<i32>} : memref<1x16x16x16xf32, #tpu.memory_space<vmem>>, vector<1x1x16x16xf32>,
    %c1_23 = arith.constant 1 : index
    %75 = memref.load %arg3[%c1_23] : memref<16xf32, #tpu.memory_space<smem>>
    %c4 = arith.constant 4 : index
    %76 = memref.load %arg2[%c4] : memref<64xf32, #tpu.memory_space<smem>>
    %77 = vector.broadcast %76 : f32 to vector<16x16xf32>
    %78 = arith.mulf %1, %77 : vector<16x16xf32>
    %79 = vector.broadcast %75 : f32 to vector<16x16xf32>
    %80 = arith.addf %79, %78 : vector<16x16xf32>
    %c5 = arith.constant 5 : index
    %81 = memref.load %arg2[%c5] : memref<64xf32, #tpu.memory_space<smem>>
    %82 = vector.broadcast %81 : f32 to vector<16x16xf32>
    %83 = arith.mulf %4, %82 : vector<16x16xf32>
    %84 = arith.addf %80, %83 : vector<16x16xf32>
    %c6 = arith.constant 6 : index
    %85 = memref.load %arg2[%c6] : memref<64xf32, #tpu.memory_space<smem>>
    %86 = vector.broadcast %85 : f32 to vector<16x16xf32>
    %87 = arith.mulf %7, %86 : vector<16x16xf32>
    %88 = arith.addf %84, %87 : vector<16x16xf32>
    %c7 = arith.constant 7 : index
    %89 = memref.load %arg2[%c7] : memref<64xf32, #tpu.memory_space<smem>>
    %90 = vector.broadcast %89 : f32 to vector<16x16xf32>
    %91 = arith.mulf %10, %90 : vector<16x16xf32>
    %92 = arith.addf %88, %91 : vector<16x16xf32>
    %cst_24 = arith.constant 5.000000e-01 : f32
    %93 = vector.broadcast %cst_24 : f32 to vector<16x16xf32>
    %94 = arith.mulf %92, %93 : vector<16x16xf32>
    %cst_25 = arith.constant 0.707106769 : f32
    %95 = vector.broadcast %cst_25 : f32 to vector<16x16xf32>
    %96 = arith.mulf %92, %95 : vector<16x16xf32>
    %97 = math.absf %96 : vector<16x16xf32>
    %cst_26 = arith.constant 0.327591091 : f32
    %98 = vector.broadcast %cst_26 : f32 to vector<16x16xf32>
    %99 = arith.mulf %98, %97 : vector<16x16xf32>
    %cst_27 = arith.constant 1.000000e+00 : f32
    %100 = vector.broadcast %cst_27 : f32 to vector<16x16xf32>
    %101 = arith.addf %100, %99 : vector<16x16xf32>
    %102 = tpu.reciprocal %101 {approx = true} : vector<16x16xf32> -> vector<16x16xf32>
    %103 = arith.mulf %101, %102 : vector<16x16xf32>
    %cst_28 = arith.constant 2.000000e+00 : f32
    %104 = vector.broadcast %cst_28 : f32 to vector<16x16xf32>
    %105 = arith.subf %104, %103 : vector<16x16xf32>
    %106 = arith.mulf %102, %105 : vector<16x16xf32>
    %cst_29 = arith.constant 1.06140542 : f32
    %107 = vector.broadcast %cst_29 : f32 to vector<16x16xf32>
    %108 = arith.mulf %107, %106 : vector<16x16xf32>
    %cst_30 = arith.constant -1.45315206 : f32
    %109 = vector.broadcast %cst_30 : f32 to vector<16x16xf32>
    %110 = arith.addf %108, %109 : vector<16x16xf32>
    %111 = arith.mulf %110, %106 : vector<16x16xf32>
    %cst_31 = arith.constant 1.42141378 : f32
    %112 = vector.broadcast %cst_31 : f32 to vector<16x16xf32>
    %113 = arith.addf %111, %112 : vector<16x16xf32>
    %114 = arith.mulf %113, %106 : vector<16x16xf32>
    %cst_32 = arith.constant -0.284496725 : f32
    %115 = vector.broadcast %cst_32 : f32 to vector<16x16xf32>
    %116 = arith.addf %114, %115 : vector<16x16xf32>
    %117 = arith.mulf %116, %106 : vector<16x16xf32>
    %cst_33 = arith.constant 0.254829586 : f32
    %118 = vector.broadcast %cst_33 : f32 to vector<16x16xf32>
    %119 = arith.addf %117, %118 : vector<16x16xf32>
    %120 = arith.mulf %119, %106 : vector<16x16xf32>
    %cst_34 = arith.constant 0.000000e+00 : f32
    %121 = vector.broadcast %cst_34 : f32 to vector<16x16xf32>
    %122 = arith.subf %121, %96 : vector<16x16xf32>
    %123 = arith.mulf %122, %96 : vector<16x16xf32>
    %124 = math.exp %123 : vector<16x16xf32>
    %125 = arith.mulf %120, %124 : vector<16x16xf32>
    %cst_35 = arith.constant 1.000000e+00 : f32
    %126 = vector.broadcast %cst_35 : f32 to vector<16x16xf32>
    %127 = arith.subf %126, %125 : vector<16x16xf32>
    %cst_36 = arith.constant 0.000000e+00 : f32
    %128 = vector.broadcast %cst_36 : f32 to vector<16x16xf32>
    %129 = arith.cmpf oge, %96, %128 : vector<16x16xf32>
    %cst_37 = arith.constant 0.000000e+00 : f32
    %130 = vector.broadcast %cst_37 : f32 to vector<16x16xf32>
    %131 = arith.subf %130, %127 : vector<16x16xf32>
    %132 = arith.select %129, %127, %131 : vector<16x16xi1>, vector<16x16xf32>
    %cst_38 = arith.constant 1.000000e+00 : f32
    %133 = vector.broadcast %cst_38 : f32 to vector<16x16xf32>
    %134 = arith.addf %132, %133 : vector<16x16xf32>
    %135 = arith.mulf %94, %134 : vector<16x16xf32>
    %c0_39 = arith.constant 0 : index
    %c1_40 = arith.constant 1 : index
    %c0_41 = arith.constant 0 : index
    %c0_42 = arith.constant 0 : index
    %136 = vector.load %arg4[%c0_39, %c1_40, %c0_41, %c0_42] : memref<1x16x16x16xf32, #tpu.memory_space<vmem>>, vector<1x1x16x16xf32>
    %137 = vector.shape_cast %136 : vector<1x1x16x16xf32> to vector<16x16xf32>
    %138 = vector.shape_cast %135 : vector<16x16xf32> to vector<1x1x16x16xf32>
    tpu.vector_store %arg4[%c0_39, %c1_40, %c0_41, %c0_42], %138 {strides = array<i32>} : memref<1x16x16x16xf32, #tpu.memory_space<vmem>>, vector<1x1x16x16xf32>,
    %c2_43 = arith.constant 2 : index
    %139 = memref.load %arg3[%c2_43] : memref<16xf32, #tpu.memory_space<smem>>
    %c8 = arith.constant 8 : index
    %140 = memref.load %arg2[%c8] : memref<64xf32, #tpu.memory_space<smem>>
    %141 = vector.broadcast %140 : f32 to vector<16x16xf32>
    %142 = arith.mulf %1, %141 : vector<16x16xf32>
    %143 = vector.broadcast %139 : f32 to vector<16x16xf32>
    %144 = arith.addf %143, %142 : vector<16x16xf32>
    %c9 = arith.constant 9 : index
    %145 = memref.load %arg2[%c9] : memref<64xf32, #tpu.memory_space<smem>>
    %146 = vector.broadcast %145 : f32 to vector<16x16xf32>
    %147 = arith.mulf %4, %146 : vector<16x16xf32>
    %148 = arith.addf %144, %147 : vector<16x16xf32>
    %c10 = arith.constant 10 : index
    %149 = memref.load %arg2[%c10] : memref<64xf32, #tpu.memory_space<smem>>
    %150 = vector.broadcast %149 : f32 to vector<16x16xf32>
    %151 = arith.mulf %7, %150 : vector<16x16xf32>
    %152 = arith.addf %148, %151 : vector<16x16xf32>
    %c11 = arith.constant 11 : index
    %153 = memref.load %arg2[%c11] : memref<64xf32, #tpu.memory_space<smem>>
    %154 = vector.broadcast %153 : f32 to vector<16x16xf32>
    %155 = arith.mulf %10, %154 : vector<16x16xf32>
    %156 = arith.addf %152, %155 : vector<16x16xf32>
    %cst_44 = arith.constant 5.000000e-01 : f32
    %157 = vector.broadcast %cst_44 : f32 to vector<16x16xf32>
    %158 = arith.mulf %156, %157 : vector<16x16xf32>
    %cst_45 = arith.constant 0.707106769 : f32
    %159 = vector.broadcast %cst_45 : f32 to vector<16x16xf32>
    %160 = arith.mulf %156, %159 : vector<16x16xf32>
    %161 = math.absf %160 : vector<16x16xf32>
    %cst_46 = arith.constant 0.327591091 : f32
    %162 = vector.broadcast %cst_46 : f32 to vector<16x16xf32>
    %163 = arith.mulf %162, %161 : vector<16x16xf32>
    %cst_47 = arith.constant 1.000000e+00 : f32
    %164 = vector.broadcast %cst_47 : f32 to vector<16x16xf32>
    %165 = arith.addf %164, %163 : vector<16x16xf32>
    %166 = tpu.reciprocal %165 {approx = true} : vector<16x16xf32> -> vector<16x16xf32>
    %167 = arith.mulf %165, %166 : vector<16x16xf32>
    %cst_48 = arith.constant 2.000000e+00 : f32
    %168 = vector.broadcast %cst_48 : f32 to vector<16x16xf32>
    %169 = arith.subf %168, %167 : vector<16x16xf32>
    %170 = arith.mulf %166, %169 : vector<16x16xf32>
    %cst_49 = arith.constant 1.06140542 : f32
    %171 = vector.broadcast %cst_49 : f32 to vector<16x16xf32>
    %172 = arith.mulf %171, %170 : vector<16x16xf32>
    %cst_50 = arith.constant -1.45315206 : f32
    %173 = vector.broadcast %cst_50 : f32 to vector<16x16xf32>
    %174 = arith.addf %172, %173 : vector<16x16xf32>
    %175 = arith.mulf %174, %170 : vector<16x16xf32>
    %cst_51 = arith.constant 1.42141378 : f32
    %176 = vector.broadcast %cst_51 : f32 to vector<16x16xf32>
    %177 = arith.addf %175, %176 : vector<16x16xf32>
    %178 = arith.mulf %177, %170 : vector<16x16xf32>
    %cst_52 = arith.constant -0.284496725 : f32
    %179 = vector.broadcast %cst_52 : f32 to vector<16x16xf32>
    %180 = arith.addf %178, %179 : vector<16x16xf32>
    %181 = arith.mulf %180, %170 : vector<16x16xf32>
    %cst_53 = arith.constant 0.254829586 : f32
    %182 = vector.broadcast %cst_53 : f32 to vector<16x16xf32>
    %183 = arith.addf %181, %182 : vector<16x16xf32>
    %184 = arith.mulf %183, %170 : vector<16x16xf32>
    %cst_54 = arith.constant 0.000000e+00 : f32
    %185 = vector.broadcast %cst_54 : f32 to vector<16x16xf32>
    %186 = arith.subf %185, %160 : vector<16x16xf32>
    %187 = arith.mulf %186, %160 : vector<16x16xf32>
    %188 = math.exp %187 : vector<16x16xf32>
    %189 = arith.mulf %184, %188 : vector<16x16xf32>
    %cst_55 = arith.constant 1.000000e+00 : f32
    %190 = vector.broadcast %cst_55 : f32 to vector<16x16xf32>
    %191 = arith.subf %190, %189 : vector<16x16xf32>
    %cst_56 = arith.constant 0.000000e+00 : f32
    %192 = vector.broadcast %cst_56 : f32 to vector<16x16xf32>
    %193 = arith.cmpf oge, %160, %192 : vector<16x16xf32>
    %cst_57 = arith.constant 0.000000e+00 : f32
    %194 = vector.broadcast %cst_57 : f32 to vector<16x16xf32>
    %195 = arith.subf %194, %191 : vector<16x16xf32>
    %196 = arith.select %193, %191, %195 : vector<16x16xi1>, vector<16x16xf32>
    %cst_58 = arith.constant 1.000000e+00 : f32
    %197 = vector.broadcast %cst_58 : f32 to vector<16x16xf32>
    %198 = arith.addf %196, %197 : vector<16x16xf32>
    %199 = arith.mulf %158, %198 : vector<16x16xf32>
    %c0_59 = arith.constant 0 : index
    %c2_60 = arith.constant 2 : index
    %c0_61 = arith.constant 0 : index
    %c0_62 = arith.constant 0 : index
    %200 = vector.load %arg4[%c0_59, %c2_60, %c0_61, %c0_62] : memref<1x16x16x16xf32, #tpu.memory_space<vmem>>, vector<1x1x16x16xf32>
    %201 = vector.shape_cast %200 : vector<1x1x16x16xf32> to vector<16x16xf32>
    %202 = vector.shape_cast %199 : vector<16x16xf32> to vector<1x1x16x16xf32>
    tpu.vector_store %arg4[%c0_59, %c2_60, %c0_61, %c0_62], %202 {strides = array<i32>} : memref<1x16x16x16xf32, #tpu.memory_space<vmem>>, vector<1x1x16x16xf32>,
    %c3_63 = arith.constant 3 : index
    %203 = memref.load %arg3[%c3_63] : memref<16xf32, #tpu.memory_space<smem>>
    %c12 = arith.constant 12 : index
    %204 = memref.load %arg2[%c12] : memref<64xf32, #tpu.memory_space<smem>>
    %205 = vector.broadcast %204 : f32 to vector<16x16xf32>
    %206 = arith.mulf %1, %205 : vector<16x16xf32>
    %207 = vector.broadcast %203 : f32 to vector<16x16xf32>
    %208 = arith.addf %207, %206 : vector<16x16xf32>
    %c13 = arith.constant 13 : index
    %209 = memref.load %arg2[%c13] : memref<64xf32, #tpu.memory_space<smem>>
    %210 = vector.broadcast %209 : f32 to vector<16x16xf32>
    %211 = arith.mulf %4, %210 : vector<16x16xf32>
    %212 = arith.addf %208, %211 : vector<16x16xf32>
    %c14 = arith.constant 14 : index
    %213 = memref.load %arg2[%c14] : memref<64xf32, #tpu.memory_space<smem>>
    %214 = vector.broadcast %213 : f32 to vector<16x16xf32>
    %215 = arith.mulf %7, %214 : vector<16x16xf32>
    %216 = arith.addf %212, %215 : vector<16x16xf32>
    %c15 = arith.constant 15 : index
    %217 = memref.load %arg2[%c15] : memref<64xf32, #tpu.memory_space<smem>>
    %218 = vector.broadcast %217 : f32 to vector<16x16xf32>
    %219 = arith.mulf %10, %218 : vector<16x16xf32>
    %220 = arith.addf %216, %219 : vector<16x16xf32>
    %cst_64 = arith.constant 5.000000e-01 : f32
    %221 = vector.broadcast %cst_64 : f32 to vector<16x16xf32>
    %222 = arith.mulf %220, %221 : vector<16x16xf32>
    %cst_65 = arith.constant 0.707106769 : f32
    %223 = vector.broadcast %cst_65 : f32 to vector<16x16xf32>
    %224 = arith.mulf %220, %223 : vector<16x16xf32>
    %225 = math.absf %224 : vector<16x16xf32>
    %cst_66 = arith.constant 0.327591091 : f32
    %226 = vector.broadcast %cst_66 : f32 to vector<16x16xf32>
    %227 = arith.mulf %226, %225 : vector<16x16xf32>
    %cst_67 = arith.constant 1.000000e+00 : f32
    %228 = vector.broadcast %cst_67 : f32 to vector<16x16xf32>
    %229 = arith.addf %228, %227 : vector<16x16xf32>
    %230 = tpu.reciprocal %229 {approx = true} : vector<16x16xf32> -> vector<16x16xf32>
    %231 = arith.mulf %229, %230 : vector<16x16xf32>
    %cst_68 = arith.constant 2.000000e+00 : f32
    %232 = vector.broadcast %cst_68 : f32 to vector<16x16xf32>
    %233 = arith.subf %232, %231 : vector<16x16xf32>
    %234 = arith.mulf %230, %233 : vector<16x16xf32>
    %cst_69 = arith.constant 1.06140542 : f32
    %235 = vector.broadcast %cst_69 : f32 to vector<16x16xf32>
    %236 = arith.mulf %235, %234 : vector<16x16xf32>
    %cst_70 = arith.constant -1.45315206 : f32
    %237 = vector.broadcast %cst_70 : f32 to vector<16x16xf32>
    %238 = arith.addf %236, %237 : vector<16x16xf32>
    %239 = arith.mulf %238, %234 : vector<16x16xf32>
    %cst_71 = arith.constant 1.42141378 : f32
    %240 = vector.broadcast %cst_71 : f32 to vector<16x16xf32>
    %241 = arith.addf %239, %240 : vector<16x16xf32>
    %242 = arith.mulf %241, %234 : vector<16x16xf32>
    %cst_72 = arith.constant -0.284496725 : f32
    %243 = vector.broadcast %cst_72 : f32 to vector<16x16xf32>
    %244 = arith.addf %242, %243 : vector<16x16xf32>
    %245 = arith.mulf %244, %234 : vector<16x16xf32>
    %cst_73 = arith.constant 0.254829586 : f32
    %246 = vector.broadcast %cst_73 : f32 to vector<16x16xf32>
    %247 = arith.addf %245, %246 : vector<16x16xf32>
    %248 = arith.mulf %247, %234 : vector<16x16xf32>
    %cst_74 = arith.constant 0.000000e+00 : f32
    %249 = vector.broadcast %cst_74 : f32 to vector<16x16xf32>
    %250 = arith.subf %249, %224 : vector<16x16xf32>
    %251 = arith.mulf %250, %224 : vector<16x16xf32>
    %252 = math.exp %251 : vector<16x16xf32>
    %253 = arith.mulf %248, %252 : vector<16x16xf32>
    %cst_75 = arith.constant 1.000000e+00 : f32
    %254 = vector.broadcast %cst_75 : f32 to vector<16x16xf32>
    %255 = arith.subf %254, %253 : vector<16x16xf32>
    %cst_76 = arith.constant 0.000000e+00 : f32
    %256 = vector.broadcast %cst_76 : f32 to vector<16x16xf32>
    %257 = arith.cmpf oge, %224, %256 : vector<16x16xf32>
    %cst_77 = arith.constant 0.000000e+00 : f32
    %258 = vector.broadcast %cst_77 : f32 to vector<16x16xf32>
    %259 = arith.subf %258, %255 : vector<16x16xf32>
    %260 = arith.select %257, %255, %259 : vector<16x16xi1>, vector<16x16xf32>
    %cst_78 = arith.constant 1.000000e+00 : f32
    %261 = vector.broadcast %cst_78 : f32 to vector<16x16xf32>
    %262 = arith.addf %260, %261 : vector<16x16xf32>
    %263 = arith.mulf %222, %262 : vector<16x16xf32>
    %c0_79 = arith.constant 0 : index
    %c3_80 = arith.constant 3 : index
    %c0_81 = arith.constant 0 : index
    %c0_82 = arith.constant 0 : index
    %264 = vector.load %arg4[%c0_79, %c3_80, %c0_81, %c0_82] : memref<1x16x16x16xf32, #tpu.memory_space<vmem>>, vector<1x1x16x16xf32>
    %265 = vector.shape_cast %264 : vector<1x1x16x16xf32> to vector<16x16xf32>
    %266 = vector.shape_cast %263 : vector<16x16xf32> to vector<1x1x16x16xf32>
    tpu.vector_store %arg4[%c0_79, %c3_80, %c0_81, %c0_82], %266 {strides = array<i32>} : memref<1x16x16x16xf32, #tpu.memory_space<vmem>>, vector<1x1x16x16xf32>,
    %c0_83 = arith.constant 0 : index
    %c1_84 = arith.constant 1 : index
    %c0_85 = arith.constant 0 : index
    %c0_86 = arith.constant 0 : index
    %267 = vector.load %arg1[%c0_83, %c1_84, %c0_85, %c0_86] : memref<1x4x16x16xf32, #tpu.memory_space<vmem>>, vector<1x1x16x16xf32>
    %268 = vector.shape_cast %267 : vector<1x1x16x16xf32> to vector<16x16xf32>
    %269 = vector.extract_strided_slice %268 {offsets = [0, 1], sizes = [16, 15], strides = [1, 1]} : vector<16x16xf32> to vector<16x15xf32>
    %270 = vector.extract_strided_slice %268 {offsets = [0, 0], sizes = [16, 1], strides = [1, 1]} : vector<16x16xf32> to vector<16x1xf32>
    %271 = tpu.concatenate %269, %270 in 1 : vector<16x15xf32>, vector<16x1xf32> -> vector<16x16xf32>
    %272 = vector.extract_strided_slice %268 {offsets = [1, 0], sizes = [15, 16], strides = [1, 1]} : vector<16x16xf32> to vector<15x16xf32>
    %273 = vector.extract_strided_slice %268 {offsets = [0, 0], sizes = [1, 16], strides = [1, 1]} : vector<16x16xf32> to vector<1x16xf32>
    %274 = tpu.concatenate %272, %273 in 0 : vector<15x16xf32>, vector<1x16xf32> -> vector<16x16xf32>
    %275 = vector.extract_strided_slice %271 {offsets = [1, 0], sizes = [15, 16], strides = [1, 1]} : vector<16x16xf32> to vector<15x16xf32>
    %276 = vector.extract_strided_slice %271 {offsets = [0, 0], sizes = [1, 16], strides = [1, 1]} : vector<16x16xf32> to vector<1x16xf32>
    %277 = tpu.concatenate %275, %276 in 0 : vector<15x16xf32>, vector<1x16xf32> -> vector<16x16xf32>
    %c4_87 = arith.constant 4 : index
    %278 = memref.load %arg3[%c4_87] : memref<16xf32, #tpu.memory_space<smem>>
    %c16 = arith.constant 16 : index
    %279 = memref.load %arg2[%c16] : memref<64xf32, #tpu.memory_space<smem>>
    %280 = vector.broadcast %279 : f32 to vector<16x16xf32>
    %281 = arith.mulf %268, %280 : vector<16x16xf32>
    %282 = vector.broadcast %278 : f32 to vector<16x16xf32>
    %283 = arith.addf %282, %281 : vector<16x16xf32>
    %c17 = arith.constant 17 : index
    %284 = memref.load %arg2[%c17] : memref<64xf32, #tpu.memory_space<smem>>
    %285 = vector.broadcast %284 : f32 to vector<16x16xf32>
    %286 = arith.mulf %271, %285 : vector<16x16xf32>
    %287 = arith.addf %283, %286 : vector<16x16xf32>
    %c18 = arith.constant 18 : index
    %288 = memref.load %arg2[%c18] : memref<64xf32, #tpu.memory_space<smem>>
    %289 = vector.broadcast %288 : f32 to vector<16x16xf32>
    %290 = arith.mulf %274, %289 : vector<16x16xf32>
    %291 = arith.addf %287, %290 : vector<16x16xf32>
    %c19 = arith.constant 19 : index
    %292 = memref.load %arg2[%c19] : memref<64xf32, #tpu.memory_space<smem>>
    %293 = vector.broadcast %292 : f32 to vector<16x16xf32>
    %294 = arith.mulf %277, %293 : vector<16x16xf32>
    %295 = arith.addf %291, %294 : vector<16x16xf32>
    %cst_88 = arith.constant 5.000000e-01 : f32
    %296 = vector.broadcast %cst_88 : f32 to vector<16x16xf32>
    %297 = arith.mulf %295, %296 : vector<16x16xf32>
    %cst_89 = arith.constant 0.707106769 : f32
    %298 = vector.broadcast %cst_89 : f32 to vector<16x16xf32>
    %299 = arith.mulf %295, %298 : vector<16x16xf32>
    %300 = math.absf %299 : vector<16x16xf32>
    %cst_90 = arith.constant 0.327591091 : f32
    %301 = vector.broadcast %cst_90 : f32 to vector<16x16xf32>
    %302 = arith.mulf %301, %300 : vector<16x16xf32>
    %cst_91 = arith.constant 1.000000e+00 : f32
    %303 = vector.broadcast %cst_91 : f32 to vector<16x16xf32>
    %304 = arith.addf %303, %302 : vector<16x16xf32>
    %305 = tpu.reciprocal %304 {approx = true} : vector<16x16xf32> -> vector<16x16xf32>
    %306 = arith.mulf %304, %305 : vector<16x16xf32>
    %cst_92 = arith.constant 2.000000e+00 : f32
    %307 = vector.broadcast %cst_92 : f32 to vector<16x16xf32>
    %308 = arith.subf %307, %306 : vector<16x16xf32>
    %309 = arith.mulf %305, %308 : vector<16x16xf32>
    %cst_93 = arith.constant 1.06140542 : f32
    %310 = vector.broadcast %cst_93 : f32 to vector<16x16xf32>
    %311 = arith.mulf %310, %309 : vector<16x16xf32>
    %cst_94 = arith.constant -1.45315206 : f32
    %312 = vector.broadcast %cst_94 : f32 to vector<16x16xf32>
    %313 = arith.addf %311, %312 : vector<16x16xf32>
    %314 = arith.mulf %313, %309 : vector<16x16xf32>
    %cst_95 = arith.constant 1.42141378 : f32
    %315 = vector.broadcast %cst_95 : f32 to vector<16x16xf32>
    %316 = arith.addf %314, %315 : vector<16x16xf32>
    %317 = arith.mulf %316, %309 : vector<16x16xf32>
    %cst_96 = arith.constant -0.284496725 : f32
    %318 = vector.broadcast %cst_96 : f32 to vector<16x16xf32>
    %319 = arith.addf %317, %318 : vector<16x16xf32>
    %320 = arith.mulf %319, %309 : vector<16x16xf32>
    %cst_97 = arith.constant 0.254829586 : f32
    %321 = vector.broadcast %cst_97 : f32 to vector<16x16xf32>
    %322 = arith.addf %320, %321 : vector<16x16xf32>
    %323 = arith.mulf %322, %309 : vector<16x16xf32>
    %cst_98 = arith.constant 0.000000e+00 : f32
    %324 = vector.broadcast %cst_98 : f32 to vector<16x16xf32>
    %325 = arith.subf %324, %299 : vector<16x16xf32>
    %326 = arith.mulf %325, %299 : vector<16x16xf32>
    %327 = math.exp %326 : vector<16x16xf32>
    %328 = arith.mulf %323, %327 : vector<16x16xf32>
    %cst_99 = arith.constant 1.000000e+00 : f32
    %329 = vector.broadcast %cst_99 : f32 to vector<16x16xf32>
    %330 = arith.subf %329, %328 : vector<16x16xf32>
    %cst_100 = arith.constant 0.000000e+00 : f32
    %331 = vector.broadcast %cst_100 : f32 to vector<16x16xf32>
    %332 = arith.cmpf oge, %299, %331 : vector<16x16xf32>
    %cst_101 = arith.constant 0.000000e+00 : f32
    %333 = vector.broadcast %cst_101 : f32 to vector<16x16xf32>
    %334 = arith.subf %333, %330 : vector<16x16xf32>
    %335 = arith.select %332, %330, %334 : vector<16x16xi1>, vector<16x16xf32>
    %cst_102 = arith.constant 1.000000e+00 : f32
    %336 = vector.broadcast %cst_102 : f32 to vector<16x16xf32>
    %337 = arith.addf %335, %336 : vector<16x16xf32>
    %338 = arith.mulf %297, %337 : vector<16x16xf32>
    %c0_103 = arith.constant 0 : index
    %c4_104 = arith.constant 4 : index
    %c0_105 = arith.constant 0 : index
    %c0_106 = arith.constant 0 : index
    %339 = vector.load %arg4[%c0_103, %c4_104, %c0_105, %c0_106] : memref<1x16x16x16xf32, #tpu.memory_space<vmem>>, vector<1x1x16x16xf32>
    %340 = vector.shape_cast %339 : vector<1x1x16x16xf32> to vector<16x16xf32>
    %341 = vector.shape_cast %338 : vector<16x16xf32> to vector<1x1x16x16xf32>
    tpu.vector_store %arg4[%c0_103, %c4_104, %c0_105, %c0_106], %341 {strides = array<i32>} : memref<1x16x16x16xf32, #tpu.memory_space<vmem>>, vector<1x1x16x16xf32>,
    %c5_107 = arith.constant 5 : index
    %342 = memref.load %arg3[%c5_107] : memref<16xf32, #tpu.memory_space<smem>>
    %c20 = arith.constant 20 : index
    %343 = memref.load %arg2[%c20] : memref<64xf32, #tpu.memory_space<smem>>
    %344 = vector.broadcast %343 : f32 to vector<16x16xf32>
    %345 = arith.mulf %268, %344 : vector<16x16xf32>
    %346 = vector.broadcast %342 : f32 to vector<16x16xf32>
    %347 = arith.addf %346, %345 : vector<16x16xf32>
    %c21 = arith.constant 21 : index
    %348 = memref.load %arg2[%c21] : memref<64xf32, #tpu.memory_space<smem>>
    %349 = vector.broadcast %348 : f32 to vector<16x16xf32>
    %350 = arith.mulf %271, %349 : vector<16x16xf32>
    %351 = arith.addf %347, %350 : vector<16x16xf32>
    %c22 = arith.constant 22 : index
    %352 = memref.load %arg2[%c22] : memref<64xf32, #tpu.memory_space<smem>>
    %353 = vector.broadcast %352 : f32 to vector<16x16xf32>
    %354 = arith.mulf %274, %353 : vector<16x16xf32>
    %355 = arith.addf %351, %354 : vector<16x16xf32>
    %c23 = arith.constant 23 : index
    %356 = memref.load %arg2[%c23] : memref<64xf32, #tpu.memory_space<smem>>
    %357 = vector.broadcast %356 : f32 to vector<16x16xf32>
    %358 = arith.mulf %277, %357 : vector<16x16xf32>
    %359 = arith.addf %355, %358 : vector<16x16xf32>
    %cst_108 = arith.constant 5.000000e-01 : f32
    %360 = vector.broadcast %cst_108 : f32 to vector<16x16xf32>
    %361 = arith.mulf %359, %360 : vector<16x16xf32>
    %cst_109 = arith.constant 0.707106769 : f32
    %362 = vector.broadcast %cst_109 : f32 to vector<16x16xf32>
    %363 = arith.mulf %359, %362 : vector<16x16xf32>
    %364 = math.absf %363 : vector<16x16xf32>
    %cst_110 = arith.constant 0.327591091 : f32
    %365 = vector.broadcast %cst_110 : f32 to vector<16x16xf32>
    %366 = arith.mulf %365, %364 : vector<16x16xf32>
    %cst_111 = arith.constant 1.000000e+00 : f32
    %367 = vector.broadcast %cst_111 : f32 to vector<16x16xf32>
    %368 = arith.addf %367, %366 : vector<16x16xf32>
    %369 = tpu.reciprocal %368 {approx = true} : vector<16x16xf32> -> vector<16x16xf32>
    %370 = arith.mulf %368, %369 : vector<16x16xf32>
    %cst_112 = arith.constant 2.000000e+00 : f32
    %371 = vector.broadcast %cst_112 : f32 to vector<16x16xf32>
    %372 = arith.subf %371, %370 : vector<16x16xf32>
    %373 = arith.mulf %369, %372 : vector<16x16xf32>
    %cst_113 = arith.constant 1.06140542 : f32
    %374 = vector.broadcast %cst_113 : f32 to vector<16x16xf32>
    %375 = arith.mulf %374, %373 : vector<16x16xf32>
    %cst_114 = arith.constant -1.45315206 : f32
    %376 = vector.broadcast %cst_114 : f32 to vector<16x16xf32>
    %377 = arith.addf %375, %376 : vector<16x16xf32>
    %378 = arith.mulf %377, %373 : vector<16x16xf32>
    %cst_115 = arith.constant 1.42141378 : f32
    %379 = vector.broadcast %cst_115 : f32 to vector<16x16xf32>
    %380 = arith.addf %378, %379 : vector<16x16xf32>
    %381 = arith.mulf %380, %373 : vector<16x16xf32>
    %cst_116 = arith.constant -0.284496725 : f32
    %382 = vector.broadcast %cst_116 : f32 to vector<16x16xf32>
    %383 = arith.addf %381, %382 : vector<16x16xf32>
    %384 = arith.mulf %383, %373 : vector<16x16xf32>
    %cst_117 = arith.constant 0.254829586 : f32
    %385 = vector.broadcast %cst_117 : f32 to vector<16x16xf32>
    %386 = arith.addf %384, %385 : vector<16x16xf32>
    %387 = arith.mulf %386, %373 : vector<16x16xf32>
    %cst_118 = arith.constant 0.000000e+00 : f32
    %388 = vector.broadcast %cst_118 : f32 to vector<16x16xf32>
    %389 = arith.subf %388, %363 : vector<16x16xf32>
    %390 = arith.mulf %389, %363 : vector<16x16xf32>
    %391 = math.exp %390 : vector<16x16xf32>
    %392 = arith.mulf %387, %391 : vector<16x16xf32>
    %cst_119 = arith.constant 1.000000e+00 : f32
    %393 = vector.broadcast %cst_119 : f32 to vector<16x16xf32>
    %394 = arith.subf %393, %392 : vector<16x16xf32>
    %cst_120 = arith.constant 0.000000e+00 : f32
    %395 = vector.broadcast %cst_120 : f32 to vector<16x16xf32>
    %396 = arith.cmpf oge, %363, %395 : vector<16x16xf32>
    %cst_121 = arith.constant 0.000000e+00 : f32
    %397 = vector.broadcast %cst_121 : f32 to vector<16x16xf32>
    %398 = arith.subf %397, %394 : vector<16x16xf32>
    %399 = arith.select %396, %394, %398 : vector<16x16xi1>, vector<16x16xf32>
    %cst_122 = arith.constant 1.000000e+00 : f32
    %400 = vector.broadcast %cst_122 : f32 to vector<16x16xf32>
    %401 = arith.addf %399, %400 : vector<16x16xf32>
    %402 = arith.mulf %361, %401 : vector<16x16xf32>
    %c0_123 = arith.constant 0 : index
    %c5_124 = arith.constant 5 : index
    %c0_125 = arith.constant 0 : index
    %c0_126 = arith.constant 0 : index
    %403 = vector.load %arg4[%c0_123, %c5_124, %c0_125, %c0_126] : memref<1x16x16x16xf32, #tpu.memory_space<vmem>>, vector<1x1x16x16xf32>
    %404 = vector.shape_cast %403 : vector<1x1x16x16xf32> to vector<16x16xf32>
    %405 = vector.shape_cast %402 : vector<16x16xf32> to vector<1x1x16x16xf32>
    tpu.vector_store %arg4[%c0_123, %c5_124, %c0_125, %c0_126], %405 {strides = array<i32>} : memref<1x16x16x16xf32, #tpu.memory_space<vmem>>, vector<1x1x16x16xf32>,
    %c6_127 = arith.constant 6 : index
    %406 = memref.load %arg3[%c6_127] : memref<16xf32, #tpu.memory_space<smem>>
    %c24 = arith.constant 24 : index
    %407 = memref.load %arg2[%c24] : memref<64xf32, #tpu.memory_space<smem>>
    %408 = vector.broadcast %407 : f32 to vector<16x16xf32>
    %409 = arith.mulf %268, %408 : vector<16x16xf32>
    %410 = vector.broadcast %406 : f32 to vector<16x16xf32>
    %411 = arith.addf %410, %409 : vector<16x16xf32>
    %c25 = arith.constant 25 : index
    %412 = memref.load %arg2[%c25] : memref<64xf32, #tpu.memory_space<smem>>
    %413 = vector.broadcast %412 : f32 to vector<16x16xf32>
    %414 = arith.mulf %271, %413 : vector<16x16xf32>
    %415 = arith.addf %411, %414 : vector<16x16xf32>
    %c26 = arith.constant 26 : index
    %416 = memref.load %arg2[%c26] : memref<64xf32, #tpu.memory_space<smem>>
    %417 = vector.broadcast %416 : f32 to vector<16x16xf32>
    %418 = arith.mulf %274, %417 : vector<16x16xf32>
    %419 = arith.addf %415, %418 : vector<16x16xf32>
    %c27 = arith.constant 27 : index
    %420 = memref.load %arg2[%c27] : memref<64xf32, #tpu.memory_space<smem>>
    %421 = vector.broadcast %420 : f32 to vector<16x16xf32>
    %422 = arith.mulf %277, %421 : vector<16x16xf32>
    %423 = arith.addf %419, %422 : vector<16x16xf32>
    %cst_128 = arith.constant 5.000000e-01 : f32
    %424 = vector.broadcast %cst_128 : f32 to vector<16x16xf32>
    %425 = arith.mulf %423, %424 : vector<16x16xf32>
    %cst_129 = arith.constant 0.707106769 : f32
    %426 = vector.broadcast %cst_129 : f32 to vector<16x16xf32>
    %427 = arith.mulf %423, %426 : vector<16x16xf32>
    %428 = math.absf %427 : vector<16x16xf32>
    %cst_130 = arith.constant 0.327591091 : f32
    %429 = vector.broadcast %cst_130 : f32 to vector<16x16xf32>
    %430 = arith.mulf %429, %428 : vector<16x16xf32>
    %cst_131 = arith.constant 1.000000e+00 : f32
    %431 = vector.broadcast %cst_131 : f32 to vector<16x16xf32>
    %432 = arith.addf %431, %430 : vector<16x16xf32>
    %433 = tpu.reciprocal %432 {approx = true} : vector<16x16xf32> -> vector<16x16xf32>
    %434 = arith.mulf %432, %433 : vector<16x16xf32>
    %cst_132 = arith.constant 2.000000e+00 : f32
    %435 = vector.broadcast %cst_132 : f32 to vector<16x16xf32>
    %436 = arith.subf %435, %434 : vector<16x16xf32>
    %437 = arith.mulf %433, %436 : vector<16x16xf32>
    %cst_133 = arith.constant 1.06140542 : f32
    %438 = vector.broadcast %cst_133 : f32 to vector<16x16xf32>
    %439 = arith.mulf %438, %437 : vector<16x16xf32>
    %cst_134 = arith.constant -1.45315206 : f32
    %440 = vector.broadcast %cst_134 : f32 to vector<16x16xf32>
    %441 = arith.addf %439, %440 : vector<16x16xf32>
    %442 = arith.mulf %441, %437 : vector<16x16xf32>
    %cst_135 = arith.constant 1.42141378 : f32
    %443 = vector.broadcast %cst_135 : f32 to vector<16x16xf32>
    %444 = arith.addf %442, %443 : vector<16x16xf32>
    %445 = arith.mulf %444, %437 : vector<16x16xf32>
    %cst_136 = arith.constant -0.284496725 : f32
    %446 = vector.broadcast %cst_136 : f32 to vector<16x16xf32>
    %447 = arith.addf %445, %446 : vector<16x16xf32>
    %448 = arith.mulf %447, %437 : vector<16x16xf32>
    %cst_137 = arith.constant 0.254829586 : f32
    %449 = vector.broadcast %cst_137 : f32 to vector<16x16xf32>
    %450 = arith.addf %448, %449 : vector<16x16xf32>
    %451 = arith.mulf %450, %437 : vector<16x16xf32>
    %cst_138 = arith.constant 0.000000e+00 : f32
    %452 = vector.broadcast %cst_138 : f32 to vector<16x16xf32>
    %453 = arith.subf %452, %427 : vector<16x16xf32>
    %454 = arith.mulf %453, %427 : vector<16x16xf32>
    %455 = math.exp %454 : vector<16x16xf32>
    %456 = arith.mulf %451, %455 : vector<16x16xf32>
    %cst_139 = arith.constant 1.000000e+00 : f32
    %457 = vector.broadcast %cst_139 : f32 to vector<16x16xf32>
    %458 = arith.subf %457, %456 : vector<16x16xf32>
    %cst_140 = arith.constant 0.000000e+00 : f32
    %459 = vector.broadcast %cst_140 : f32 to vector<16x16xf32>
    %460 = arith.cmpf oge, %427, %459 : vector<16x16xf32>
    %cst_141 = arith.constant 0.000000e+00 : f32
    %461 = vector.broadcast %cst_141 : f32 to vector<16x16xf32>
    %462 = arith.subf %461, %458 : vector<16x16xf32>
    %463 = arith.select %460, %458, %462 : vector<16x16xi1>, vector<16x16xf32>
    %cst_142 = arith.constant 1.000000e+00 : f32
    %464 = vector.broadcast %cst_142 : f32 to vector<16x16xf32>
    %465 = arith.addf %463, %464 : vector<16x16xf32>
    %466 = arith.mulf %425, %465 : vector<16x16xf32>
    %c0_143 = arith.constant 0 : index
    %c6_144 = arith.constant 6 : index
    %c0_145 = arith.constant 0 : index
    %c0_146 = arith.constant 0 : index
    %467 = vector.load %arg4[%c0_143, %c6_144, %c0_145, %c0_146] : memref<1x16x16x16xf32, #tpu.memory_space<vmem>>, vector<1x1x16x16xf32>
    %468 = vector.shape_cast %467 : vector<1x1x16x16xf32> to vector<16x16xf32>
    %469 = vector.shape_cast %466 : vector<16x16xf32> to vector<1x1x16x16xf32>
    tpu.vector_store %arg4[%c0_143, %c6_144, %c0_145, %c0_146], %469 {strides = array<i32>} : memref<1x16x16x16xf32, #tpu.memory_space<vmem>>, vector<1x1x16x16xf32>,
    %c7_147 = arith.constant 7 : index
    %470 = memref.load %arg3[%c7_147] : memref<16xf32, #tpu.memory_space<smem>>
    %c28 = arith.constant 28 : index
    %471 = memref.load %arg2[%c28] : memref<64xf32, #tpu.memory_space<smem>>
    %472 = vector.broadcast %471 : f32 to vector<16x16xf32>
    %473 = arith.mulf %268, %472 : vector<16x16xf32>
    %474 = vector.broadcast %470 : f32 to vector<16x16xf32>
    %475 = arith.addf %474, %473 : vector<16x16xf32>
    %c29 = arith.constant 29 : index
    %476 = memref.load %arg2[%c29] : memref<64xf32, #tpu.memory_space<smem>>
    %477 = vector.broadcast %476 : f32 to vector<16x16xf32>
    %478 = arith.mulf %271, %477 : vector<16x16xf32>
    %479 = arith.addf %475, %478 : vector<16x16xf32>
    %c30 = arith.constant 30 : index
    %480 = memref.load %arg2[%c30] : memref<64xf32, #tpu.memory_space<smem>>
    %481 = vector.broadcast %480 : f32 to vector<16x16xf32>
    %482 = arith.mulf %274, %481 : vector<16x16xf32>
    %483 = arith.addf %479, %482 : vector<16x16xf32>
    %c31 = arith.constant 31 : index
    %484 = memref.load %arg2[%c31] : memref<64xf32, #tpu.memory_space<smem>>
    %485 = vector.broadcast %484 : f32 to vector<16x16xf32>
    %486 = arith.mulf %277, %485 : vector<16x16xf32>
    %487 = arith.addf %483, %486 : vector<16x16xf32>
    %cst_148 = arith.constant 5.000000e-01 : f32
    %488 = vector.broadcast %cst_148 : f32 to vector<16x16xf32>
    %489 = arith.mulf %487, %488 : vector<16x16xf32>
    %cst_149 = arith.constant 0.707106769 : f32
    %490 = vector.broadcast %cst_149 : f32 to vector<16x16xf32>
    %491 = arith.mulf %487, %490 : vector<16x16xf32>
    %492 = math.absf %491 : vector<16x16xf32>
    %cst_150 = arith.constant 0.327591091 : f32
    %493 = vector.broadcast %cst_150 : f32 to vector<16x16xf32>
    %494 = arith.mulf %493, %492 : vector<16x16xf32>
    %cst_151 = arith.constant 1.000000e+00 : f32
    %495 = vector.broadcast %cst_151 : f32 to vector<16x16xf32>
    %496 = arith.addf %495, %494 : vector<16x16xf32>
    %497 = tpu.reciprocal %496 {approx = true} : vector<16x16xf32> -> vector<16x16xf32>
    %498 = arith.mulf %496, %497 : vector<16x16xf32>
    %cst_152 = arith.constant 2.000000e+00 : f32
    %499 = vector.broadcast %cst_152 : f32 to vector<16x16xf32>
    %500 = arith.subf %499, %498 : vector<16x16xf32>
    %501 = arith.mulf %497, %500 : vector<16x16xf32>
    %cst_153 = arith.constant 1.06140542 : f32
    %502 = vector.broadcast %cst_153 : f32 to vector<16x16xf32>
    %503 = arith.mulf %502, %501 : vector<16x16xf32>
    %cst_154 = arith.constant -1.45315206 : f32
    %504 = vector.broadcast %cst_154 : f32 to vector<16x16xf32>
    %505 = arith.addf %503, %504 : vector<16x16xf32>
    %506 = arith.mulf %505, %501 : vector<16x16xf32>
    %cst_155 = arith.constant 1.42141378 : f32
    %507 = vector.broadcast %cst_155 : f32 to vector<16x16xf32>
    %508 = arith.addf %506, %507 : vector<16x16xf32>
    %509 = arith.mulf %508, %501 : vector<16x16xf32>
    %cst_156 = arith.constant -0.284496725 : f32
    %510 = vector.broadcast %cst_156 : f32 to vector<16x16xf32>
    %511 = arith.addf %509, %510 : vector<16x16xf32>
    %512 = arith.mulf %511, %501 : vector<16x16xf32>
    %cst_157 = arith.constant 0.254829586 : f32
    %513 = vector.broadcast %cst_157 : f32 to vector<16x16xf32>
    %514 = arith.addf %512, %513 : vector<16x16xf32>
    %515 = arith.mulf %514, %501 : vector<16x16xf32>
    %cst_158 = arith.constant 0.000000e+00 : f32
    %516 = vector.broadcast %cst_158 : f32 to vector<16x16xf32>
    %517 = arith.subf %516, %491 : vector<16x16xf32>
    %518 = arith.mulf %517, %491 : vector<16x16xf32>
    %519 = math.exp %518 : vector<16x16xf32>
    %520 = arith.mulf %515, %519 : vector<16x16xf32>
    %cst_159 = arith.constant 1.000000e+00 : f32
    %521 = vector.broadcast %cst_159 : f32 to vector<16x16xf32>
    %522 = arith.subf %521, %520 : vector<16x16xf32>
    %cst_160 = arith.constant 0.000000e+00 : f32
    %523 = vector.broadcast %cst_160 : f32 to vector<16x16xf32>
    %524 = arith.cmpf oge, %491, %523 : vector<16x16xf32>
    %cst_161 = arith.constant 0.000000e+00 : f32
    %525 = vector.broadcast %cst_161 : f32 to vector<16x16xf32>
    %526 = arith.subf %525, %522 : vector<16x16xf32>
    %527 = arith.select %524, %522, %526 : vector<16x16xi1>, vector<16x16xf32>
    %cst_162 = arith.constant 1.000000e+00 : f32
    %528 = vector.broadcast %cst_162 : f32 to vector<16x16xf32>
    %529 = arith.addf %527, %528 : vector<16x16xf32>
    %530 = arith.mulf %489, %529 : vector<16x16xf32>
    %c0_163 = arith.constant 0 : index
    %c7_164 = arith.constant 7 : index
    %c0_165 = arith.constant 0 : index
    %c0_166 = arith.constant 0 : index
    %531 = vector.load %arg4[%c0_163, %c7_164, %c0_165, %c0_166] : memref<1x16x16x16xf32, #tpu.memory_space<vmem>>, vector<1x1x16x16xf32>
    %532 = vector.shape_cast %531 : vector<1x1x16x16xf32> to vector<16x16xf32>
    %533 = vector.shape_cast %530 : vector<16x16xf32> to vector<1x1x16x16xf32>
    tpu.vector_store %arg4[%c0_163, %c7_164, %c0_165, %c0_166], %533 {strides = array<i32>} : memref<1x16x16x16xf32, #tpu.memory_space<vmem>>, vector<1x1x16x16xf32>,
    %c0_167 = arith.constant 0 : index
    %c2_168 = arith.constant 2 : index
    %c0_169 = arith.constant 0 : index
    %c0_170 = arith.constant 0 : index
    %534 = vector.load %arg1[%c0_167, %c2_168, %c0_169, %c0_170] : memref<1x4x16x16xf32, #tpu.memory_space<vmem>>, vector<1x1x16x16xf32>
    %535 = vector.shape_cast %534 : vector<1x1x16x16xf32> to vector<16x16xf32>
    %536 = vector.extract_strided_slice %535 {offsets = [0, 1], sizes = [16, 15], strides = [1, 1]} : vector<16x16xf32> to vector<16x15xf32>
    %537 = vector.extract_strided_slice %535 {offsets = [0, 0], sizes = [16, 1], strides = [1, 1]} : vector<16x16xf32> to vector<16x1xf32>
    %538 = tpu.concatenate %536, %537 in 1 : vector<16x15xf32>, vector<16x1xf32> -> vector<16x16xf32>
    %539 = vector.extract_strided_slice %535 {offsets = [1, 0], sizes = [15, 16], strides = [1, 1]} : vector<16x16xf32> to vector<15x16xf32>
    %540 = vector.extract_strided_slice %535 {offsets = [0, 0], sizes = [1, 16], strides = [1, 1]} : vector<16x16xf32> to vector<1x16xf32>
    %541 = tpu.concatenate %539, %540 in 0 : vector<15x16xf32>, vector<1x16xf32> -> vector<16x16xf32>
    %542 = vector.extract_strided_slice %538 {offsets = [1, 0], sizes = [15, 16], strides = [1, 1]} : vector<16x16xf32> to vector<15x16xf32>
    %543 = vector.extract_strided_slice %538 {offsets = [0, 0], sizes = [1, 16], strides = [1, 1]} : vector<16x16xf32> to vector<1x16xf32>
    %544 = tpu.concatenate %542, %543 in 0 : vector<15x16xf32>, vector<1x16xf32> -> vector<16x16xf32>
    %c8_171 = arith.constant 8 : index
    %545 = memref.load %arg3[%c8_171] : memref<16xf32, #tpu.memory_space<smem>>
    %c32 = arith.constant 32 : index
    %546 = memref.load %arg2[%c32] : memref<64xf32, #tpu.memory_space<smem>>
    %547 = vector.broadcast %546 : f32 to vector<16x16xf32>
    %548 = arith.mulf %535, %547 : vector<16x16xf32>
    %549 = vector.broadcast %545 : f32 to vector<16x16xf32>
    %550 = arith.addf %549, %548 : vector<16x16xf32>
    %c33 = arith.constant 33 : index
    %551 = memref.load %arg2[%c33] : memref<64xf32, #tpu.memory_space<smem>>
    %552 = vector.broadcast %551 : f32 to vector<16x16xf32>
    %553 = arith.mulf %538, %552 : vector<16x16xf32>
    %554 = arith.addf %550, %553 : vector<16x16xf32>
    %c34 = arith.constant 34 : index
    %555 = memref.load %arg2[%c34] : memref<64xf32, #tpu.memory_space<smem>>
    %556 = vector.broadcast %555 : f32 to vector<16x16xf32>
    %557 = arith.mulf %541, %556 : vector<16x16xf32>
    %558 = arith.addf %554, %557 : vector<16x16xf32>
    %c35 = arith.constant 35 : index
    %559 = memref.load %arg2[%c35] : memref<64xf32, #tpu.memory_space<smem>>
    %560 = vector.broadcast %559 : f32 to vector<16x16xf32>
    %561 = arith.mulf %544, %560 : vector<16x16xf32>
    %562 = arith.addf %558, %561 : vector<16x16xf32>
    %cst_172 = arith.constant 5.000000e-01 : f32
    %563 = vector.broadcast %cst_172 : f32 to vector<16x16xf32>
    %564 = arith.mulf %562, %563 : vector<16x16xf32>
    %cst_173 = arith.constant 0.707106769 : f32
    %565 = vector.broadcast %cst_173 : f32 to vector<16x16xf32>
    %566 = arith.mulf %562, %565 : vector<16x16xf32>
    %567 = math.absf %566 : vector<16x16xf32>
    %cst_174 = arith.constant 0.327591091 : f32
    %568 = vector.broadcast %cst_174 : f32 to vector<16x16xf32>
    %569 = arith.mulf %568, %567 : vector<16x16xf32>
    %cst_175 = arith.constant 1.000000e+00 : f32
    %570 = vector.broadcast %cst_175 : f32 to vector<16x16xf32>
    %571 = arith.addf %570, %569 : vector<16x16xf32>
    %572 = tpu.reciprocal %571 {approx = true} : vector<16x16xf32> -> vector<16x16xf32>
    %573 = arith.mulf %571, %572 : vector<16x16xf32>
    %cst_176 = arith.constant 2.000000e+00 : f32
    %574 = vector.broadcast %cst_176 : f32 to vector<16x16xf32>
    %575 = arith.subf %574, %573 : vector<16x16xf32>
    %576 = arith.mulf %572, %575 : vector<16x16xf32>
    %cst_177 = arith.constant 1.06140542 : f32
    %577 = vector.broadcast %cst_177 : f32 to vector<16x16xf32>
    %578 = arith.mulf %577, %576 : vector<16x16xf32>
    %cst_178 = arith.constant -1.45315206 : f32
    %579 = vector.broadcast %cst_178 : f32 to vector<16x16xf32>
    %580 = arith.addf %578, %579 : vector<16x16xf32>
    %581 = arith.mulf %580, %576 : vector<16x16xf32>
    %cst_179 = arith.constant 1.42141378 : f32
    %582 = vector.broadcast %cst_179 : f32 to vector<16x16xf32>
    %583 = arith.addf %581, %582 : vector<16x16xf32>
    %584 = arith.mulf %583, %576 : vector<16x16xf32>
    %cst_180 = arith.constant -0.284496725 : f32
    %585 = vector.broadcast %cst_180 : f32 to vector<16x16xf32>
    %586 = arith.addf %584, %585 : vector<16x16xf32>
    %587 = arith.mulf %586, %576 : vector<16x16xf32>
    %cst_181 = arith.constant 0.254829586 : f32
    %588 = vector.broadcast %cst_181 : f32 to vector<16x16xf32>
    %589 = arith.addf %587, %588 : vector<16x16xf32>
    %590 = arith.mulf %589, %576 : vector<16x16xf32>
    %cst_182 = arith.constant 0.000000e+00 : f32
    %591 = vector.broadcast %cst_182 : f32 to vector<16x16xf32>
    %592 = arith.subf %591, %566 : vector<16x16xf32>
    %593 = arith.mulf %592, %566 : vector<16x16xf32>
    %594 = math.exp %593 : vector<16x16xf32>
    %595 = arith.mulf %590, %594 : vector<16x16xf32>
    %cst_183 = arith.constant 1.000000e+00 : f32
    %596 = vector.broadcast %cst_183 : f32 to vector<16x16xf32>
    %597 = arith.subf %596, %595 : vector<16x16xf32>
    %cst_184 = arith.constant 0.000000e+00 : f32
    %598 = vector.broadcast %cst_184 : f32 to vector<16x16xf32>
    %599 = arith.cmpf oge, %566, %598 : vector<16x16xf32>
    %cst_185 = arith.constant 0.000000e+00 : f32
    %600 = vector.broadcast %cst_185 : f32 to vector<16x16xf32>
    %601 = arith.subf %600, %597 : vector<16x16xf32>
    %602 = arith.select %599, %597, %601 : vector<16x16xi1>, vector<16x16xf32>
    %cst_186 = arith.constant 1.000000e+00 : f32
    %603 = vector.broadcast %cst_186 : f32 to vector<16x16xf32>
    %604 = arith.addf %602, %603 : vector<16x16xf32>
    %605 = arith.mulf %564, %604 : vector<16x16xf32>
    %c0_187 = arith.constant 0 : index
    %c8_188 = arith.constant 8 : index
    %c0_189 = arith.constant 0 : index
    %c0_190 = arith.constant 0 : index
    %606 = vector.load %arg4[%c0_187, %c8_188, %c0_189, %c0_190] : memref<1x16x16x16xf32, #tpu.memory_space<vmem>>, vector<1x1x16x16xf32>
    %607 = vector.shape_cast %606 : vector<1x1x16x16xf32> to vector<16x16xf32>
    %608 = vector.shape_cast %605 : vector<16x16xf32> to vector<1x1x16x16xf32>
    tpu.vector_store %arg4[%c0_187, %c8_188, %c0_189, %c0_190], %608 {strides = array<i32>} : memref<1x16x16x16xf32, #tpu.memory_space<vmem>>, vector<1x1x16x16xf32>,
    %c9_191 = arith.constant 9 : index
    %609 = memref.load %arg3[%c9_191] : memref<16xf32, #tpu.memory_space<smem>>
    %c36 = arith.constant 36 : index
    %610 = memref.load %arg2[%c36] : memref<64xf32, #tpu.memory_space<smem>>
    %611 = vector.broadcast %610 : f32 to vector<16x16xf32>
    %612 = arith.mulf %535, %611 : vector<16x16xf32>
    %613 = vector.broadcast %609 : f32 to vector<16x16xf32>
    %614 = arith.addf %613, %612 : vector<16x16xf32>
    %c37 = arith.constant 37 : index
    %615 = memref.load %arg2[%c37] : memref<64xf32, #tpu.memory_space<smem>>
    %616 = vector.broadcast %615 : f32 to vector<16x16xf32>
    %617 = arith.mulf %538, %616 : vector<16x16xf32>
    %618 = arith.addf %614, %617 : vector<16x16xf32>
    %c38 = arith.constant 38 : index
    %619 = memref.load %arg2[%c38] : memref<64xf32, #tpu.memory_space<smem>>
    %620 = vector.broadcast %619 : f32 to vector<16x16xf32>
    %621 = arith.mulf %541, %620 : vector<16x16xf32>
    %622 = arith.addf %618, %621 : vector<16x16xf32>
    %c39 = arith.constant 39 : index
    %623 = memref.load %arg2[%c39] : memref<64xf32, #tpu.memory_space<smem>>
    %624 = vector.broadcast %623 : f32 to vector<16x16xf32>
    %625 = arith.mulf %544, %624 : vector<16x16xf32>
    %626 = arith.addf %622, %625 : vector<16x16xf32>
    %cst_192 = arith.constant 5.000000e-01 : f32
    %627 = vector.broadcast %cst_192 : f32 to vector<16x16xf32>
    %628 = arith.mulf %626, %627 : vector<16x16xf32>
    %cst_193 = arith.constant 0.707106769 : f32
    %629 = vector.broadcast %cst_193 : f32 to vector<16x16xf32>
    %630 = arith.mulf %626, %629 : vector<16x16xf32>
    %631 = math.absf %630 : vector<16x16xf32>
    %cst_194 = arith.constant 0.327591091 : f32
    %632 = vector.broadcast %cst_194 : f32 to vector<16x16xf32>
    %633 = arith.mulf %632, %631 : vector<16x16xf32>
    %cst_195 = arith.constant 1.000000e+00 : f32
    %634 = vector.broadcast %cst_195 : f32 to vector<16x16xf32>
    %635 = arith.addf %634, %633 : vector<16x16xf32>
    %636 = tpu.reciprocal %635 {approx = true} : vector<16x16xf32> -> vector<16x16xf32>
    %637 = arith.mulf %635, %636 : vector<16x16xf32>
    %cst_196 = arith.constant 2.000000e+00 : f32
    %638 = vector.broadcast %cst_196 : f32 to vector<16x16xf32>
    %639 = arith.subf %638, %637 : vector<16x16xf32>
    %640 = arith.mulf %636, %639 : vector<16x16xf32>
    %cst_197 = arith.constant 1.06140542 : f32
    %641 = vector.broadcast %cst_197 : f32 to vector<16x16xf32>
    %642 = arith.mulf %641, %640 : vector<16x16xf32>
    %cst_198 = arith.constant -1.45315206 : f32
    %643 = vector.broadcast %cst_198 : f32 to vector<16x16xf32>
    %644 = arith.addf %642, %643 : vector<16x16xf32>
    %645 = arith.mulf %644, %640 : vector<16x16xf32>
    %cst_199 = arith.constant 1.42141378 : f32
    %646 = vector.broadcast %cst_199 : f32 to vector<16x16xf32>
    %647 = arith.addf %645, %646 : vector<16x16xf32>
    %648 = arith.mulf %647, %640 : vector<16x16xf32>
    %cst_200 = arith.constant -0.284496725 : f32
    %649 = vector.broadcast %cst_200 : f32 to vector<16x16xf32>
    %650 = arith.addf %648, %649 : vector<16x16xf32>
    %651 = arith.mulf %650, %640 : vector<16x16xf32>
    %cst_201 = arith.constant 0.254829586 : f32
    %652 = vector.broadcast %cst_201 : f32 to vector<16x16xf32>
    %653 = arith.addf %651, %652 : vector<16x16xf32>
    %654 = arith.mulf %653, %640 : vector<16x16xf32>
    %cst_202 = arith.constant 0.000000e+00 : f32
    %655 = vector.broadcast %cst_202 : f32 to vector<16x16xf32>
    %656 = arith.subf %655, %630 : vector<16x16xf32>
    %657 = arith.mulf %656, %630 : vector<16x16xf32>
    %658 = math.exp %657 : vector<16x16xf32>
    %659 = arith.mulf %654, %658 : vector<16x16xf32>
    %cst_203 = arith.constant 1.000000e+00 : f32
    %660 = vector.broadcast %cst_203 : f32 to vector<16x16xf32>
    %661 = arith.subf %660, %659 : vector<16x16xf32>
    %cst_204 = arith.constant 0.000000e+00 : f32
    %662 = vector.broadcast %cst_204 : f32 to vector<16x16xf32>
    %663 = arith.cmpf oge, %630, %662 : vector<16x16xf32>
    %cst_205 = arith.constant 0.000000e+00 : f32
    %664 = vector.broadcast %cst_205 : f32 to vector<16x16xf32>
    %665 = arith.subf %664, %661 : vector<16x16xf32>
    %666 = arith.select %663, %661, %665 : vector<16x16xi1>, vector<16x16xf32>
    %cst_206 = arith.constant 1.000000e+00 : f32
    %667 = vector.broadcast %cst_206 : f32 to vector<16x16xf32>
    %668 = arith.addf %666, %667 : vector<16x16xf32>
    %669 = arith.mulf %628, %668 : vector<16x16xf32>
    %c0_207 = arith.constant 0 : index
    %c9_208 = arith.constant 9 : index
    %c0_209 = arith.constant 0 : index
    %c0_210 = arith.constant 0 : index
    %670 = vector.load %arg4[%c0_207, %c9_208, %c0_209, %c0_210] : memref<1x16x16x16xf32, #tpu.memory_space<vmem>>, vector<1x1x16x16xf32>
    %671 = vector.shape_cast %670 : vector<1x1x16x16xf32> to vector<16x16xf32>
    %672 = vector.shape_cast %669 : vector<16x16xf32> to vector<1x1x16x16xf32>
    tpu.vector_store %arg4[%c0_207, %c9_208, %c0_209, %c0_210], %672 {strides = array<i32>} : memref<1x16x16x16xf32, #tpu.memory_space<vmem>>, vector<1x1x16x16xf32>,
    %c10_211 = arith.constant 10 : index
    %673 = memref.load %arg3[%c10_211] : memref<16xf32, #tpu.memory_space<smem>>
    %c40 = arith.constant 40 : index
    %674 = memref.load %arg2[%c40] : memref<64xf32, #tpu.memory_space<smem>>
    %675 = vector.broadcast %674 : f32 to vector<16x16xf32>
    %676 = arith.mulf %535, %675 : vector<16x16xf32>
    %677 = vector.broadcast %673 : f32 to vector<16x16xf32>
    %678 = arith.addf %677, %676 : vector<16x16xf32>
    %c41 = arith.constant 41 : index
    %679 = memref.load %arg2[%c41] : memref<64xf32, #tpu.memory_space<smem>>
    %680 = vector.broadcast %679 : f32 to vector<16x16xf32>
    %681 = arith.mulf %538, %680 : vector<16x16xf32>
    %682 = arith.addf %678, %681 : vector<16x16xf32>
    %c42 = arith.constant 42 : index
    %683 = memref.load %arg2[%c42] : memref<64xf32, #tpu.memory_space<smem>>
    %684 = vector.broadcast %683 : f32 to vector<16x16xf32>
    %685 = arith.mulf %541, %684 : vector<16x16xf32>
    %686 = arith.addf %682, %685 : vector<16x16xf32>
    %c43 = arith.constant 43 : index
    %687 = memref.load %arg2[%c43] : memref<64xf32, #tpu.memory_space<smem>>
    %688 = vector.broadcast %687 : f32 to vector<16x16xf32>
    %689 = arith.mulf %544, %688 : vector<16x16xf32>
    %690 = arith.addf %686, %689 : vector<16x16xf32>
    %cst_212 = arith.constant 5.000000e-01 : f32
    %691 = vector.broadcast %cst_212 : f32 to vector<16x16xf32>
    %692 = arith.mulf %690, %691 : vector<16x16xf32>
    %cst_213 = arith.constant 0.707106769 : f32
    %693 = vector.broadcast %cst_213 : f32 to vector<16x16xf32>
    %694 = arith.mulf %690, %693 : vector<16x16xf32>
    %695 = math.absf %694 : vector<16x16xf32>
    %cst_214 = arith.constant 0.327591091 : f32
    %696 = vector.broadcast %cst_214 : f32 to vector<16x16xf32>
    %697 = arith.mulf %696, %695 : vector<16x16xf32>
    %cst_215 = arith.constant 1.000000e+00 : f32
    %698 = vector.broadcast %cst_215 : f32 to vector<16x16xf32>
    %699 = arith.addf %698, %697 : vector<16x16xf32>
    %700 = tpu.reciprocal %699 {approx = true} : vector<16x16xf32> -> vector<16x16xf32>
    %701 = arith.mulf %699, %700 : vector<16x16xf32>
    %cst_216 = arith.constant 2.000000e+00 : f32
    %702 = vector.broadcast %cst_216 : f32 to vector<16x16xf32>
    %703 = arith.subf %702, %701 : vector<16x16xf32>
    %704 = arith.mulf %700, %703 : vector<16x16xf32>
    %cst_217 = arith.constant 1.06140542 : f32
    %705 = vector.broadcast %cst_217 : f32 to vector<16x16xf32>
    %706 = arith.mulf %705, %704 : vector<16x16xf32>
    %cst_218 = arith.constant -1.45315206 : f32
    %707 = vector.broadcast %cst_218 : f32 to vector<16x16xf32>
    %708 = arith.addf %706, %707 : vector<16x16xf32>
    %709 = arith.mulf %708, %704 : vector<16x16xf32>
    %cst_219 = arith.constant 1.42141378 : f32
    %710 = vector.broadcast %cst_219 : f32 to vector<16x16xf32>
    %711 = arith.addf %709, %710 : vector<16x16xf32>
    %712 = arith.mulf %711, %704 : vector<16x16xf32>
    %cst_220 = arith.constant -0.284496725 : f32
    %713 = vector.broadcast %cst_220 : f32 to vector<16x16xf32>
    %714 = arith.addf %712, %713 : vector<16x16xf32>
    %715 = arith.mulf %714, %704 : vector<16x16xf32>
    %cst_221 = arith.constant 0.254829586 : f32
    %716 = vector.broadcast %cst_221 : f32 to vector<16x16xf32>
    %717 = arith.addf %715, %716 : vector<16x16xf32>
    %718 = arith.mulf %717, %704 : vector<16x16xf32>
    %cst_222 = arith.constant 0.000000e+00 : f32
    %719 = vector.broadcast %cst_222 : f32 to vector<16x16xf32>
    %720 = arith.subf %719, %694 : vector<16x16xf32>
    %721 = arith.mulf %720, %694 : vector<16x16xf32>
    %722 = math.exp %721 : vector<16x16xf32>
    %723 = arith.mulf %718, %722 : vector<16x16xf32>
    %cst_223 = arith.constant 1.000000e+00 : f32
    %724 = vector.broadcast %cst_223 : f32 to vector<16x16xf32>
    %725 = arith.subf %724, %723 : vector<16x16xf32>
    %cst_224 = arith.constant 0.000000e+00 : f32
    %726 = vector.broadcast %cst_224 : f32 to vector<16x16xf32>
    %727 = arith.cmpf oge, %694, %726 : vector<16x16xf32>
    %cst_225 = arith.constant 0.000000e+00 : f32
    %728 = vector.broadcast %cst_225 : f32 to vector<16x16xf32>
    %729 = arith.subf %728, %725 : vector<16x16xf32>
    %730 = arith.select %727, %725, %729 : vector<16x16xi1>, vector<16x16xf32>
    %cst_226 = arith.constant 1.000000e+00 : f32
    %731 = vector.broadcast %cst_226 : f32 to vector<16x16xf32>
    %732 = arith.addf %730, %731 : vector<16x16xf32>
    %733 = arith.mulf %692, %732 : vector<16x16xf32>
    %c0_227 = arith.constant 0 : index
    %c10_228 = arith.constant 10 : index
    %c0_229 = arith.constant 0 : index
    %c0_230 = arith.constant 0 : index
    %734 = vector.load %arg4[%c0_227, %c10_228, %c0_229, %c0_230] : memref<1x16x16x16xf32, #tpu.memory_space<vmem>>, vector<1x1x16x16xf32>
    %735 = vector.shape_cast %734 : vector<1x1x16x16xf32> to vector<16x16xf32>
    %736 = vector.shape_cast %733 : vector<16x16xf32> to vector<1x1x16x16xf32>
    tpu.vector_store %arg4[%c0_227, %c10_228, %c0_229, %c0_230], %736 {strides = array<i32>} : memref<1x16x16x16xf32, #tpu.memory_space<vmem>>, vector<1x1x16x16xf32>,
    %c11_231 = arith.constant 11 : index
    %737 = memref.load %arg3[%c11_231] : memref<16xf32, #tpu.memory_space<smem>>
    %c44 = arith.constant 44 : index
    %738 = memref.load %arg2[%c44] : memref<64xf32, #tpu.memory_space<smem>>
    %739 = vector.broadcast %738 : f32 to vector<16x16xf32>
    %740 = arith.mulf %535, %739 : vector<16x16xf32>
    %741 = vector.broadcast %737 : f32 to vector<16x16xf32>
    %742 = arith.addf %741, %740 : vector<16x16xf32>
    %c45 = arith.constant 45 : index
    %743 = memref.load %arg2[%c45] : memref<64xf32, #tpu.memory_space<smem>>
    %744 = vector.broadcast %743 : f32 to vector<16x16xf32>
    %745 = arith.mulf %538, %744 : vector<16x16xf32>
    %746 = arith.addf %742, %745 : vector<16x16xf32>
    %c46 = arith.constant 46 : index
    %747 = memref.load %arg2[%c46] : memref<64xf32, #tpu.memory_space<smem>>
    %748 = vector.broadcast %747 : f32 to vector<16x16xf32>
    %749 = arith.mulf %541, %748 : vector<16x16xf32>
    %750 = arith.addf %746, %749 : vector<16x16xf32>
    %c47 = arith.constant 47 : index
    %751 = memref.load %arg2[%c47] : memref<64xf32, #tpu.memory_space<smem>>
    %752 = vector.broadcast %751 : f32 to vector<16x16xf32>
    %753 = arith.mulf %544, %752 : vector<16x16xf32>
    %754 = arith.addf %750, %753 : vector<16x16xf32>
    %cst_232 = arith.constant 5.000000e-01 : f32
    %755 = vector.broadcast %cst_232 : f32 to vector<16x16xf32>
    %756 = arith.mulf %754, %755 : vector<16x16xf32>
    %cst_233 = arith.constant 0.707106769 : f32
    %757 = vector.broadcast %cst_233 : f32 to vector<16x16xf32>
    %758 = arith.mulf %754, %757 : vector<16x16xf32>
    %759 = math.absf %758 : vector<16x16xf32>
    %cst_234 = arith.constant 0.327591091 : f32
    %760 = vector.broadcast %cst_234 : f32 to vector<16x16xf32>
    %761 = arith.mulf %760, %759 : vector<16x16xf32>
    %cst_235 = arith.constant 1.000000e+00 : f32
    %762 = vector.broadcast %cst_235 : f32 to vector<16x16xf32>
    %763 = arith.addf %762, %761 : vector<16x16xf32>
    %764 = tpu.reciprocal %763 {approx = true} : vector<16x16xf32> -> vector<16x16xf32>
    %765 = arith.mulf %763, %764 : vector<16x16xf32>
    %cst_236 = arith.constant 2.000000e+00 : f32
    %766 = vector.broadcast %cst_236 : f32 to vector<16x16xf32>
    %767 = arith.subf %766, %765 : vector<16x16xf32>
    %768 = arith.mulf %764, %767 : vector<16x16xf32>
    %cst_237 = arith.constant 1.06140542 : f32
    %769 = vector.broadcast %cst_237 : f32 to vector<16x16xf32>
    %770 = arith.mulf %769, %768 : vector<16x16xf32>
    %cst_238 = arith.constant -1.45315206 : f32
    %771 = vector.broadcast %cst_238 : f32 to vector<16x16xf32>
    %772 = arith.addf %770, %771 : vector<16x16xf32>
    %773 = arith.mulf %772, %768 : vector<16x16xf32>
    %cst_239 = arith.constant 1.42141378 : f32
    %774 = vector.broadcast %cst_239 : f32 to vector<16x16xf32>
    %775 = arith.addf %773, %774 : vector<16x16xf32>
    %776 = arith.mulf %775, %768 : vector<16x16xf32>
    %cst_240 = arith.constant -0.284496725 : f32
    %777 = vector.broadcast %cst_240 : f32 to vector<16x16xf32>
    %778 = arith.addf %776, %777 : vector<16x16xf32>
    %779 = arith.mulf %778, %768 : vector<16x16xf32>
    %cst_241 = arith.constant 0.254829586 : f32
    %780 = vector.broadcast %cst_241 : f32 to vector<16x16xf32>
    %781 = arith.addf %779, %780 : vector<16x16xf32>
    %782 = arith.mulf %781, %768 : vector<16x16xf32>
    %cst_242 = arith.constant 0.000000e+00 : f32
    %783 = vector.broadcast %cst_242 : f32 to vector<16x16xf32>
    %784 = arith.subf %783, %758 : vector<16x16xf32>
    %785 = arith.mulf %784, %758 : vector<16x16xf32>
    %786 = math.exp %785 : vector<16x16xf32>
    %787 = arith.mulf %782, %786 : vector<16x16xf32>
    %cst_243 = arith.constant 1.000000e+00 : f32
    %788 = vector.broadcast %cst_243 : f32 to vector<16x16xf32>
    %789 = arith.subf %788, %787 : vector<16x16xf32>
    %cst_244 = arith.constant 0.000000e+00 : f32
    %790 = vector.broadcast %cst_244 : f32 to vector<16x16xf32>
    %791 = arith.cmpf oge, %758, %790 : vector<16x16xf32>
    %cst_245 = arith.constant 0.000000e+00 : f32
    %792 = vector.broadcast %cst_245 : f32 to vector<16x16xf32>
    %793 = arith.subf %792, %789 : vector<16x16xf32>
    %794 = arith.select %791, %789, %793 : vector<16x16xi1>, vector<16x16xf32>
    %cst_246 = arith.constant 1.000000e+00 : f32
    %795 = vector.broadcast %cst_246 : f32 to vector<16x16xf32>
    %796 = arith.addf %794, %795 : vector<16x16xf32>
    %797 = arith.mulf %756, %796 : vector<16x16xf32>
    %c0_247 = arith.constant 0 : index
    %c11_248 = arith.constant 11 : index
    %c0_249 = arith.constant 0 : index
    %c0_250 = arith.constant 0 : index
    %798 = vector.load %arg4[%c0_247, %c11_248, %c0_249, %c0_250] : memref<1x16x16x16xf32, #tpu.memory_space<vmem>>, vector<1x1x16x16xf32>
    %799 = vector.shape_cast %798 : vector<1x1x16x16xf32> to vector<16x16xf32>
    %800 = vector.shape_cast %797 : vector<16x16xf32> to vector<1x1x16x16xf32>
    tpu.vector_store %arg4[%c0_247, %c11_248, %c0_249, %c0_250], %800 {strides = array<i32>} : memref<1x16x16x16xf32, #tpu.memory_space<vmem>>, vector<1x1x16x16xf32>,
    %c0_251 = arith.constant 0 : index
    %c3_252 = arith.constant 3 : index
    %c0_253 = arith.constant 0 : index
    %c0_254 = arith.constant 0 : index
    %801 = vector.load %arg1[%c0_251, %c3_252, %c0_253, %c0_254] : memref<1x4x16x16xf32, #tpu.memory_space<vmem>>, vector<1x1x16x16xf32>
    %802 = vector.shape_cast %801 : vector<1x1x16x16xf32> to vector<16x16xf32>
    %803 = vector.extract_strided_slice %802 {offsets = [0, 1], sizes = [16, 15], strides = [1, 1]} : vector<16x16xf32> to vector<16x15xf32>
    %804 = vector.extract_strided_slice %802 {offsets = [0, 0], sizes = [16, 1], strides = [1, 1]} : vector<16x16xf32> to vector<16x1xf32>
    %805 = tpu.concatenate %803, %804 in 1 : vector<16x15xf32>, vector<16x1xf32> -> vector<16x16xf32>
    %806 = vector.extract_strided_slice %802 {offsets = [1, 0], sizes = [15, 16], strides = [1, 1]} : vector<16x16xf32> to vector<15x16xf32>
    %807 = vector.extract_strided_slice %802 {offsets = [0, 0], sizes = [1, 16], strides = [1, 1]} : vector<16x16xf32> to vector<1x16xf32>
    %808 = tpu.concatenate %806, %807 in 0 : vector<15x16xf32>, vector<1x16xf32> -> vector<16x16xf32>
    %809 = vector.extract_strided_slice %805 {offsets = [1, 0], sizes = [15, 16], strides = [1, 1]} : vector<16x16xf32> to vector<15x16xf32>
    %810 = vector.extract_strided_slice %805 {offsets = [0, 0], sizes = [1, 16], strides = [1, 1]} : vector<16x16xf32> to vector<1x16xf32>
    %811 = tpu.concatenate %809, %810 in 0 : vector<15x16xf32>, vector<1x16xf32> -> vector<16x16xf32>
    %c12_255 = arith.constant 12 : index
    %812 = memref.load %arg3[%c12_255] : memref<16xf32, #tpu.memory_space<smem>>
    %c48 = arith.constant 48 : index
    %813 = memref.load %arg2[%c48] : memref<64xf32, #tpu.memory_space<smem>>
    %814 = vector.broadcast %813 : f32 to vector<16x16xf32>
    %815 = arith.mulf %802, %814 : vector<16x16xf32>
    %816 = vector.broadcast %812 : f32 to vector<16x16xf32>
    %817 = arith.addf %816, %815 : vector<16x16xf32>
    %c49 = arith.constant 49 : index
    %818 = memref.load %arg2[%c49] : memref<64xf32, #tpu.memory_space<smem>>
    %819 = vector.broadcast %818 : f32 to vector<16x16xf32>
    %820 = arith.mulf %805, %819 : vector<16x16xf32>
    %821 = arith.addf %817, %820 : vector<16x16xf32>
    %c50 = arith.constant 50 : index
    %822 = memref.load %arg2[%c50] : memref<64xf32, #tpu.memory_space<smem>>
    %823 = vector.broadcast %822 : f32 to vector<16x16xf32>
    %824 = arith.mulf %808, %823 : vector<16x16xf32>
    %825 = arith.addf %821, %824 : vector<16x16xf32>
    %c51 = arith.constant 51 : index
    %826 = memref.load %arg2[%c51] : memref<64xf32, #tpu.memory_space<smem>>
    %827 = vector.broadcast %826 : f32 to vector<16x16xf32>
    %828 = arith.mulf %811, %827 : vector<16x16xf32>
    %829 = arith.addf %825, %828 : vector<16x16xf32>
    %cst_256 = arith.constant 5.000000e-01 : f32
    %830 = vector.broadcast %cst_256 : f32 to vector<16x16xf32>
    %831 = arith.mulf %829, %830 : vector<16x16xf32>
    %cst_257 = arith.constant 0.707106769 : f32
    %832 = vector.broadcast %cst_257 : f32 to vector<16x16xf32>
    %833 = arith.mulf %829, %832 : vector<16x16xf32>
    %834 = math.absf %833 : vector<16x16xf32>
    %cst_258 = arith.constant 0.327591091 : f32
    %835 = vector.broadcast %cst_258 : f32 to vector<16x16xf32>
    %836 = arith.mulf %835, %834 : vector<16x16xf32>
    %cst_259 = arith.constant 1.000000e+00 : f32
    %837 = vector.broadcast %cst_259 : f32 to vector<16x16xf32>
    %838 = arith.addf %837, %836 : vector<16x16xf32>
    %839 = tpu.reciprocal %838 {approx = true} : vector<16x16xf32> -> vector<16x16xf32>
    %840 = arith.mulf %838, %839 : vector<16x16xf32>
    %cst_260 = arith.constant 2.000000e+00 : f32
    %841 = vector.broadcast %cst_260 : f32 to vector<16x16xf32>
    %842 = arith.subf %841, %840 : vector<16x16xf32>
    %843 = arith.mulf %839, %842 : vector<16x16xf32>
    %cst_261 = arith.constant 1.06140542 : f32
    %844 = vector.broadcast %cst_261 : f32 to vector<16x16xf32>
    %845 = arith.mulf %844, %843 : vector<16x16xf32>
    %cst_262 = arith.constant -1.45315206 : f32
    %846 = vector.broadcast %cst_262 : f32 to vector<16x16xf32>
    %847 = arith.addf %845, %846 : vector<16x16xf32>
    %848 = arith.mulf %847, %843 : vector<16x16xf32>
    %cst_263 = arith.constant 1.42141378 : f32
    %849 = vector.broadcast %cst_263 : f32 to vector<16x16xf32>
    %850 = arith.addf %848, %849 : vector<16x16xf32>
    %851 = arith.mulf %850, %843 : vector<16x16xf32>
    %cst_264 = arith.constant -0.284496725 : f32
    %852 = vector.broadcast %cst_264 : f32 to vector<16x16xf32>
    %853 = arith.addf %851, %852 : vector<16x16xf32>
    %854 = arith.mulf %853, %843 : vector<16x16xf32>
    %cst_265 = arith.constant 0.254829586 : f32
    %855 = vector.broadcast %cst_265 : f32 to vector<16x16xf32>
    %856 = arith.addf %854, %855 : vector<16x16xf32>
    %857 = arith.mulf %856, %843 : vector<16x16xf32>
    %cst_266 = arith.constant 0.000000e+00 : f32
    %858 = vector.broadcast %cst_266 : f32 to vector<16x16xf32>
    %859 = arith.subf %858, %833 : vector<16x16xf32>
    %860 = arith.mulf %859, %833 : vector<16x16xf32>
    %861 = math.exp %860 : vector<16x16xf32>
    %862 = arith.mulf %857, %861 : vector<16x16xf32>
    %cst_267 = arith.constant 1.000000e+00 : f32
    %863 = vector.broadcast %cst_267 : f32 to vector<16x16xf32>
    %864 = arith.subf %863, %862 : vector<16x16xf32>
    %cst_268 = arith.constant 0.000000e+00 : f32
    %865 = vector.broadcast %cst_268 : f32 to vector<16x16xf32>
    %866 = arith.cmpf oge, %833, %865 : vector<16x16xf32>
    %cst_269 = arith.constant 0.000000e+00 : f32
    %867 = vector.broadcast %cst_269 : f32 to vector<16x16xf32>
    %868 = arith.subf %867, %864 : vector<16x16xf32>
    %869 = arith.select %866, %864, %868 : vector<16x16xi1>, vector<16x16xf32>
    %cst_270 = arith.constant 1.000000e+00 : f32
    %870 = vector.broadcast %cst_270 : f32 to vector<16x16xf32>
    %871 = arith.addf %869, %870 : vector<16x16xf32>
    %872 = arith.mulf %831, %871 : vector<16x16xf32>
    %c0_271 = arith.constant 0 : index
    %c12_272 = arith.constant 12 : index
    %c0_273 = arith.constant 0 : index
    %c0_274 = arith.constant 0 : index
    %873 = vector.load %arg4[%c0_271, %c12_272, %c0_273, %c0_274] : memref<1x16x16x16xf32, #tpu.memory_space<vmem>>, vector<1x1x16x16xf32>
    %874 = vector.shape_cast %873 : vector<1x1x16x16xf32> to vector<16x16xf32>
    %875 = vector.shape_cast %872 : vector<16x16xf32> to vector<1x1x16x16xf32>
    tpu.vector_store %arg4[%c0_271, %c12_272, %c0_273, %c0_274], %875 {strides = array<i32>} : memref<1x16x16x16xf32, #tpu.memory_space<vmem>>, vector<1x1x16x16xf32>,
    %c13_275 = arith.constant 13 : index
    %876 = memref.load %arg3[%c13_275] : memref<16xf32, #tpu.memory_space<smem>>
    %c52 = arith.constant 52 : index
    %877 = memref.load %arg2[%c52] : memref<64xf32, #tpu.memory_space<smem>>
    %878 = vector.broadcast %877 : f32 to vector<16x16xf32>
    %879 = arith.mulf %802, %878 : vector<16x16xf32>
    %880 = vector.broadcast %876 : f32 to vector<16x16xf32>
    %881 = arith.addf %880, %879 : vector<16x16xf32>
    %c53 = arith.constant 53 : index
    %882 = memref.load %arg2[%c53] : memref<64xf32, #tpu.memory_space<smem>>
    %883 = vector.broadcast %882 : f32 to vector<16x16xf32>
    %884 = arith.mulf %805, %883 : vector<16x16xf32>
    %885 = arith.addf %881, %884 : vector<16x16xf32>
    %c54 = arith.constant 54 : index
    %886 = memref.load %arg2[%c54] : memref<64xf32, #tpu.memory_space<smem>>
    %887 = vector.broadcast %886 : f32 to vector<16x16xf32>
    %888 = arith.mulf %808, %887 : vector<16x16xf32>
    %889 = arith.addf %885, %888 : vector<16x16xf32>
    %c55 = arith.constant 55 : index
    %890 = memref.load %arg2[%c55] : memref<64xf32, #tpu.memory_space<smem>>
    %891 = vector.broadcast %890 : f32 to vector<16x16xf32>
    %892 = arith.mulf %811, %891 : vector<16x16xf32>
    %893 = arith.addf %889, %892 : vector<16x16xf32>
    %cst_276 = arith.constant 5.000000e-01 : f32
    %894 = vector.broadcast %cst_276 : f32 to vector<16x16xf32>
    %895 = arith.mulf %893, %894 : vector<16x16xf32>
    %cst_277 = arith.constant 0.707106769 : f32
    %896 = vector.broadcast %cst_277 : f32 to vector<16x16xf32>
    %897 = arith.mulf %893, %896 : vector<16x16xf32>
    %898 = math.absf %897 : vector<16x16xf32>
    %cst_278 = arith.constant 0.327591091 : f32
    %899 = vector.broadcast %cst_278 : f32 to vector<16x16xf32>
    %900 = arith.mulf %899, %898 : vector<16x16xf32>
    %cst_279 = arith.constant 1.000000e+00 : f32
    %901 = vector.broadcast %cst_279 : f32 to vector<16x16xf32>
    %902 = arith.addf %901, %900 : vector<16x16xf32>
    %903 = tpu.reciprocal %902 {approx = true} : vector<16x16xf32> -> vector<16x16xf32>
    %904 = arith.mulf %902, %903 : vector<16x16xf32>
    %cst_280 = arith.constant 2.000000e+00 : f32
    %905 = vector.broadcast %cst_280 : f32 to vector<16x16xf32>
    %906 = arith.subf %905, %904 : vector<16x16xf32>
    %907 = arith.mulf %903, %906 : vector<16x16xf32>
    %cst_281 = arith.constant 1.06140542 : f32
    %908 = vector.broadcast %cst_281 : f32 to vector<16x16xf32>
    %909 = arith.mulf %908, %907 : vector<16x16xf32>
    %cst_282 = arith.constant -1.45315206 : f32
    %910 = vector.broadcast %cst_282 : f32 to vector<16x16xf32>
    %911 = arith.addf %909, %910 : vector<16x16xf32>
    %912 = arith.mulf %911, %907 : vector<16x16xf32>
    %cst_283 = arith.constant 1.42141378 : f32
    %913 = vector.broadcast %cst_283 : f32 to vector<16x16xf32>
    %914 = arith.addf %912, %913 : vector<16x16xf32>
    %915 = arith.mulf %914, %907 : vector<16x16xf32>
    %cst_284 = arith.constant -0.284496725 : f32
    %916 = vector.broadcast %cst_284 : f32 to vector<16x16xf32>
    %917 = arith.addf %915, %916 : vector<16x16xf32>
    %918 = arith.mulf %917, %907 : vector<16x16xf32>
    %cst_285 = arith.constant 0.254829586 : f32
    %919 = vector.broadcast %cst_285 : f32 to vector<16x16xf32>
    %920 = arith.addf %918, %919 : vector<16x16xf32>
    %921 = arith.mulf %920, %907 : vector<16x16xf32>
    %cst_286 = arith.constant 0.000000e+00 : f32
    %922 = vector.broadcast %cst_286 : f32 to vector<16x16xf32>
    %923 = arith.subf %922, %897 : vector<16x16xf32>
    %924 = arith.mulf %923, %897 : vector<16x16xf32>
    %925 = math.exp %924 : vector<16x16xf32>
    %926 = arith.mulf %921, %925 : vector<16x16xf32>
    %cst_287 = arith.constant 1.000000e+00 : f32
    %927 = vector.broadcast %cst_287 : f32 to vector<16x16xf32>
    %928 = arith.subf %927, %926 : vector<16x16xf32>
    %cst_288 = arith.constant 0.000000e+00 : f32
    %929 = vector.broadcast %cst_288 : f32 to vector<16x16xf32>
    %930 = arith.cmpf oge, %897, %929 : vector<16x16xf32>
    %cst_289 = arith.constant 0.000000e+00 : f32
    %931 = vector.broadcast %cst_289 : f32 to vector<16x16xf32>
    %932 = arith.subf %931, %928 : vector<16x16xf32>
    %933 = arith.select %930, %928, %932 : vector<16x16xi1>, vector<16x16xf32>
    %cst_290 = arith.constant 1.000000e+00 : f32
    %934 = vector.broadcast %cst_290 : f32 to vector<16x16xf32>
    %935 = arith.addf %933, %934 : vector<16x16xf32>
    %936 = arith.mulf %895, %935 : vector<16x16xf32>
    %c0_291 = arith.constant 0 : index
    %c13_292 = arith.constant 13 : index
    %c0_293 = arith.constant 0 : index
    %c0_294 = arith.constant 0 : index
    %937 = vector.load %arg4[%c0_291, %c13_292, %c0_293, %c0_294] : memref<1x16x16x16xf32, #tpu.memory_space<vmem>>, vector<1x1x16x16xf32>
    %938 = vector.shape_cast %937 : vector<1x1x16x16xf32> to vector<16x16xf32>
    %939 = vector.shape_cast %936 : vector<16x16xf32> to vector<1x1x16x16xf32>
    tpu.vector_store %arg4[%c0_291, %c13_292, %c0_293, %c0_294], %939 {strides = array<i32>} : memref<1x16x16x16xf32, #tpu.memory_space<vmem>>, vector<1x1x16x16xf32>,
    %c14_295 = arith.constant 14 : index
    %940 = memref.load %arg3[%c14_295] : memref<16xf32, #tpu.memory_space<smem>>
    %c56 = arith.constant 56 : index
    %941 = memref.load %arg2[%c56] : memref<64xf32, #tpu.memory_space<smem>>
    %942 = vector.broadcast %941 : f32 to vector<16x16xf32>
    %943 = arith.mulf %802, %942 : vector<16x16xf32>
    %944 = vector.broadcast %940 : f32 to vector<16x16xf32>
    %945 = arith.addf %944, %943 : vector<16x16xf32>
    %c57 = arith.constant 57 : index
    %946 = memref.load %arg2[%c57] : memref<64xf32, #tpu.memory_space<smem>>
    %947 = vector.broadcast %946 : f32 to vector<16x16xf32>
    %948 = arith.mulf %805, %947 : vector<16x16xf32>
    %949 = arith.addf %945, %948 : vector<16x16xf32>
    %c58 = arith.constant 58 : index
    %950 = memref.load %arg2[%c58] : memref<64xf32, #tpu.memory_space<smem>>
    %951 = vector.broadcast %950 : f32 to vector<16x16xf32>
    %952 = arith.mulf %808, %951 : vector<16x16xf32>
    %953 = arith.addf %949, %952 : vector<16x16xf32>
    %c59 = arith.constant 59 : index
    %954 = memref.load %arg2[%c59] : memref<64xf32, #tpu.memory_space<smem>>
    %955 = vector.broadcast %954 : f32 to vector<16x16xf32>
    %956 = arith.mulf %811, %955 : vector<16x16xf32>
    %957 = arith.addf %953, %956 : vector<16x16xf32>
    %cst_296 = arith.constant 5.000000e-01 : f32
    %958 = vector.broadcast %cst_296 : f32 to vector<16x16xf32>
    %959 = arith.mulf %957, %958 : vector<16x16xf32>
    %cst_297 = arith.constant 0.707106769 : f32
    %960 = vector.broadcast %cst_297 : f32 to vector<16x16xf32>
    %961 = arith.mulf %957, %960 : vector<16x16xf32>
    %962 = math.absf %961 : vector<16x16xf32>
    %cst_298 = arith.constant 0.327591091 : f32
    %963 = vector.broadcast %cst_298 : f32 to vector<16x16xf32>
    %964 = arith.mulf %963, %962 : vector<16x16xf32>
    %cst_299 = arith.constant 1.000000e+00 : f32
    %965 = vector.broadcast %cst_299 : f32 to vector<16x16xf32>
    %966 = arith.addf %965, %964 : vector<16x16xf32>
    %967 = tpu.reciprocal %966 {approx = true} : vector<16x16xf32> -> vector<16x16xf32>
    %968 = arith.mulf %966, %967 : vector<16x16xf32>
    %cst_300 = arith.constant 2.000000e+00 : f32
    %969 = vector.broadcast %cst_300 : f32 to vector<16x16xf32>
    %970 = arith.subf %969, %968 : vector<16x16xf32>
    %971 = arith.mulf %967, %970 : vector<16x16xf32>
    %cst_301 = arith.constant 1.06140542 : f32
    %972 = vector.broadcast %cst_301 : f32 to vector<16x16xf32>
    %973 = arith.mulf %972, %971 : vector<16x16xf32>
    %cst_302 = arith.constant -1.45315206 : f32
    %974 = vector.broadcast %cst_302 : f32 to vector<16x16xf32>
    %975 = arith.addf %973, %974 : vector<16x16xf32>
    %976 = arith.mulf %975, %971 : vector<16x16xf32>
    %cst_303 = arith.constant 1.42141378 : f32
    %977 = vector.broadcast %cst_303 : f32 to vector<16x16xf32>
    %978 = arith.addf %976, %977 : vector<16x16xf32>
    %979 = arith.mulf %978, %971 : vector<16x16xf32>
    %cst_304 = arith.constant -0.284496725 : f32
    %980 = vector.broadcast %cst_304 : f32 to vector<16x16xf32>
    %981 = arith.addf %979, %980 : vector<16x16xf32>
    %982 = arith.mulf %981, %971 : vector<16x16xf32>
    %cst_305 = arith.constant 0.254829586 : f32
    %983 = vector.broadcast %cst_305 : f32 to vector<16x16xf32>
    %984 = arith.addf %982, %983 : vector<16x16xf32>
    %985 = arith.mulf %984, %971 : vector<16x16xf32>
    %cst_306 = arith.constant 0.000000e+00 : f32
    %986 = vector.broadcast %cst_306 : f32 to vector<16x16xf32>
    %987 = arith.subf %986, %961 : vector<16x16xf32>
    %988 = arith.mulf %987, %961 : vector<16x16xf32>
    %989 = math.exp %988 : vector<16x16xf32>
    %990 = arith.mulf %985, %989 : vector<16x16xf32>
    %cst_307 = arith.constant 1.000000e+00 : f32
    %991 = vector.broadcast %cst_307 : f32 to vector<16x16xf32>
    %992 = arith.subf %991, %990 : vector<16x16xf32>
    %cst_308 = arith.constant 0.000000e+00 : f32
    %993 = vector.broadcast %cst_308 : f32 to vector<16x16xf32>
    %994 = arith.cmpf oge, %961, %993 : vector<16x16xf32>
    %cst_309 = arith.constant 0.000000e+00 : f32
    %995 = vector.broadcast %cst_309 : f32 to vector<16x16xf32>
    %996 = arith.subf %995, %992 : vector<16x16xf32>
    %997 = arith.select %994, %992, %996 : vector<16x16xi1>, vector<16x16xf32>
    %cst_310 = arith.constant 1.000000e+00 : f32
    %998 = vector.broadcast %cst_310 : f32 to vector<16x16xf32>
    %999 = arith.addf %997, %998 : vector<16x16xf32>
    %1000 = arith.mulf %959, %999 : vector<16x16xf32>
    %c0_311 = arith.constant 0 : index
    %c14_312 = arith.constant 14 : index
    %c0_313 = arith.constant 0 : index
    %c0_314 = arith.constant 0 : index
    %1001 = vector.load %arg4[%c0_311, %c14_312, %c0_313, %c0_314] : memref<1x16x16x16xf32, #tpu.memory_space<vmem>>, vector<1x1x16x16xf32>
    %1002 = vector.shape_cast %1001 : vector<1x1x16x16xf32> to vector<16x16xf32>
    %1003 = vector.shape_cast %1000 : vector<16x16xf32> to vector<1x1x16x16xf32>
    tpu.vector_store %arg4[%c0_311, %c14_312, %c0_313, %c0_314], %1003 {strides = array<i32>} : memref<1x16x16x16xf32, #tpu.memory_space<vmem>>, vector<1x1x16x16xf32>,
    %c15_315 = arith.constant 15 : index
    %1004 = memref.load %arg3[%c15_315] : memref<16xf32, #tpu.memory_space<smem>>
    %c60 = arith.constant 60 : index
    %1005 = memref.load %arg2[%c60] : memref<64xf32, #tpu.memory_space<smem>>
    %1006 = vector.broadcast %1005 : f32 to vector<16x16xf32>
    %1007 = arith.mulf %802, %1006 : vector<16x16xf32>
    %1008 = vector.broadcast %1004 : f32 to vector<16x16xf32>
    %1009 = arith.addf %1008, %1007 : vector<16x16xf32>
    %c61 = arith.constant 61 : index
    %1010 = memref.load %arg2[%c61] : memref<64xf32, #tpu.memory_space<smem>>
    %1011 = vector.broadcast %1010 : f32 to vector<16x16xf32>
    %1012 = arith.mulf %805, %1011 : vector<16x16xf32>
    %1013 = arith.addf %1009, %1012 : vector<16x16xf32>
    %c62 = arith.constant 62 : index
    %1014 = memref.load %arg2[%c62] : memref<64xf32, #tpu.memory_space<smem>>
    %1015 = vector.broadcast %1014 : f32 to vector<16x16xf32>
    %1016 = arith.mulf %808, %1015 : vector<16x16xf32>
    %1017 = arith.addf %1013, %1016 : vector<16x16xf32>
    %c63 = arith.constant 63 : index
    %1018 = memref.load %arg2[%c63] : memref<64xf32, #tpu.memory_space<smem>>
    %1019 = vector.broadcast %1018 : f32 to vector<16x16xf32>
    %1020 = arith.mulf %811, %1019 : vector<16x16xf32>
    %1021 = arith.addf %1017, %1020 : vector<16x16xf32>
    %cst_316 = arith.constant 5.000000e-01 : f32
    %1022 = vector.broadcast %cst_316 : f32 to vector<16x16xf32>
    %1023 = arith.mulf %1021, %1022 : vector<16x16xf32>
    %cst_317 = arith.constant 0.707106769 : f32
    %1024 = vector.broadcast %cst_317 : f32 to vector<16x16xf32>
    %1025 = arith.mulf %1021, %1024 : vector<16x16xf32>
    %1026 = math.absf %1025 : vector<16x16xf32>
    %cst_318 = arith.constant 0.327591091 : f32
    %1027 = vector.broadcast %cst_318 : f32 to vector<16x16xf32>
    %1028 = arith.mulf %1027, %1026 : vector<16x16xf32>
    %cst_319 = arith.constant 1.000000e+00 : f32
    %1029 = vector.broadcast %cst_319 : f32 to vector<16x16xf32>
    %1030 = arith.addf %1029, %1028 : vector<16x16xf32>
    %1031 = tpu.reciprocal %1030 {approx = true} : vector<16x16xf32> -> vector<16x16xf32>
    %1032 = arith.mulf %1030, %1031 : vector<16x16xf32>
    %cst_320 = arith.constant 2.000000e+00 : f32
    %1033 = vector.broadcast %cst_320 : f32 to vector<16x16xf32>
    %1034 = arith.subf %1033, %1032 : vector<16x16xf32>
    %1035 = arith.mulf %1031, %1034 : vector<16x16xf32>
    %cst_321 = arith.constant 1.06140542 : f32
    %1036 = vector.broadcast %cst_321 : f32 to vector<16x16xf32>
    %1037 = arith.mulf %1036, %1035 : vector<16x16xf32>
    %cst_322 = arith.constant -1.45315206 : f32
    %1038 = vector.broadcast %cst_322 : f32 to vector<16x16xf32>
    %1039 = arith.addf %1037, %1038 : vector<16x16xf32>
    %1040 = arith.mulf %1039, %1035 : vector<16x16xf32>
    %cst_323 = arith.constant 1.42141378 : f32
    %1041 = vector.broadcast %cst_323 : f32 to vector<16x16xf32>
    %1042 = arith.addf %1040, %1041 : vector<16x16xf32>
    %1043 = arith.mulf %1042, %1035 : vector<16x16xf32>
    %cst_324 = arith.constant -0.284496725 : f32
    %1044 = vector.broadcast %cst_324 : f32 to vector<16x16xf32>
    %1045 = arith.addf %1043, %1044 : vector<16x16xf32>
    %1046 = arith.mulf %1045, %1035 : vector<16x16xf32>
    %cst_325 = arith.constant 0.254829586 : f32
    %1047 = vector.broadcast %cst_325 : f32 to vector<16x16xf32>
    %1048 = arith.addf %1046, %1047 : vector<16x16xf32>
    %1049 = arith.mulf %1048, %1035 : vector<16x16xf32>
    %cst_326 = arith.constant 0.000000e+00 : f32
    %1050 = vector.broadcast %cst_326 : f32 to vector<16x16xf32>
    %1051 = arith.subf %1050, %1025 : vector<16x16xf32>
    %1052 = arith.mulf %1051, %1025 : vector<16x16xf32>
    %1053 = math.exp %1052 : vector<16x16xf32>
    %1054 = arith.mulf %1049, %1053 : vector<16x16xf32>
    %cst_327 = arith.constant 1.000000e+00 : f32
    %1055 = vector.broadcast %cst_327 : f32 to vector<16x16xf32>
    %1056 = arith.subf %1055, %1054 : vector<16x16xf32>
    %cst_328 = arith.constant 0.000000e+00 : f32
    %1057 = vector.broadcast %cst_328 : f32 to vector<16x16xf32>
    %1058 = arith.cmpf oge, %1025, %1057 : vector<16x16xf32>
    %cst_329 = arith.constant 0.000000e+00 : f32
    %1059 = vector.broadcast %cst_329 : f32 to vector<16x16xf32>
    %1060 = arith.subf %1059, %1056 : vector<16x16xf32>
    %1061 = arith.select %1058, %1056, %1060 : vector<16x16xi1>, vector<16x16xf32>
    %cst_330 = arith.constant 1.000000e+00 : f32
    %1062 = vector.broadcast %cst_330 : f32 to vector<16x16xf32>
    %1063 = arith.addf %1061, %1062 : vector<16x16xf32>
    %1064 = arith.mulf %1023, %1063 : vector<16x16xf32>
    %c0_331 = arith.constant 0 : index
    %c15_332 = arith.constant 15 : index
    %c0_333 = arith.constant 0 : index
    %c0_334 = arith.constant 0 : index
    %1065 = vector.load %arg4[%c0_331, %c15_332, %c0_333, %c0_334] : memref<1x16x16x16xf32, #tpu.memory_space<vmem>>, vector<1x1x16x16xf32>
    %1066 = vector.shape_cast %1065 : vector<1x1x16x16xf32> to vector<16x16xf32>
    %1067 = vector.shape_cast %1064 : vector<16x16xf32> to vector<1x1x16x16xf32>
    tpu.vector_store %arg4[%c0_331, %c15_332, %c0_333, %c0_334], %1067 {strides = array<i32>} : memref<1x16x16x16xf32, #tpu.memory_space<vmem>>, vector<1x1x16x16xf32>,
    return
  }
  func.func @transform_0(%arg0: i32) -> (i32, i32, i32, i32) {
    %c0_i32 = arith.constant 0 : i32
    %c0_i32_0 = arith.constant 0 : i32
    %c0_i32_1 = arith.constant 0 : i32
    %c0_i32_2 = arith.constant 0 : i32
    return %arg0, %c0_i32, %c0_i32_0, %c0_i32_1 : i32, i32, i32, i32
  }
  func.func @transform_1(%arg0: i32) -> i32 {
    %c0_i32 = arith.constant 0 : i32
    %c0_i32_0 = arith.constant 0 : i32
    return %c0_i32 : i32
  }
  func.func @transform_2(%arg0: i32) -> i32 {
    %c0_i32 = arith.constant 0 : i32
    %c0_i32_0 = arith.constant 0 : i32
    return %c0_i32 : i32
  }
  func.func @transform_3(%arg0: i32) -> (i32, i32, i32, i32) {
    %c0_i32 = arith.constant 0 : i32
    %c0_i32_0 = arith.constant 0 : i32
    %c0_i32_1 = arith.constant 0 : i32
    %c0_i32_2 = arith.constant 0 : i32
    return %arg0, %c0_i32, %c0_i32_0, %c0_i32_1 : i32, i32, i32, i32
  }
}

</mosaic_0001>

<llo_original>
// kernel: tpu_custom_call.1
$region0: #{tpu_custom_call.1}
  #allocation0 [shape = 'u32[]', space=smem, size = 0x4, offset = 0x4, fixed_abs, tag = 'smem constant byte address 0x4 - core index']
  #allocation1 [shape = 'u32[144,128]{1,0:T(1,128)}', space=vmem, size = 0x12000, scoped, tag = 'internal scratch']
  %s0 = inlined_call_operand.hbm [shape: f32[2,4,16,16], index: 0, kind: input, shape index: {}]
  %s1 = inlined_call_operand.vmem [shape: f32[64], index: 1, kind: input, shape index: {}]
  %s2 = inlined_call_operand.vmem [shape: f32[16], index: 2, kind: input, shape index: {}]
  %s3 = inlined_call_operand.hbm [shape: f32[2,16,16,16], index: 3, kind: output, shape index: {}]
  %s4 = sld [smem:[#allocation0]]
  $region57: #{tpu_custom_call.1} parent=0
    _
  %s6 = ssub.s32 1, %s4
  %s7 = scalar_select 0, %s6, %s4
  $region1: #{tpu_custom_call.1} parent=0
    #allocation2 [shape = 'u8[65536]{0}', space=vmem, size = 0x10000, scoped, tag = 'input window, operand 0']
    #allocation3 [shape = 's32[2]{0}', space=sflag, size = 0x8, scoped, tag = 'scoped memory for tpu_custom_call.1']
    #allocation4 [shape = 's32[2]{0}', space=sflag, size = 0x8, scoped, tag = 'scoped memory for tpu_custom_call.1']
    #allocation5 [shape = 's32[2]{0}', space=sflag, size = 0x8, scoped, tag = 'scoped memory for tpu_custom_call.1']
    #allocation6 [shape = 'u8[512]{0}', space=smem, size = 0x200, scoped, tag = 'input window, operand 1, single buffered']
    #allocation7 [shape = 'u8[512]{0}', space=smem, size = 0x200, scoped, tag = 'input window, operand 2, single buffered']
    #allocation8 [shape = 's32[1]{0}', space=sflag, size = 0x4, scoped, tag = 'scoped memory for tpu_custom_call.1']
    #allocation9 [shape = 'u8[262144]{0}', space=vmem, size = 0x40000, scoped, tag = 'output window, operand 0']
    %8 = vsyncpa [#allocation3], 0
    %s9 = scalar_lea.sflag [#allocation3], 1
    %10 = vsyncpa %s9, 0
    %11 = vsyncpa [#allocation5], 0
    %12 = vsyncpa [#allocation8], 0
    %13 = vsyncpa [#allocation4], 0
    %s14 = scalar_lea.sflag [#allocation4], 1
    %15 = vsyncpa %s14, 0
    loop: start=0, step=1, limit=4
    $region2: #{tpu_custom_call.1} parent=1 // loop_pre_header
      _
    $region3: #{tpu_custom_call.1} parent=1 // loop_header
      %s17 = sphi 0, %s21
      %p18 = scmp.ge.s32.totalorder %s17, 4
      %s27 = sphi 0, %s29
      %s30 = sphi 0, %s27
      %s31 = sphi 0, %s30
      %s47 = sphi 0, %s31
      %s51 = sphi 0, %s51
      %s53 = sphi 0, %s51
      %s54 = sphi 0, %s53
      %s68 = sphi 0, %s54
      %s72 = sphi 0, %s72
      %s74 = sphi 0, %s72
      %s75 = sphi 0, %s74
      %s89 = sphi 0, %s75
      %s95 = sphi 0, %s97
      %s98 = sphi 0, %s95
      %s99 = sphi 0, %s98
      %s115 = sphi 0, %s99
    $region4: #{tpu_custom_call.1} parent=1 // loop_header_branch
      %20 = sbr.rel (%p18) target = $region8
    $region5: #{tpu_custom_call.1} parent=1 // loop_body
      %s22 = ssub.s32 %s17, 1
      %s23 = ssub.s32 %s17, 2
      %s24 = sadd.s32 %s17, 1
      %s25 = ssub.s32 %s17, %s24
      %p26 = scmp.eq.s32.totalorder %s25, 0
      %s28 = sadd.s32 %s27, 1
      %s29 = scalar_select %p26, %s27, %s28
      %p32 = pneg %p26
      %p33 = scmp.eq.s32.totalorder %s17, 1
      %p34 = por %p32, %p33
      %p35 = scmp.ne.s32.totalorder %s27, %s30
      %p36 = scmp.eq.s32.totalorder %s17, 0
      %p37 = por %p35, %p36
      %p38 = scmp.ne.s32.totalorder %s27, %s30
      %p39 = scmp.eq.s32.totalorder %s22, 1
      %p40 = por %p38, %p39
      %p41 = scmp.ne.s32.totalorder %s30, %s31
      %p42 = scmp.eq.s32.totalorder %s22, 0
      %p43 = por %p41, %p42
      %p44 = scmp.ne.s32.totalorder %s30, %s31
      %p45 = scmp.eq.s32.totalorder %s23, 1
      %p46 = por %p44, %p45
      %p48 = scmp.ne.s32.totalorder %s31, %s47
      %p49 = scmp.eq.s32.totalorder %s23, 0
      %p50 = por %p48, %p49
      %s52 = sadd.s32 %s51, 1
      %p55 = scmp.eq.s32.totalorder %s17, 1
      %p56 = scmp.ne.s32.totalorder %s51, %s53
      %p57 = scmp.eq.s32.totalorder %s17, 0
      %p58 = por %p56, %p57
      %p59 = scmp.ne.s32.totalorder %s51, %s53
      %p60 = scmp.eq.s32.totalorder %s22, 1
      %p61 = por %p59, %p60
      %p62 = scmp.ne.s32.totalorder %s53, %s54
      %p63 = scmp.eq.s32.totalorder %s22, 0
      %p64 = por %p62, %p63
      %p65 = scmp.ne.s32.totalorder %s53, %s54
      %p66 = scmp.eq.s32.totalorder %s23, 1
      %p67 = por %p65, %p66
      %p69 = scmp.ne.s32.totalorder %s54, %s68
      %p70 = scmp.eq.s32.totalorder %s23, 0
      %p71 = por %p69, %p70
      %s73 = sadd.s32 %s72, 1
      %p76 = scmp.eq.s32.totalorder %s17, 1
      %p77 = scmp.ne.s32.totalorder %s72, %s74
      %p78 = scmp.eq.s32.totalorder %s17, 0
      %p79 = por %p77, %p78
      %p80 = scmp.ne.s32.totalorder %s72, %s74
      %p81 = scmp.eq.s32.totalorder %s22, 1
      %p82 = por %p80, %p81
      %p83 = scmp.ne.s32.totalorder %s74, %s75
      %p84 = scmp.eq.s32.totalorder %s22, 0
      %p85 = por %p83, %p84
      %p86 = scmp.ne.s32.totalorder %s74, %s75
      %p87 = scmp.eq.s32.totalorder %s23, 1
      %p88 = por %p86, %p87
      %p90 = scmp.ne.s32.totalorder %s75, %s89
      %p91 = scmp.eq.s32.totalorder %s23, 0
      %p92 = por %p90, %p91
      %s93 = ssub.s32 %s17, %s24
      %p94 = scmp.eq.s32.totalorder %s93, 0
      %s96 = sadd.s32 %s95, 1
      %s97 = scalar_select %p94, %s95, %s96
      %p100 = pneg %p94
      %p101 = scmp.eq.s32.totalorder %s17, 1
      %p102 = por %p100, %p101
      %p103 = scmp.ne.s32.totalorder %s95, %s98
      %p104 = scmp.eq.s32.totalorder %s17, 0
      %p105 = por %p103, %p104
      %p106 = scmp.ne.s32.totalorder %s95, %s98
      %p107 = scmp.eq.s32.totalorder %s22, 1
      %p108 = por %p106, %p107
      %p109 = scmp.ne.s32.totalorder %s98, %s99
      %p110 = scmp.eq.s32.totalorder %s22, 0
      %p111 = por %p109, %p110
      %p112 = scmp.ne.s32.totalorder %s98, %s99
      %p113 = scmp.eq.s32.totalorder %s23, 1
      %p114 = por %p112, %p113
      %p116 = scmp.ne.s32.totalorder %s99, %s115
      %p117 = scmp.eq.s32.totalorder %s23, 0
      %p118 = por %p116, %p117
      %p119 = scmp.le.s32.totalorder 1, %s17
      %p120 = scmp.lt.s32.totalorder %s17, 3
      %p121 = pnand %p119, %p120
      %p122 = pneg %p121
      // Predicated region
      $region9: #{tpu_custom_call.1} parent=5 // pred_check
        _
      $region10: #{tpu_custom_call.1} parent=5 // pred_check_branch
        %124 = sbr.rel (%p121) target = $region12
      $region11: #{tpu_custom_call.1} parent=5 // pred_region
        %s125 = ssub.s32 %s17, 1
        // Predicated region
        $region13: #{tpu_custom_call.1} parent=11 // pred_check
          %p126 = pneg %p64
        $region14: #{tpu_custom_call.1} parent=11 // pred_check_branch
          %128 = sbr.rel (%p126) target = $region16
        $region15: #{tpu_custom_call.1} parent=11 // pred_region
          %s130 = ssub.s32 16, 16
          %131 = vsyncadd [#allocation5], %s130
          %s133 = sshll.u32 %s1, 4
          %s134 = int_to_ptr.vmem [resolvable:$true] %s133
          %136 = dma.vmem_to_smem %s134, 16, [#allocation6], [#allocation5]
        $region16: #{tpu_custom_call.1} parent=11 // pred_fallthru
          _
        // Predicated region
        $region17: #{tpu_custom_call.1} parent=11 // pred_check
          %p137 = pneg %p85
        $region18: #{tpu_custom_call.1} parent=11 // pred_check_branch
          %139 = sbr.rel (%p137) target = $region20
        $region19: #{tpu_custom_call.1} parent=11 // pred_region
          %s141 = ssub.s32 16, 16
          %142 = vsyncadd [#allocation8], %s141
          %s144 = sshll.u32 %s2, 4
          %s145 = int_to_ptr.vmem [resolvable:$true] %s144
          %147 = dma.vmem_to_smem %s145, 16, [#allocation7], [#allocation8]
        $region20: #{tpu_custom_call.1} parent=11 // pred_fallthru
          _
      $region12: #{tpu_custom_call.1} parent=5 // pred_fallthru
        _
      %p148 = scmp.lt.s32.totalorder %s17, 2
      // Predicated region
      $region21: #{tpu_custom_call.1} parent=5 // pred_check
        %p149 = pneg %p148
      $region22: #{tpu_custom_call.1} parent=5 // pred_check_branch
        %151 = sbr.rel (%p149) target = $region24
      $region23: #{tpu_custom_call.1} parent=5 // pred_region
        // Predicated region
        $region25: #{tpu_custom_call.1} parent=23 // pred_check
          %p152 = pneg %p37
        $region26: #{tpu_custom_call.1} parent=23 // pred_check_branch
          %154 = sbr.rel (%p152) target = $region28
        $region27: #{tpu_custom_call.1} parent=23 // pred_region
          %s155 = sand.u32 %s27, 1
          %s156 = scalar_lea.sflag [#allocation3], %s155
          %s157 = sand.u32 %s27, 1
          %s158 = smul.addr %s157, 64
          %s159 = scalar_lea.vmem [#allocation2], %s158
          %s161 = ssub.s32 1024, 1024
          %162 = vsyncadd %s156, %s161
          %s163 = smul.addr %s17, 8
          %s164 = smul.addr %s163, 128
          %s165 = scalar_lea.hbm %s0, %s164
          %s166 = sshll.u32 %s159, 4
          %s167 = int_to_ptr.vmem [resolvable:$true] %s166
          %172 = dma.hbm_to_vmem [thread:$0]  %s165, 1024, %s167, %s156, 128, 128, 8
        $region28: #{tpu_custom_call.1} parent=23 // pred_fallthru
          _
      $region24: #{tpu_custom_call.1} parent=5 // pred_fallthru
        _
      %p173 = scmp.le.s32.totalorder 1, %s17
      %p174 = scmp.lt.s32.totalorder %s17, 3
      %p175 = pnand %p173, %p174
      %p176 = pneg %p175
      // Predicated region
      $region29: #{tpu_custom_call.1} parent=5 // pred_check
        _
      $region30: #{tpu_custom_call.1} parent=5 // pred_check_branch
        %178 = sbr.rel (%p175) target = $region32
      $region31: #{tpu_custom_call.1} parent=5 // pred_region
        %s179 = ssub.s32 %s17, 1
        %s180 = sand.u32 %s30, 1
        %s181 = scalar_lea.sflag [#allocation3], %s180
        %s182 = sand.u32 %s30, 1
        %s183 = smul.addr %s182, 64
        %s184 = scalar_lea.vmem [#allocation2], %s183
        // Predicated region
        $region33: #{tpu_custom_call.1} parent=31 // pred_check
          %p185 = pneg %p43
        $region34: #{tpu_custom_call.1} parent=31 // pred_check_branch
          %187 = sbr.rel (%p185) target = $region36
        $region35: #{tpu_custom_call.1} parent=31 // pred_region
          %188 = dma.done %s181, 1024
        $region36: #{tpu_custom_call.1} parent=31 // pred_fallthru
          _
        // Predicated region
        $region37: #{tpu_custom_call.1} parent=31 // pred_check
          %p189 = pneg %p64
        $region38: #{tpu_custom_call.1} parent=31 // pred_check_branch
          %191 = sbr.rel (%p189) target = $region40
        $region39: #{tpu_custom_call.1} parent=31 // pred_region
          %192 = dma.done [#allocation5], 16
        $region40: #{tpu_custom_call.1} parent=31 // pred_fallthru
          _
        // Predicated region
        $region41: #{tpu_custom_call.1} parent=31 // pred_check
          %p193 = pneg %p85
        $region42: #{tpu_custom_call.1} parent=31 // pred_check_branch
          %195 = sbr.rel (%p193) target = $region44
        $region43: #{tpu_custom_call.1} parent=31 // pred_region
          %196 = dma.done [#allocation8], 16
        $region44: #{tpu_custom_call.1} parent=31 // pred_fallthru
          _
        %197 = sfence
        %s198 = sand.u32 %s30, 1
        %s199 = scalar_lea.sflag [#allocation3], %s198
        %s200 = sand.u32 %s30, 1
        %s201 = smul.addr %s200, 64
        %s202 = scalar_lea.vmem [#allocation2], %s201
        %p203 = pneg %p43
        %p204 = pneg %p40
        %p205 = pneg %p64
        %p206 = pneg %p61
        %p207 = pneg %p85
        %p208 = pneg %p82
        %p209 = pneg %p111
        %p210 = pneg %p108
        %s211 = sand.u32 %s98, 1
        %s212 = scalar_lea.sflag [#allocation4], %s211
        %s213 = sand.u32 %s98, 1
        %s214 = smul.addr %s213, 256
        %s215 = scalar_lea.vmem [#allocation9], %s214
        %v216 = vld [vmem:[%s184] sm:$0xff]
        %v217 = vld [vmem:[%s184 + $0x8] sm:$0xff]
        %220 = vrot.lane.b32.xlu0 %v216, 127
        %v221 = vpop.permute.xlu0 %220
        %222 = vrot.lane.b32.xlu0 %v217, 127
        %v223 = vpop.permute.xlu0 %222
        %226 = vrot.lane.b32.xlu0 %v216, 15
        %v227 = vpop.permute.xlu0 %226
        %228 = vrot.lane.b32.xlu0 %v217, 15
        %v229 = vpop.permute.xlu0 %228
        %vm232 = vcmask 121856
        %v233 = vsel %vm232, %v221, %v227
        %v234 = vsel %vm232, %v223, %v229
        %vm235 = vcmask 1046528
        %v236 = vrot.slane %v216, 1
        %v237 = vrot.slane %v217, 1
        %v238 = vsel %vm235, %v236, %v237
        %v242 = vsel %vm235, %v237, %v236
        %v245 = vrot.slane %v233, 1
        %v246 = vrot.slane %v234, 1
        %v247 = vsel %vm235, %v245, %v246
        %v251 = vsel %vm235, %v246, %v245
        %s252 = sld [smem:[#allocation7]]
        %s253 = sld [smem:[#allocation6]]
        %v254 = vstv %s253
        %v255 = vmul.f32 %v216, %v254
        %v256 = vmul.f32 %v217, %v254
        %v257 = vstv %s252
        %v258 = vadd.f32 %v257, %v255
        %v259 = vadd.f32 %v257, %v256
        %s260 = sld [smem:[#allocation6 + $0x1]]
        %v261 = vstv %s260
        %v262 = vmul.f32 %v233, %v261
        %v263 = vmul.f32 %v234, %v261
        %v264 = vadd.f32 %v258, %v262
        %v265 = vadd.f32 %v259, %v263
        %s266 = sld [smem:[#allocation6 + $0x2]]
        %v267 = vstv %s266
        %v268 = vmul.f32 %v238, %v267
        %v269 = vmul.f32 %v242, %v267
        %v270 = vadd.f32 %v264, %v268
        %v271 = vadd.f32 %v265, %v269
        %s272 = sld [smem:[#allocation6 + $0x3]]
        %v273 = vstv %s272
        %v274 = vmul.f32 %v247, %v273
        %v275 = vmul.f32 %v251, %v273
        %v276 = vadd.f32 %v270, %v274
        %v277 = vadd.f32 %v271, %v275
        %v278 = vmul.f32 %v276, 0.5
        %v279 = vmul.f32 %v277, 0.5
        %v280 = vmul.f32 %v276, 0.70710677
        %v281 = vmul.f32 %v277, 0.70710677
        %v282 = vand.u32 2147483647, %v280
        %v283 = vand.u32 2147483647, %v281
        %v284 = vmul.f32 %v282, 0.3275911
        %v285 = vmul.f32 %v283, 0.3275911
        %v286 = vadd.f32 %v284, 1.0
        %v287 = vadd.f32 %v285, 1.0
        %v288 = vrcp.pop %v286
        %v289 = vrcp.pop %v287
        %v290 = vmul.f32 %v286, %v288
        %v291 = vmul.f32 %v287, %v289
        %v292 = vsub.f32 2.0, %v290
        %v293 = vsub.f32 2.0, %v291
        %v294 = vmul.f32 %v288, %v292
        %v295 = vmul.f32 %v289, %v293
        %v296 = vmul.f32 %v294, 1.0614054
        %v297 = vmul.f32 %v295, 1.0614054
        %v298 = vadd.f32 %v296, -1.4531521
        %v299 = vadd.f32 %v297, -1.4531521
        %v300 = vmul.f32 %v298, %v294
        %v301 = vmul.f32 %v299, %v295
        %v302 = vadd.f32 %v300, 1.4214138
        %v303 = vadd.f32 %v301, 1.4214138
        %v304 = vmul.f32 %v302, %v294
        %v305 = vmul.f32 %v303, %v295
        %v306 = vadd.f32 %v304, -0.28449672
        %v307 = vadd.f32 %v305, -0.28449672
        %v308 = vmul.f32 %v306, %v294
        %v309 = vmul.f32 %v307, %v295
        %v310 = vadd.f32 %v308, 0.2548296
        %v311 = vadd.f32 %v309, 0.2548296
        %v312 = vmul.f32 %v310, %v294
        %v313 = vmul.f32 %v311, %v295
        %v314 = vsub.f32 0.0, %v280
        %v315 = vsub.f32 0.0, %v281
        %v316 = vmul.f32 %v314, %v280
        %v317 = vmul.f32 %v315, %v281
        %v318 = vmul.f32 %v316, 1.442695
        %v319 = vpow.pop %v318
        %v320 = vmul.f32 %v317, 1.442695
        %v321 = vpow.pop %v320
        %v322 = vmul.f32 %v312, %v319
        %v323 = vmul.f32 %v313, %v321
        %v324 = vsub.f32 1.0, %v322
        %v325 = vsub.f32 1.0, %v323
        %vm326 = vcmp.ge.f32.partialorder %v280, 0.0
        %vm327 = vcmp.ge.f32.partialorder %v281, 0.0
        %v328 = vsub.f32 0.0, %v324
        %v329 = vsub.f32 0.0, %v325
        %v330 = vsel %vm326, %v324, %v328
        %v331 = vsel %vm327, %v325, %v329
        %v332 = vadd.f32 %v330, 1.0
        %v333 = vadd.f32 %v331, 1.0
        %v334 = vmul.f32 %v278, %v332
        %v335 = vmul.f32 %v279, %v333
        %vm336 = vcmask 130048
        %337 = vst.msk [vmem:[%s215] sm:$0xff] %vm336, %v334
        %338 = vst.msk [vmem:[%s215 + $0x8] sm:$0xff] %vm336, %v335
        %s339 = sld [smem:[#allocation7 + $0x1]]
        %s340 = sld [smem:[#allocation6 + $0x4]]
        %v341 = vstv %s340
        %v342 = vmul.f32 %v216, %v341
        %v343 = vmul.f32 %v217, %v341
        %v344 = vstv %s339
        %v345 = vadd.f32 %v344, %v342
        %v346 = vadd.f32 %v344, %v343
        %s347 = sld [smem:[#allocation6 + $0x5]]
        %v348 = vstv %s347
        %v349 = vmul.f32 %v233, %v348
        %v350 = vmul.f32 %v234, %v348
        %v351 = vadd.f32 %v345, %v349
        %v352 = vadd.f32 %v346, %v350
        %s353 = sld [smem:[#allocation6 + $0x6]]
        %v354 = vstv %s353
        %v355 = vmul.f32 %v238, %v354
        %v356 = vmul.f32 %v242, %v354
        %v357 = vadd.f32 %v351, %v355
        %v358 = vadd.f32 %v352, %v356
        %s359 = sld [smem:[#allocation6 + $0x7]]
        %v360 = vstv %s359
        %v361 = vmul.f32 %v247, %v360
        %v362 = vmul.f32 %v251, %v360
        %v363 = vadd.f32 %v357, %v361
        %v364 = vadd.f32 %v358, %v362
        %v365 = vmul.f32 %v363, 0.5
        %v366 = vmul.f32 %v364, 0.5
        %v367 = vmul.f32 %v363, 0.70710677
        %v368 = vmul.f32 %v364, 0.70710677
        %v369 = vand.u32 2147483647, %v367
        %v370 = vand.u32 2147483647, %v368
        %v371 = vmul.f32 %v369, 0.3275911
        %v372 = vmul.f32 %v370, 0.3275911
        %v373 = vadd.f32 %v371, 1.0
        %v374 = vadd.f32 %v372, 1.0
        %v375 = vrcp.pop %v373
        %v376 = vrcp.pop %v374
        %v377 = vmul.f32 %v373, %v375
        %v378 = vmul.f32 %v374, %v376
        %v379 = vsub.f32 2.0, %v377
        %v380 = vsub.f32 2.0, %v378
        %v381 = vmul.f32 %v375, %v379
        %v382 = vmul.f32 %v376, %v380
        %v383 = vmul.f32 %v381, 1.0614054
        %v384 = vmul.f32 %v382, 1.0614054
        %v385 = vadd.f32 %v383, -1.4531521
        %v386 = vadd.f32 %v384, -1.4531521
        %v387 = vmul.f32 %v385, %v381
        %v388 = vmul.f32 %v386, %v382
        %v389 = vadd.f32 %v387, 1.4214138
        %v390 = vadd.f32 %v388, 1.4214138
        %v391 = vmul.f32 %v389, %v381
        %v392 = vmul.f32 %v390, %v382
        %v393 = vadd.f32 %v391, -0.28449672
        %v394 = vadd.f32 %v392, -0.28449672
        %v395 = vmul.f32 %v393, %v381
        %v396 = vmul.f32 %v394, %v382
        %v397 = vadd.f32 %v395, 0.2548296
        %v398 = vadd.f32 %v396, 0.2548296
        %v399 = vmul.f32 %v397, %v381
        %v400 = vmul.f32 %v398, %v382
        %v401 = vsub.f32 0.0, %v367
        %v402 = vsub.f32 0.0, %v368
        %v403 = vmul.f32 %v401, %v367
        %v404 = vmul.f32 %v402, %v368
        %v405 = vmul.f32 %v403, 1.442695
        %v406 = vpow.pop %v405
        %v407 = vmul.f32 %v404, 1.442695
        %v408 = vpow.pop %v407
        %v409 = vmul.f32 %v399, %v406
        %v410 = vmul.f32 %v400, %v408
        %v411 = vsub.f32 1.0, %v409
        %v412 = vsub.f32 1.0, %v410
        %vm413 = vcmp.ge.f32.partialorder %v367, 0.0
        %vm414 = vcmp.ge.f32.partialorder %v368, 0.0
        %v415 = vsub.f32 0.0, %v411
        %v416 = vsub.f32 0.0, %v412
        %v417 = vsel %vm413, %v411, %v415
        %v418 = vsel %vm414, %v412, %v416
        %v419 = vadd.f32 %v417, 1.0
        %v420 = vadd.f32 %v418, 1.0
        %v421 = vmul.f32 %v365, %v419
        %v422 = vmul.f32 %v366, %v420
        %s423 = scalar_lea.vmem %s215, 16 [#allocation9]
        %424 = vst.msk [vmem:[%s423] sm:$0xff] %vm336, %v421
        %425 = vst.msk [vmem:[%s423 + $0x8] sm:$0xff] %vm336, %v422
        %s426 = sld [smem:[#allocation7 + $0x2]]
        %s427 = sld [smem:[#allocation6 + $0x8]]
        %v428 = vstv %s427
        %v429 = vmul.f32 %v216, %v428
        %v430 = vmul.f32 %v217, %v428
        %v431 = vstv %s426
        %v432 = vadd.f32 %v431, %v429
        %v433 = vadd.f32 %v431, %v430
        %s434 = sld [smem:[#allocation6 + $0x9]]
        %v435 = vstv %s434
        %v436 = vmul.f32 %v233, %v435
        %v437 = vmul.f32 %v234, %v435
        %v438 = vadd.f32 %v432, %v436
        %v439 = vadd.f32 %v433, %v437
        %s440 = sld [smem:[#allocation6 + $0xa]]
        %v441 = vstv %s440
        %v442 = vmul.f32 %v238, %v441
        %v443 = vmul.f32 %v242, %v441
        %v444 = vadd.f32 %v438, %v442
        %v445 = vadd.f32 %v439, %v443
        %s446 = sld [smem:[#allocation6 + $0xb]]
        %v447 = vstv %s446
        %v448 = vmul.f32 %v247, %v447
        %v449 = vmul.f32 %v251, %v447
        %v450 = vadd.f32 %v444, %v448
        %v451 = vadd.f32 %v445, %v449
        %v452 = vmul.f32 %v450, 0.5
        %v453 = vmul.f32 %v451, 0.5
        %v454 = vmul.f32 %v450, 0.70710677
        %v455 = vmul.f32 %v451, 0.70710677
        %v456 = vand.u32 2147483647, %v454
        %v457 = vand.u32 2147483647, %v455
        %v458 = vmul.f32 %v456, 0.3275911
        %v459 = vmul.f32 %v457, 0.3275911
        %v460 = vadd.f32 %v458, 1.0
        %v461 = vadd.f32 %v459, 1.0
        %v462 = vrcp.pop %v460
        %v463 = vrcp.pop %v461
        %v464 = vmul.f32 %v460, %v462
        %v465 = vmul.f32 %v461, %v463
        %v466 = vsub.f32 2.0, %v464
        %v467 = vsub.f32 2.0, %v465
        %v468 = vmul.f32 %v462, %v466
        %v469 = vmul.f32 %v463, %v467
        %v470 = vmul.f32 %v468, 1.0614054
        %v471 = vmul.f32 %v469, 1.0614054
        %v472 = vadd.f32 %v470, -1.4531521
        %v473 = vadd.f32 %v471, -1.4531521
        %v474 = vmul.f32 %v472, %v468
        %v475 = vmul.f32 %v473, %v469
        %v476 = vadd.f32 %v474, 1.4214138
        %v477 = vadd.f32 %v475, 1.4214138
        %v478 = vmul.f32 %v476, %v468
        %v479 = vmul.f32 %v477, %v469
        %v480 = vadd.f32 %v478, -0.28449672
        %v481 = vadd.f32 %v479, -0.28449672
        %v482 = vmul.f32 %v480, %v468
        %v483 = vmul.f32 %v481, %v469
        %v484 = vadd.f32 %v482, 0.2548296
        %v485 = vadd.f32 %v483, 0.2548296
        %v486 = vmul.f32 %v484, %v468
        %v487 = vmul.f32 %v485, %v469
        %v488 = vsub.f32 0.0, %v454
        %v489 = vsub.f32 0.0, %v455
        %v490 = vmul.f32 %v488, %v454
        %v491 = vmul.f32 %v489, %v455
        %v492 = vmul.f32 %v490, 1.442695
        %v493 = vpow.pop %v492
        %v494 = vmul.f32 %v491, 1.442695
        %v495 = vpow.pop %v494
        %v496 = vmul.f32 %v486, %v493
        %v497 = vmul.f32 %v487, %v495
        %v498 = vsub.f32 1.0, %v496
        %v499 = vsub.f32 1.0, %v497
        %vm500 = vcmp.ge.f32.partialorder %v454, 0.0
        %vm501 = vcmp.ge.f32.partialorder %v455, 0.0
        %v502 = vsub.f32 0.0, %v498
        %v503 = vsub.f32 0.0, %v499
        %v504 = vsel %vm500, %v498, %v502
        %v505 = vsel %vm501, %v499, %v503
        %v506 = vadd.f32 %v504, 1.0
        %v507 = vadd.f32 %v505, 1.0
        %v508 = vmul.f32 %v452, %v506
        %v509 = vmul.f32 %v453, %v507
        %s510 = scalar_lea.vmem %s215, 32 [#allocation9]
        %511 = vst.msk [vmem:[%s510] sm:$0xff] %vm336, %v508
        %512 = vst.msk [vmem:[%s510 + $0x8] sm:$0xff] %vm336, %v509
        %s513 = sld [smem:[#allocation7 + $0x3]]
        %s514 = sld [smem:[#allocation6 + $0xc]]
        %v515 = vstv %s514
        %v516 = vmul.f32 %v216, %v515
        %v517 = vmul.f32 %v217, %v515
        %v518 = vstv %s513
        %v519 = vadd.f32 %v518, %v516
        %v520 = vadd.f32 %v518, %v517
        %s521 = sld [smem:[#allocation6 + $0xd]]
        %v522 = vstv %s521
        %v523 = vmul.f32 %v233, %v522
        %v524 = vmul.f32 %v234, %v522
        %v525 = vadd.f32 %v519, %v523
        %v526 = vadd.f32 %v520, %v524
        %s527 = sld [smem:[#allocation6 + $0xe]]
        %v528 = vstv %s527
        %v529 = vmul.f32 %v238, %v528
        %v530 = vmul.f32 %v242, %v528
        %v531 = vadd.f32 %v525, %v529
        %v532 = vadd.f32 %v526, %v530
        %s533 = sld [smem:[#allocation6 + $0xf]]
        %v534 = vstv %s533
        %v535 = vmul.f32 %v247, %v534
        %v536 = vmul.f32 %v251, %v534
        %v537 = vadd.f32 %v531, %v535
        %v538 = vadd.f32 %v532, %v536
        %v539 = vmul.f32 %v537, 0.5
        %v540 = vmul.f32 %v538, 0.5
        %v541 = vmul.f32 %v537, 0.70710677
        %v542 = vmul.f32 %v538, 0.70710677
        %v543 = vand.u32 2147483647, %v541
        %v544 = vand.u32 2147483647, %v542
        %v545 = vmul.f32 %v543, 0.3275911
        %v546 = vmul.f32 %v544, 0.3275911
        %v547 = vadd.f32 %v545, 1.0
        %v548 = vadd.f32 %v546, 1.0
        %v549 = vrcp.pop %v547
        %v550 = vrcp.pop %v548
        %v551 = vmul.f32 %v547, %v549
        %v552 = vmul.f32 %v548, %v550
        %v553 = vsub.f32 2.0, %v551
        %v554 = vsub.f32 2.0, %v552
        %v555 = vmul.f32 %v549, %v553
        %v556 = vmul.f32 %v550, %v554
        %v557 = vmul.f32 %v555, 1.0614054
        %v558 = vmul.f32 %v556, 1.0614054
        %v559 = vadd.f32 %v557, -1.4531521
        %v560 = vadd.f32 %v558, -1.4531521
        %v561 = vmul.f32 %v559, %v555
        %v562 = vmul.f32 %v560, %v556
        %v563 = vadd.f32 %v561, 1.4214138
        %v564 = vadd.f32 %v562, 1.4214138
        %v565 = vmul.f32 %v563, %v555
        %v566 = vmul.f32 %v564, %v556
        %v567 = vadd.f32 %v565, -0.28449672
        %v568 = vadd.f32 %v566, -0.28449672
        %v569 = vmul.f32 %v567, %v555
        %v570 = vmul.f32 %v568, %v556
        %v571 = vadd.f32 %v569, 0.2548296
        %v572 = vadd.f32 %v570, 0.2548296
        %v573 = vmul.f32 %v571, %v555
        %v574 = vmul.f32 %v572, %v556
        %v575 = vsub.f32 0.0, %v541
        %v576 = vsub.f32 0.0, %v542
        %v577 = vmul.f32 %v575, %v541
        %v578 = vmul.f32 %v576, %v542
        %v579 = vmul.f32 %v577, 1.442695
        %v580 = vpow.pop %v579
        %v581 = vmul.f32 %v578, 1.442695
        %v582 = vpow.pop %v581
        %v583 = vmul.f32 %v573, %v580
        %v584 = vmul.f32 %v574, %v582
        %v585 = vsub.f32 1.0, %v583
        %v586 = vsub.f32 1.0, %v584
        %vm587 = vcmp.ge.f32.partialorder %v541, 0.0
        %vm588 = vcmp.ge.f32.partialorder %v542, 0.0
        %v589 = vsub.f32 0.0, %v585
        %v590 = vsub.f32 0.0, %v586
        %v591 = vsel %vm587, %v585, %v589
        %v592 = vsel %vm588, %v586, %v590
        %v593 = vadd.f32 %v591, 1.0
        %v594 = vadd.f32 %v592, 1.0
        %v595 = vmul.f32 %v539, %v593
        %v596 = vmul.f32 %v540, %v594
        %s597 = scalar_lea.vmem %s215, 48 [#allocation9]
        %598 = vst.msk [vmem:[%s597] sm:$0xff] %vm336, %v595
        %599 = vst.msk [vmem:[%s597 + $0x8] sm:$0xff] %vm336, %v596
        %s600 = scalar_lea.vmem %s184, 16 [#allocation2]
        %v601 = vld [vmem:[%s600] sm:$0xff]
        %v602 = vld [vmem:[%s600 + $0x8] sm:$0xff]
        %605 = vrot.lane.b32.xlu0 %v601, 127
        %v606 = vpop.permute.xlu0 %605
        %607 = vrot.lane.b32.xlu0 %v602, 127
        %v608 = vpop.permute.xlu0 %607
        %611 = vrot.lane.b32.xlu0 %v601, 15
        %v612 = vpop.permute.xlu0 %611
        %613 = vrot.lane.b32.xlu0 %v602, 15
        %v614 = vpop.permute.xlu0 %613
        %v617 = vsel %vm232, %v606, %v612
        %v618 = vsel %vm232, %v608, %v614
        %v619 = vrot.slane %v601, 1
        %v620 = vrot.slane %v602, 1
        %v621 = vsel %vm235, %v619, %v620
        %v625 = vsel %vm235, %v620, %v619
        %v628 = vrot.slane %v617, 1
        %v629 = vrot.slane %v618, 1
        %v630 = vsel %vm235, %v628, %v629
        %v634 = vsel %vm235, %v629, %v628
        %s635 = sld [smem:[#allocation7 + $0x4]]
        %s636 = sld [smem:[#allocation6 + $0x10]]
        %v637 = vstv %s636
        %v638 = vmul.f32 %v601, %v637
        %v639 = vmul.f32 %v602, %v637
        %v640 = vstv %s635
        %v641 = vadd.f32 %v640, %v638
        %v642 = vadd.f32 %v640, %v639
        %s643 = sld [smem:[#allocation6 + $0x11]]
        %v644 = vstv %s643
        %v645 = vmul.f32 %v617, %v644
        %v646 = vmul.f32 %v618, %v644
        %v647 = vadd.f32 %v641, %v645
        %v648 = vadd.f32 %v642, %v646
        %s649 = sld [smem:[#allocation6 + $0x12]]
        %v650 = vstv %s649
        %v651 = vmul.f32 %v621, %v650
        %v652 = vmul.f32 %v625, %v650
        %v653 = vadd.f32 %v647, %v651
        %v654 = vadd.f32 %v648, %v652
        %s655 = sld [smem:[#allocation6 + $0x13]]
        %v656 = vstv %s655
        %v657 = vmul.f32 %v630, %v656
        %v658 = vmul.f32 %v634, %v656
        %v659 = vadd.f32 %v653, %v657
        %v660 = vadd.f32 %v654, %v658
        %v661 = vmul.f32 %v659, 0.5
        %v662 = vmul.f32 %v660, 0.5
        %v663 = vmul.f32 %v659, 0.70710677
        %v664 = vmul.f32 %v660, 0.70710677
        %v665 = vand.u32 2147483647, %v663
        %v666 = vand.u32 2147483647, %v664
        %v667 = vmul.f32 %v665, 0.3275911
        %v668 = vmul.f32 %v666, 0.3275911
        %v669 = vadd.f32 %v667, 1.0
        %v670 = vadd.f32 %v668, 1.0
        %v671 = vrcp.pop %v669
        %v672 = vrcp.pop %v670
        %v673 = vmul.f32 %v669, %v671
        %v674 = vmul.f32 %v670, %v672
        %v675 = vsub.f32 2.0, %v673
        %v676 = vsub.f32 2.0, %v674
        %v677 = vmul.f32 %v671, %v675
        %v678 = vmul.f32 %v672, %v676
        %v679 = vmul.f32 %v677, 1.0614054
        %v680 = vmul.f32 %v678, 1.0614054
        %v681 = vadd.f32 %v679, -1.4531521
        %v682 = vadd.f32 %v680, -1.4531521
        %v683 = vmul.f32 %v681, %v677
        %v684 = vmul.f32 %v682, %v678
        %v685 = vadd.f32 %v683, 1.4214138
        %v686 = vadd.f32 %v684, 1.4214138
        %v687 = vmul.f32 %v685, %v677
        %v688 = vmul.f32 %v686, %v678
        %v689 = vadd.f32 %v687, -0.28449672
        %v690 = vadd.f32 %v688, -0.28449672
        %v691 = vmul.f32 %v689, %v677
        %v692 = vmul.f32 %v690, %v678
        %v693 = vadd.f32 %v691, 0.2548296
        %v694 = vadd.f32 %v692, 0.2548296
        %v695 = vmul.f32 %v693, %v677
        %v696 = vmul.f32 %v694, %v678
        %v697 = vsub.f32 0.0, %v663
        %v698 = vsub.f32 0.0, %v664
        %v699 = vmul.f32 %v697, %v663
        %v700 = vmul.f32 %v698, %v664
        %v701 = vmul.f32 %v699, 1.442695
        %v702 = vpow.pop %v701
        %v703 = vmul.f32 %v700, 1.442695
        %v704 = vpow.pop %v703
        %v705 = vmul.f32 %v695, %v702
        %v706 = vmul.f32 %v696, %v704
        %v707 = vsub.f32 1.0, %v705
        %v708 = vsub.f32 1.0, %v706
        %vm709 = vcmp.ge.f32.partialorder %v663, 0.0
        %vm710 = vcmp.ge.f32.partialorder %v664, 0.0
        %v711 = vsub.f32 0.0, %v707
        %v712 = vsub.f32 0.0, %v708
        %v713 = vsel %vm709, %v707, %v711
        %v714 = vsel %vm710, %v708, %v712
        %v715 = vadd.f32 %v713, 1.0
        %v716 = vadd.f32 %v714, 1.0
        %v717 = vmul.f32 %v661, %v715
        %v718 = vmul.f32 %v662, %v716
        %s719 = scalar_lea.vmem %s215, 64 [#allocation9]
        %720 = vst.msk [vmem:[%s719] sm:$0xff] %vm336, %v717
        %721 = vst.msk [vmem:[%s719 + $0x8] sm:$0xff] %vm336, %v718
        %s722 = sld [smem:[#allocation7 + $0x5]]
        %s723 = sld [smem:[#allocation6 + $0x14]]
        %v724 = vstv %s723
        %v725 = vmul.f32 %v601, %v724
        %v726 = vmul.f32 %v602, %v724
        %v727 = vstv %s722
        %v728 = vadd.f32 %v727, %v725
        %v729 = vadd.f32 %v727, %v726
        %s730 = sld [smem:[#allocation6 + $0x15]]
        %v731 = vstv %s730
        %v732 = vmul.f32 %v617, %v731
        %v733 = vmul.f32 %v618, %v731
        %v734 = vadd.f32 %v728, %v732
        %v735 = vadd.f32 %v729, %v733
        %s736 = sld [smem:[#allocation6 + $0x16]]
        %v737 = vstv %s736
        %v738 = vmul.f32 %v621, %v737
        %v739 = vmul.f32 %v625, %v737
        %v740 = vadd.f32 %v734, %v738
        %v741 = vadd.f32 %v735, %v739
        %s742 = sld [smem:[#allocation6 + $0x17]]
        %v743 = vstv %s742
        %v744 = vmul.f32 %v630, %v743
        %v745 = vmul.f32 %v634, %v743
        %v746 = vadd.f32 %v740, %v744
        %v747 = vadd.f32 %v741, %v745
        %v748 = vmul.f32 %v746, 0.5
        %v749 = vmul.f32 %v747, 0.5
        %v750 = vmul.f32 %v746, 0.70710677
        %v751 = vmul.f32 %v747, 0.70710677
        %v752 = vand.u32 2147483647, %v750
        %v753 = vand.u32 2147483647, %v751
        %v754 = vmul.f32 %v752, 0.3275911
        %v755 = vmul.f32 %v753, 0.3275911
        %v756 = vadd.f32 %v754, 1.0
        %v757 = vadd.f32 %v755, 1.0
        %v758 = vrcp.pop %v756
        %v759 = vrcp.pop %v757
        %v760 = vmul.f32 %v756, %v758
        %v761 = vmul.f32 %v757, %v759
        %v762 = vsub.f32 2.0, %v760
        %v763 = vsub.f32 2.0, %v761
        %v764 = vmul.f32 %v758, %v762
        %v765 = vmul.f32 %v759, %v763
        %v766 = vmul.f32 %v764, 1.0614054
        %v767 = vmul.f32 %v765, 1.0614054
        %v768 = vadd.f32 %v766, -1.4531521
        %v769 = vadd.f32 %v767, -1.4531521
        %v770 = vmul.f32 %v768, %v764
        %v771 = vmul.f32 %v769, %v765
        %v772 = vadd.f32 %v770, 1.4214138
        %v773 = vadd.f32 %v771, 1.4214138
        %v774 = vmul.f32 %v772, %v764
        %v775 = vmul.f32 %v773, %v765
        %v776 = vadd.f32 %v774, -0.28449672
        %v777 = vadd.f32 %v775, -0.28449672
        %v778 = vmul.f32 %v776, %v764
        %v779 = vmul.f32 %v777, %v765
        %v780 = vadd.f32 %v778, 0.2548296
        %v781 = vadd.f32 %v779, 0.2548296
        %v782 = vmul.f32 %v780, %v764
        %v783 = vmul.f32 %v781, %v765
        %v784 = vsub.f32 0.0, %v750
        %v785 = vsub.f32 0.0, %v751
        %v786 = vmul.f32 %v784, %v750
        %v787 = vmul.f32 %v785, %v751
        %v788 = vmul.f32 %v786, 1.442695
        %v789 = vpow.pop %v788
        %v790 = vmul.f32 %v787, 1.442695
        %v791 = vpow.pop %v790
        %v792 = vmul.f32 %v782, %v789
        %v793 = vmul.f32 %v783, %v791
        %v794 = vsub.f32 1.0, %v792
        %v795 = vsub.f32 1.0, %v793
        %vm796 = vcmp.ge.f32.partialorder %v750, 0.0
        %vm797 = vcmp.ge.f32.partialorder %v751, 0.0
        %v798 = vsub.f32 0.0, %v794
        %v799 = vsub.f32 0.0, %v795
        %v800 = vsel %vm796, %v794, %v798
        %v801 = vsel %vm797, %v795, %v799
        %v802 = vadd.f32 %v800, 1.0
        %v803 = vadd.f32 %v801, 1.0
        %v804 = vmul.f32 %v748, %v802
        %v805 = vmul.f32 %v749, %v803
        %s806 = scalar_lea.vmem %s215, 80 [#allocation9]
        %807 = vst.msk [vmem:[%s806] sm:$0xff] %vm336, %v804
        %808 = vst.msk [vmem:[%s806 + $0x8] sm:$0xff] %vm336, %v805
        %s809 = sld [smem:[#allocation7 + $0x6]]
        %s810 = sld [smem:[#allocation6 + $0x18]]
        %v811 = vstv %s810
        %v812 = vmul.f32 %v601, %v811
        %v813 = vmul.f32 %v602, %v811
        %v814 = vstv %s809
        %v815 = vadd.f32 %v814, %v812
        %v816 = vadd.f32 %v814, %v813
        %s817 = sld [smem:[#allocation6 + $0x19]]
        %v818 = vstv %s817
        %v819 = vmul.f32 %v617, %v818
        %v820 = vmul.f32 %v618, %v818
        %v821 = vadd.f32 %v815, %v819
        %v822 = vadd.f32 %v816, %v820
        %s823 = sld [smem:[#allocation6 + $0x1a]]
        %v824 = vstv %s823
        %v825 = vmul.f32 %v621, %v824
        %v826 = vmul.f32 %v625, %v824
        %v827 = vadd.f32 %v821, %v825
        %v828 = vadd.f32 %v822, %v826
        %s829 = sld [smem:[#allocation6 + $0x1b]]
        %v830 = vstv %s829
        %v831 = vmul.f32 %v630, %v830
        %v832 = vmul.f32 %v634, %v830
        %v833 = vadd.f32 %v827, %v831
        %v834 = vadd.f32 %v828, %v832
        %v835 = vmul.f32 %v833, 0.5
        %v836 = vmul.f32 %v834, 0.5
        %v837 = vmul.f32 %v833, 0.70710677
        %v838 = vmul.f32 %v834, 0.70710677
        %v839 = vand.u32 2147483647, %v837
        %v840 = vand.u32 2147483647, %v838
        %v841 = vmul.f32 %v839, 0.3275911
        %v842 = vmul.f32 %v840, 0.3275911
        %v843 = vadd.f32 %v841, 1.0
        %v844 = vadd.f32 %v842, 1.0
        %v845 = vrcp.pop %v843
        %v846 = vrcp.pop %v844
        %v847 = vmul.f32 %v843, %v845
        %v848 = vmul.f32 %v844, %v846
        %v849 = vsub.f32 2.0, %v847
        %v850 = vsub.f32 2.0, %v848
        %v851 = vmul.f32 %v845, %v849
        %v852 = vmul.f32 %v846, %v850
        %v853 = vmul.f32 %v851, 1.0614054
        %v854 = vmul.f32 %v852, 1.0614054
        %v855 = vadd.f32 %v853, -1.4531521
        %v856 = vadd.f32 %v854, -1.4531521
        %v857 = vmul.f32 %v855, %v851
        %v858 = vmul.f32 %v856, %v852
        %v859 = vadd.f32 %v857, 1.4214138
        %v860 = vadd.f32 %v858, 1.4214138
        %v861 = vmul.f32 %v859, %v851
        %v862 = vmul.f32 %v860, %v852
        %v863 = vadd.f32 %v861, -0.28449672
        %v864 = vadd.f32 %v862, -0.28449672
        %v865 = vmul.f32 %v863, %v851
        %v866 = vmul.f32 %v864, %v852
        %v867 = vadd.f32 %v865, 0.2548296
        %v868 = vadd.f32 %v866, 0.2548296
        %v869 = vmul.f32 %v867, %v851
        %v870 = vmul.f32 %v868, %v852
        %v871 = vsub.f32 0.0, %v837
        %v872 = vsub.f32 0.0, %v838
        %v873 = vmul.f32 %v871, %v837
        %v874 = vmul.f32 %v872, %v838
        %v875 = vmul.f32 %v873, 1.442695
        %v876 = vpow.pop %v875
        %v877 = vmul.f32 %v874, 1.442695
        %v878 = vpow.pop %v877
        %v879 = vmul.f32 %v869, %v876
        %v880 = vmul.f32 %v870, %v878
        %v881 = vsub.f32 1.0, %v879
        %v882 = vsub.f32 1.0, %v880
        %vm883 = vcmp.ge.f32.partialorder %v837, 0.0
        %vm884 = vcmp.ge.f32.partialorder %v838, 0.0
        %v885 = vsub.f32 0.0, %v881
        %v886 = vsub.f32 0.0, %v882
        %v887 = vsel %vm883, %v881, %v885
        %v888 = vsel %vm884, %v882, %v886
        %v889 = vadd.f32 %v887, 1.0
        %v890 = vadd.f32 %v888, 1.0
        %v891 = vmul.f32 %v835, %v889
        %v892 = vmul.f32 %v836, %v890
        %s893 = scalar_lea.vmem %s215, 96 [#allocation9]
        %894 = vst.msk [vmem:[%s893] sm:$0xff] %vm336, %v891
        %895 = vst.msk [vmem:[%s893 + $0x8] sm:$0xff] %vm336, %v892
        %s896 = sld [smem:[#allocation7 + $0x7]]
        %s897 = sld [smem:[#allocation6 + $0x1c]]
        %v898 = vstv %s897
        %v899 = vmul.f32 %v601, %v898
        %v900 = vmul.f32 %v602, %v898
        %v901 = vstv %s896
        %v902 = vadd.f32 %v901, %v899
        %v903 = vadd.f32 %v901, %v900
        %s904 = sld [smem:[#allocation6 + $0x1d]]
        %v905 = vstv %s904
        %v906 = vmul.f32 %v617, %v905
        %v907 = vmul.f32 %v618, %v905
        %v908 = vadd.f32 %v902, %v906
        %v909 = vadd.f32 %v903, %v907
        %s910 = sld [smem:[#allocation6 + $0x1e]]
        %v911 = vstv %s910
        %v912 = vmul.f32 %v621, %v911
        %v913 = vmul.f32 %v625, %v911
        %v914 = vadd.f32 %v908, %v912
        %v915 = vadd.f32 %v909, %v913
        %s916 = sld [smem:[#allocation6 + $0x1f]]
        %v917 = vstv %s916
        %v918 = vmul.f32 %v630, %v917
        %v919 = vmul.f32 %v634, %v917
        %v920 = vadd.f32 %v914, %v918
        %v921 = vadd.f32 %v915, %v919
        %v922 = vmul.f32 %v920, 0.5
        %v923 = vmul.f32 %v921, 0.5
        %v924 = vmul.f32 %v920, 0.70710677
        %v925 = vmul.f32 %v921, 0.70710677
        %v926 = vand.u32 2147483647, %v924
        %v927 = vand.u32 2147483647, %v925
        %v928 = vmul.f32 %v926, 0.3275911
        %v929 = vmul.f32 %v927, 0.3275911
        %v930 = vadd.f32 %v928, 1.0
        %v931 = vadd.f32 %v929, 1.0
        %v932 = vrcp.pop %v930
        %v933 = vrcp.pop %v931
        %v934 = vmul.f32 %v930, %v932
        %v935 = vmul.f32 %v931, %v933
        %v936 = vsub.f32 2.0, %v934
        %v937 = vsub.f32 2.0, %v935
        %v938 = vmul.f32 %v932, %v936
        %v939 = vmul.f32 %v933, %v937
        %v940 = vmul.f32 %v938, 1.0614054
        %v941 = vmul.f32 %v939, 1.0614054
        %v942 = vadd.f32 %v940, -1.4531521
        %v943 = vadd.f32 %v941, -1.4531521
        %v944 = vmul.f32 %v942, %v938
        %v945 = vmul.f32 %v943, %v939
        %v946 = vadd.f32 %v944, 1.4214138
        %v947 = vadd.f32 %v945, 1.4214138
        %v948 = vmul.f32 %v946, %v938
        %v949 = vmul.f32 %v947, %v939
        %v950 = vadd.f32 %v948, -0.28449672
        %v951 = vadd.f32 %v949, -0.28449672
        %v952 = vmul.f32 %v950, %v938
        %v953 = vmul.f32 %v951, %v939
        %v954 = vadd.f32 %v952, 0.2548296
        %v955 = vadd.f32 %v953, 0.2548296
        %v956 = vmul.f32 %v954, %v938
        %v957 = vmul.f32 %v955, %v939
        %v958 = vsub.f32 0.0, %v924
        %v959 = vsub.f32 0.0, %v925
        %v960 = vmul.f32 %v958, %v924
        %v961 = vmul.f32 %v959, %v925
        %v962 = vmul.f32 %v960, 1.442695
        %v963 = vpow.pop %v962
        %v964 = vmul.f32 %v961, 1.442695
        %v965 = vpow.pop %v964
        %v966 = vmul.f32 %v956, %v963
        %v967 = vmul.f32 %v957, %v965
        %v968 = vsub.f32 1.0, %v966
        %v969 = vsub.f32 1.0, %v967
        %vm970 = vcmp.ge.f32.partialorder %v924, 0.0
        %vm971 = vcmp.ge.f32.partialorder %v925, 0.0
        %v972 = vsub.f32 0.0, %v968
        %v973 = vsub.f32 0.0, %v969
        %v974 = vsel %vm970, %v968, %v972
        %v975 = vsel %vm971, %v969, %v973
        %v976 = vadd.f32 %v974, 1.0
        %v977 = vadd.f32 %v975, 1.0
        %v978 = vmul.f32 %v922, %v976
        %v979 = vmul.f32 %v923, %v977
        %s980 = scalar_lea.vmem %s215, 112 [#allocation9]
        %981 = vst.msk [vmem:[%s980] sm:$0xff] %vm336, %v978
        %982 = vst.msk [vmem:[%s980 + $0x8] sm:$0xff] %vm336, %v979
        %s983 = scalar_lea.vmem %s184, 32 [#allocation2]
        %v984 = vld [vmem:[%s983] sm:$0xff]
        %v985 = vld [vmem:[%s983 + $0x8] sm:$0xff]
        %988 = vrot.lane.b32.xlu0 %v984, 127
        %v989 = vpop.permute.xlu0 %988
        %990 = vrot.lane.b32.xlu0 %v985, 127
        %v991 = vpop.permute.xlu0 %990
        %994 = vrot.lane.b32.xlu0 %v984, 15
        %v995 = vpop.permute.xlu0 %994
        %996 = vrot.lane.b32.xlu0 %v985, 15
        %v997 = vpop.permute.xlu0 %996
        %v1000 = vsel %vm232, %v989, %v995
        %v1001 = vsel %vm232, %v991, %v997
        %v1002 = vrot.slane %v984, 1
        %v1003 = vrot.slane %v985, 1
        %v1004 = vsel %vm235, %v1002, %v1003
        %v1008 = vsel %vm235, %v1003, %v1002
        %v1011 = vrot.slane %v1000, 1
        %v1012 = vrot.slane %v1001, 1
        %v1013 = vsel %vm235, %v1011, %v1012
        %v1017 = vsel %vm235, %v1012, %v1011
        %s1018 = sld [smem:[#allocation7 + $0x8]]
        %s1019 = sld [smem:[#allocation6 + $0x20]]
        %v1020 = vstv %s1019
        %v1021 = vmul.f32 %v984, %v1020
        %v1022 = vmul.f32 %v985, %v1020
        %v1023 = vstv %s1018
        %v1024 = vadd.f32 %v1023, %v1021
        %v1025 = vadd.f32 %v1023, %v1022
        %s1026 = sld [smem:[#allocation6 + $0x21]]
        %v1027 = vstv %s1026
        %v1028 = vmul.f32 %v1000, %v1027
        %v1029 = vmul.f32 %v1001, %v1027
        %v1030 = vadd.f32 %v1024, %v1028
        %v1031 = vadd.f32 %v1025, %v1029
        %s1032 = sld [smem:[#allocation6 + $0x22]]
        %v1033 = vstv %s1032
        %v1034 = vmul.f32 %v1004, %v1033
        %v1035 = vmul.f32 %v1008, %v1033
        %v1036 = vadd.f32 %v1030, %v1034
        %v1037 = vadd.f32 %v1031, %v1035
        %s1038 = sld [smem:[#allocation6 + $0x23]]
        %v1039 = vstv %s1038
        %v1040 = vmul.f32 %v1013, %v1039
        %v1041 = vmul.f32 %v1017, %v1039
        %v1042 = vadd.f32 %v1036, %v1040
        %v1043 = vadd.f32 %v1037, %v1041
        %v1044 = vmul.f32 %v1042, 0.5
        %v1045 = vmul.f32 %v1043, 0.5
        %v1046 = vmul.f32 %v1042, 0.70710677
        %v1047 = vmul.f32 %v1043, 0.70710677
        %v1048 = vand.u32 2147483647, %v1046
        %v1049 = vand.u32 2147483647, %v1047
        %v1050 = vmul.f32 %v1048, 0.3275911
        %v1051 = vmul.f32 %v1049, 0.3275911
        %v1052 = vadd.f32 %v1050, 1.0
        %v1053 = vadd.f32 %v1051, 1.0
        %v1054 = vrcp.pop %v1052
        %v1055 = vrcp.pop %v1053
        %v1056 = vmul.f32 %v1052, %v1054
        %v1057 = vmul.f32 %v1053, %v1055
        %v1058 = vsub.f32 2.0, %v1056
        %v1059 = vsub.f32 2.0, %v1057
        %v1060 = vmul.f32 %v1054, %v1058
        %v1061 = vmul.f32 %v1055, %v1059
        %v1062 = vmul.f32 %v1060, 1.0614054
        %v1063 = vmul.f32 %v1061, 1.0614054
        %v1064 = vadd.f32 %v1062, -1.4531521
        %v1065 = vadd.f32 %v1063, -1.4531521
        %v1066 = vmul.f32 %v1064, %v1060
        %v1067 = vmul.f32 %v1065, %v1061
        %v1068 = vadd.f32 %v1066, 1.4214138
        %v1069 = vadd.f32 %v1067, 1.4214138
        %v1070 = vmul.f32 %v1068, %v1060
        %v1071 = vmul.f32 %v1069, %v1061
        %v1072 = vadd.f32 %v1070, -0.28449672
        %v1073 = vadd.f32 %v1071, -0.28449672
        %v1074 = vmul.f32 %v1072, %v1060
        %v1075 = vmul.f32 %v1073, %v1061
        %v1076 = vadd.f32 %v1074, 0.2548296
        %v1077 = vadd.f32 %v1075, 0.2548296
        %v1078 = vmul.f32 %v1076, %v1060
        %v1079 = vmul.f32 %v1077, %v1061
        %v1080 = vsub.f32 0.0, %v1046
        %v1081 = vsub.f32 0.0, %v1047
        %v1082 = vmul.f32 %v1080, %v1046
        %v1083 = vmul.f32 %v1081, %v1047
        %v1084 = vmul.f32 %v1082, 1.442695
        %v1085 = vpow.pop %v1084
        %v1086 = vmul.f32 %v1083, 1.442695
        %v1087 = vpow.pop %v1086
        %v1088 = vmul.f32 %v1078, %v1085
        %v1089 = vmul.f32 %v1079, %v1087
        %v1090 = vsub.f32 1.0, %v1088
        %v1091 = vsub.f32 1.0, %v1089
        %vm1092 = vcmp.ge.f32.partialorder %v1046, 0.0
        %vm1093 = vcmp.ge.f32.partialorder %v1047, 0.0
        %v1094 = vsub.f32 0.0, %v1090
        %v1095 = vsub.f32 0.0, %v1091
        %v1096 = vsel %vm1092, %v1090, %v1094
        %v1097 = vsel %vm1093, %v1091, %v1095
        %v1098 = vadd.f32 %v1096, 1.0
        %v1099 = vadd.f32 %v1097, 1.0
        %v1100 = vmul.f32 %v1044, %v1098
        %v1101 = vmul.f32 %v1045, %v1099
        %s1102 = scalar_lea.vmem %s215, 128 [#allocation9]
        %1103 = vst.msk [vmem:[%s1102] sm:$0xff] %vm336, %v1100
        %1104 = vst.msk [vmem:[%s1102 + $0x8] sm:$0xff] %vm336, %v1101
        %s1105 = sld [smem:[#allocation7 + $0x9]]
        %s1106 = sld [smem:[#allocation6 + $0x24]]
        %v1107 = vstv %s1106
        %v1108 = vmul.f32 %v984, %v1107
        %v1109 = vmul.f32 %v985, %v1107
        %v1110 = vstv %s1105
        %v1111 = vadd.f32 %v1110, %v1108
        %v1112 = vadd.f32 %v1110, %v1109
        %s1113 = sld [smem:[#allocation6 + $0x25]]
        %v1114 = vstv %s1113
        %v1115 = vmul.f32 %v1000, %v1114
        %v1116 = vmul.f32 %v1001, %v1114
        %v1117 = vadd.f32 %v1111, %v1115
        %v1118 = vadd.f32 %v1112, %v1116
        %s1119 = sld [smem:[#allocation6 + $0x26]]
        %v1120 = vstv %s1119
        %v1121 = vmul.f32 %v1004, %v1120
        %v1122 = vmul.f32 %v1008, %v1120
        %v1123 = vadd.f32 %v1117, %v1121
        %v1124 = vadd.f32 %v1118, %v1122
        %s1125 = sld [smem:[#allocation6 + $0x27]]
        %v1126 = vstv %s1125
        %v1127 = vmul.f32 %v1013, %v1126
        %v1128 = vmul.f32 %v1017, %v1126
        %v1129 = vadd.f32 %v1123, %v1127
        %v1130 = vadd.f32 %v1124, %v1128
        %v1131 = vmul.f32 %v1129, 0.5
        %v1132 = vmul.f32 %v1130, 0.5
        %v1133 = vmul.f32 %v1129, 0.70710677
        %v1134 = vmul.f32 %v1130, 0.70710677
        %v1135 = vand.u32 2147483647, %v1133
        %v1136 = vand.u32 2147483647, %v1134
        %v1137 = vmul.f32 %v1135, 0.3275911
        %v1138 = vmul.f32 %v1136, 0.3275911
        %v1139 = vadd.f32 %v1137, 1.0
        %v1140 = vadd.f32 %v1138, 1.0
        %v1141 = vrcp.pop %v1139
        %v1142 = vrcp.pop %v1140
        %v1143 = vmul.f32 %v1139, %v1141
        %v1144 = vmul.f32 %v1140, %v1142
        %v1145 = vsub.f32 2.0, %v1143
        %v1146 = vsub.f32 2.0, %v1144
        %v1147 = vmul.f32 %v1141, %v1145
        %v1148 = vmul.f32 %v1142, %v1146
        %v1149 = vmul.f32 %v1147, 1.0614054
        %v1150 = vmul.f32 %v1148, 1.0614054
        %v1151 = vadd.f32 %v1149, -1.4531521
        %v1152 = vadd.f32 %v1150, -1.4531521
        %v1153 = vmul.f32 %v1151, %v1147
        %v1154 = vmul.f32 %v1152, %v1148
        %v1155 = vadd.f32 %v1153, 1.4214138
        %v1156 = vadd.f32 %v1154, 1.4214138
        %v1157 = vmul.f32 %v1155, %v1147
        %v1158 = vmul.f32 %v1156, %v1148
        %v1159 = vadd.f32 %v1157, -0.28449672
        %v1160 = vadd.f32 %v1158, -0.28449672
        %v1161 = vmul.f32 %v1159, %v1147
        %v1162 = vmul.f32 %v1160, %v1148
        %v1163 = vadd.f32 %v1161, 0.2548296
        %v1164 = vadd.f32 %v1162, 0.2548296
        %v1165 = vmul.f32 %v1163, %v1147
        %v1166 = vmul.f32 %v1164, %v1148
        %v1167 = vsub.f32 0.0, %v1133
        %v1168 = vsub.f32 0.0, %v1134
        %v1169 = vmul.f32 %v1167, %v1133
        %v1170 = vmul.f32 %v1168, %v1134
        %v1171 = vmul.f32 %v1169, 1.442695
        %v1172 = vpow.pop %v1171
        %v1173 = vmul.f32 %v1170, 1.442695
        %v1174 = vpow.pop %v1173
        %v1175 = vmul.f32 %v1165, %v1172
        %v1176 = vmul.f32 %v1166, %v1174
        %v1177 = vsub.f32 1.0, %v1175
        %v1178 = vsub.f32 1.0, %v1176
        %vm1179 = vcmp.ge.f32.partialorder %v1133, 0.0
        %vm1180 = vcmp.ge.f32.partialorder %v1134, 0.0
        %v1181 = vsub.f32 0.0, %v1177
        %v1182 = vsub.f32 0.0, %v1178
        %v1183 = vsel %vm1179, %v1177, %v1181
        %v1184 = vsel %vm1180, %v1178, %v1182
        %v1185 = vadd.f32 %v1183, 1.0
        %v1186 = vadd.f32 %v1184, 1.0
        %v1187 = vmul.f32 %v1131, %v1185
        %v1188 = vmul.f32 %v1132, %v1186
        %s1189 = scalar_lea.vmem %s215, 144 [#allocation9]
        %1190 = vst.msk [vmem:[%s1189] sm:$0xff] %vm336, %v1187
        %1191 = vst.msk [vmem:[%s1189 + $0x8] sm:$0xff] %vm336, %v1188
        %s1192 = sld [smem:[#allocation7 + $0xa]]
        %s1193 = sld [smem:[#allocation6 + $0x28]]
        %v1194 = vstv %s1193
        %v1195 = vmul.f32 %v984, %v1194
        %v1196 = vmul.f32 %v985, %v1194
        %v1197 = vstv %s1192
        %v1198 = vadd.f32 %v1197, %v1195
        %v1199 = vadd.f32 %v1197, %v1196
        %s1200 = sld [smem:[#allocation6 + $0x29]]
        %v1201 = vstv %s1200
        %v1202 = vmul.f32 %v1000, %v1201
        %v1203 = vmul.f32 %v1001, %v1201
        %v1204 = vadd.f32 %v1198, %v1202
        %v1205 = vadd.f32 %v1199, %v1203
        %s1206 = sld [smem:[#allocation6 + $0x2a]]
        %v1207 = vstv %s1206
        %v1208 = vmul.f32 %v1004, %v1207
        %v1209 = vmul.f32 %v1008, %v1207
        %v1210 = vadd.f32 %v1204, %v1208
        %v1211 = vadd.f32 %v1205, %v1209
        %s1212 = sld [smem:[#allocation6 + $0x2b]]
        %v1213 = vstv %s1212
        %v1214 = vmul.f32 %v1013, %v1213
        %v1215 = vmul.f32 %v1017, %v1213
        %v1216 = vadd.f32 %v1210, %v1214
        %v1217 = vadd.f32 %v1211, %v1215
        %v1218 = vmul.f32 %v1216, 0.5
        %v1219 = vmul.f32 %v1217, 0.5
        %v1220 = vmul.f32 %v1216, 0.70710677
        %v1221 = vmul.f32 %v1217, 0.70710677
        %v1222 = vand.u32 2147483647, %v1220
        %v1223 = vand.u32 2147483647, %v1221
        %v1224 = vmul.f32 %v1222, 0.3275911
        %v1225 = vmul.f32 %v1223, 0.3275911
        %v1226 = vadd.f32 %v1224, 1.0
        %v1227 = vadd.f32 %v1225, 1.0
        %v1228 = vrcp.pop %v1226
        %v1229 = vrcp.pop %v1227
        %v1230 = vmul.f32 %v1226, %v1228
        %v1231 = vmul.f32 %v1227, %v1229
        %v1232 = vsub.f32 2.0, %v1230
        %v1233 = vsub.f32 2.0, %v1231
        %v1234 = vmul.f32 %v1228, %v1232
        %v1235 = vmul.f32 %v1229, %v1233
        %v1236 = vmul.f32 %v1234, 1.0614054
        %v1237 = vmul.f32 %v1235, 1.0614054
        %v1238 = vadd.f32 %v1236, -1.4531521
        %v1239 = vadd.f32 %v1237, -1.4531521
        %v1240 = vmul.f32 %v1238, %v1234
        %v1241 = vmul.f32 %v1239, %v1235
        %v1242 = vadd.f32 %v1240, 1.4214138
        %v1243 = vadd.f32 %v1241, 1.4214138
        %v1244 = vmul.f32 %v1242, %v1234
        %v1245 = vmul.f32 %v1243, %v1235
        %v1246 = vadd.f32 %v1244, -0.28449672
        %v1247 = vadd.f32 %v1245, -0.28449672
        %v1248 = vmul.f32 %v1246, %v1234
        %v1249 = vmul.f32 %v1247, %v1235
        %v1250 = vadd.f32 %v1248, 0.2548296
        %v1251 = vadd.f32 %v1249, 0.2548296
        %v1252 = vmul.f32 %v1250, %v1234
        %v1253 = vmul.f32 %v1251, %v1235
        %v1254 = vsub.f32 0.0, %v1220
        %v1255 = vsub.f32 0.0, %v1221
        %v1256 = vmul.f32 %v1254, %v1220
        %v1257 = vmul.f32 %v1255, %v1221
        %v1258 = vmul.f32 %v1256, 1.442695
        %v1259 = vpow.pop %v1258
        %v1260 = vmul.f32 %v1257, 1.442695
        %v1261 = vpow.pop %v1260
        %v1262 = vmul.f32 %v1252, %v1259
        %v1263 = vmul.f32 %v1253, %v1261
        %v1264 = vsub.f32 1.0, %v1262
        %v1265 = vsub.f32 1.0, %v1263
        %vm1266 = vcmp.ge.f32.partialorder %v1220, 0.0
        %vm1267 = vcmp.ge.f32.partialorder %v1221, 0.0
        %v1268 = vsub.f32 0.0, %v1264
        %v1269 = vsub.f32 0.0, %v1265
        %v1270 = vsel %vm1266, %v1264, %v1268
        %v1271 = vsel %vm1267, %v1265, %v1269
        %v1272 = vadd.f32 %v1270, 1.0
        %v1273 = vadd.f32 %v1271, 1.0
        %v1274 = vmul.f32 %v1218, %v1272
        %v1275 = vmul.f32 %v1219, %v1273
        %s1276 = scalar_lea.vmem %s215, 160 [#allocation9]
        %1277 = vst.msk [vmem:[%s1276] sm:$0xff] %vm336, %v1274
        %1278 = vst.msk [vmem:[%s1276 + $0x8] sm:$0xff] %vm336, %v1275
        %s1279 = sld [smem:[#allocation7 + $0xb]]
        %s1280 = sld [smem:[#allocation6 + $0x2c]]
        %v1281 = vstv %s1280
        %v1282 = vmul.f32 %v984, %v1281
        %v1283 = vmul.f32 %v985, %v1281
        %v1284 = vstv %s1279
        %v1285 = vadd.f32 %v1284, %v1282
        %v1286 = vadd.f32 %v1284, %v1283
        %s1287 = sld [smem:[#allocation6 + $0x2d]]
        %v1288 = vstv %s1287
        %v1289 = vmul.f32 %v1000, %v1288
        %v1290 = vmul.f32 %v1001, %v1288
        %v1291 = vadd.f32 %v1285, %v1289
        %v1292 = vadd.f32 %v1286, %v1290
        %s1293 = sld [smem:[#allocation6 + $0x2e]]
        %v1294 = vstv %s1293
        %v1295 = vmul.f32 %v1004, %v1294
        %v1296 = vmul.f32 %v1008, %v1294
        %v1297 = vadd.f32 %v1291, %v1295
        %v1298 = vadd.f32 %v1292, %v1296
        %s1299 = sld [smem:[#allocation6 + $0x2f]]
        %v1300 = vstv %s1299
        %v1301 = vmul.f32 %v1013, %v1300
        %v1302 = vmul.f32 %v1017, %v1300
        %v1303 = vadd.f32 %v1297, %v1301
        %v1304 = vadd.f32 %v1298, %v1302
        %v1305 = vmul.f32 %v1303, 0.5
        %v1306 = vmul.f32 %v1304, 0.5
        %v1307 = vmul.f32 %v1303, 0.70710677
        %v1308 = vmul.f32 %v1304, 0.70710677
        %v1309 = vand.u32 2147483647, %v1307
        %v1310 = vand.u32 2147483647, %v1308
        %v1311 = vmul.f32 %v1309, 0.3275911
        %v1312 = vmul.f32 %v1310, 0.3275911
        %v1313 = vadd.f32 %v1311, 1.0
        %v1314 = vadd.f32 %v1312, 1.0
        %v1315 = vrcp.pop %v1313
        %v1316 = vrcp.pop %v1314
        %v1317 = vmul.f32 %v1313, %v1315
        %v1318 = vmul.f32 %v1314, %v1316
        %v1319 = vsub.f32 2.0, %v1317
        %v1320 = vsub.f32 2.0, %v1318
        %v1321 = vmul.f32 %v1315, %v1319
        %v1322 = vmul.f32 %v1316, %v1320
        %v1323 = vmul.f32 %v1321, 1.0614054
        %v1324 = vmul.f32 %v1322, 1.0614054
        %v1325 = vadd.f32 %v1323, -1.4531521
        %v1326 = vadd.f32 %v1324, -1.4531521
        %v1327 = vmul.f32 %v1325, %v1321
        %v1328 = vmul.f32 %v1326, %v1322
        %v1329 = vadd.f32 %v1327, 1.4214138
        %v1330 = vadd.f32 %v1328, 1.4214138
        %v1331 = vmul.f32 %v1329, %v1321
        %v1332 = vmul.f32 %v1330, %v1322
        %v1333 = vadd.f32 %v1331, -0.28449672
        %v1334 = vadd.f32 %v1332, -0.28449672
        %v1335 = vmul.f32 %v1333, %v1321
        %v1336 = vmul.f32 %v1334, %v1322
        %v1337 = vadd.f32 %v1335, 0.2548296
        %v1338 = vadd.f32 %v1336, 0.2548296
        %v1339 = vmul.f32 %v1337, %v1321
        %v1340 = vmul.f32 %v1338, %v1322
        %v1341 = vsub.f32 0.0, %v1307
        %v1342 = vsub.f32 0.0, %v1308
        %v1343 = vmul.f32 %v1341, %v1307
        %v1344 = vmul.f32 %v1342, %v1308
        %v1345 = vmul.f32 %v1343, 1.442695
        %v1346 = vpow.pop %v1345
        %v1347 = vmul.f32 %v1344, 1.442695
        %v1348 = vpow.pop %v1347
        %v1349 = vmul.f32 %v1339, %v1346
        %v1350 = vmul.f32 %v1340, %v1348
        %v1351 = vsub.f32 1.0, %v1349
        %v1352 = vsub.f32 1.0, %v1350
        %vm1353 = vcmp.ge.f32.partialorder %v1307, 0.0
        %vm1354 = vcmp.ge.f32.partialorder %v1308, 0.0
        %v1355 = vsub.f32 0.0, %v1351
        %v1356 = vsub.f32 0.0, %v1352
        %v1357 = vsel %vm1353, %v1351, %v1355
        %v1358 = vsel %vm1354, %v1352, %v1356
        %v1359 = vadd.f32 %v1357, 1.0
        %v1360 = vadd.f32 %v1358, 1.0
        %v1361 = vmul.f32 %v1305, %v1359
        %v1362 = vmul.f32 %v1306, %v1360
        %s1363 = scalar_lea.vmem %s215, 176 [#allocation9]
        %1364 = vst.msk [vmem:[%s1363] sm:$0xff] %vm336, %v1361
        %1365 = vst.msk [vmem:[%s1363 + $0x8] sm:$0xff] %vm336, %v1362
        %s1366 = scalar_lea.vmem %s184, 48 [#allocation2]
        %v1367 = vld [vmem:[%s1366] sm:$0xff]
        %v1368 = vld [vmem:[%s1366 + $0x8] sm:$0xff]
        %1371 = vrot.lane.b32.xlu0 %v1367, 127
        %v1372 = vpop.permute.xlu0 %1371
        %1373 = vrot.lane.b32.xlu0 %v1368, 127
        %v1374 = vpop.permute.xlu0 %1373
        %1377 = vrot.lane.b32.xlu0 %v1367, 15
        %v1378 = vpop.permute.xlu0 %1377
        %1379 = vrot.lane.b32.xlu0 %v1368, 15
        %v1380 = vpop.permute.xlu0 %1379
        %v1383 = vsel %vm232, %v1372, %v1378
        %v1384 = vsel %vm232, %v1374, %v1380
        %v1385 = vrot.slane %v1367, 1
        %v1386 = vrot.slane %v1368, 1
        %v1387 = vsel %vm235, %v1385, %v1386
        %v1391 = vsel %vm235, %v1386, %v1385
        %v1394 = vrot.slane %v1383, 1
        %v1395 = vrot.slane %v1384, 1
        %v1396 = vsel %vm235, %v1394, %v1395
        %v1400 = vsel %vm235, %v1395, %v1394
        %s1401 = sld [smem:[#allocation7 + $0xc]]
        %s1402 = sld [smem:[#allocation6 + $0x30]]
        %v1403 = vstv %s1402
        %v1404 = vmul.f32 %v1367, %v1403
        %v1405 = vmul.f32 %v1368, %v1403
        %v1406 = vstv %s1401
        %v1407 = vadd.f32 %v1406, %v1404
        %v1408 = vadd.f32 %v1406, %v1405
        %s1409 = sld [smem:[#allocation6 + $0x31]]
        %v1410 = vstv %s1409
        %v1411 = vmul.f32 %v1383, %v1410
        %v1412 = vmul.f32 %v1384, %v1410
        %v1413 = vadd.f32 %v1407, %v1411
        %v1414 = vadd.f32 %v1408, %v1412
        %s1415 = sld [smem:[#allocation6 + $0x32]]
        %v1416 = vstv %s1415
        %v1417 = vmul.f32 %v1387, %v1416
        %v1418 = vmul.f32 %v1391, %v1416
        %v1419 = vadd.f32 %v1413, %v1417
        %v1420 = vadd.f32 %v1414, %v1418
        %s1421 = sld [smem:[#allocation6 + $0x33]]
        %v1422 = vstv %s1421
        %v1423 = vmul.f32 %v1396, %v1422
        %v1424 = vmul.f32 %v1400, %v1422
        %v1425 = vadd.f32 %v1419, %v1423
        %v1426 = vadd.f32 %v1420, %v1424
        %v1427 = vmul.f32 %v1425, 0.5
        %v1428 = vmul.f32 %v1426, 0.5
        %v1429 = vmul.f32 %v1425, 0.70710677
        %v1430 = vmul.f32 %v1426, 0.70710677
        %v1431 = vand.u32 2147483647, %v1429
        %v1432 = vand.u32 2147483647, %v1430
        %v1433 = vmul.f32 %v1431, 0.3275911
        %v1434 = vmul.f32 %v1432, 0.3275911
        %v1435 = vadd.f32 %v1433, 1.0
        %v1436 = vadd.f32 %v1434, 1.0
        %v1437 = vrcp.pop %v1435
        %v1438 = vrcp.pop %v1436
        %v1439 = vmul.f32 %v1435, %v1437
        %v1440 = vmul.f32 %v1436, %v1438
        %v1441 = vsub.f32 2.0, %v1439
        %v1442 = vsub.f32 2.0, %v1440
        %v1443 = vmul.f32 %v1437, %v1441
        %v1444 = vmul.f32 %v1438, %v1442
        %v1445 = vmul.f32 %v1443, 1.0614054
        %v1446 = vmul.f32 %v1444, 1.0614054
        %v1447 = vadd.f32 %v1445, -1.4531521
        %v1448 = vadd.f32 %v1446, -1.4531521
        %v1449 = vmul.f32 %v1447, %v1443
        %v1450 = vmul.f32 %v1448, %v1444
        %v1451 = vadd.f32 %v1449, 1.4214138
        %v1452 = vadd.f32 %v1450, 1.4214138
        %v1453 = vmul.f32 %v1451, %v1443
        %v1454 = vmul.f32 %v1452, %v1444
        %v1455 = vadd.f32 %v1453, -0.28449672
        %v1456 = vadd.f32 %v1454, -0.28449672
        %v1457 = vmul.f32 %v1455, %v1443
        %v1458 = vmul.f32 %v1456, %v1444
        %v1459 = vadd.f32 %v1457, 0.2548296
        %v1460 = vadd.f32 %v1458, 0.2548296
        %v1461 = vmul.f32 %v1459, %v1443
        %v1462 = vmul.f32 %v1460, %v1444
        %v1463 = vsub.f32 0.0, %v1429
        %v1464 = vsub.f32 0.0, %v1430
        %v1465 = vmul.f32 %v1463, %v1429
        %v1466 = vmul.f32 %v1464, %v1430
        %v1467 = vmul.f32 %v1465, 1.442695
        %v1468 = vpow.pop %v1467
        %v1469 = vmul.f32 %v1466, 1.442695
        %v1470 = vpow.pop %v1469
        %v1471 = vmul.f32 %v1461, %v1468
        %v1472 = vmul.f32 %v1462, %v1470
        %v1473 = vsub.f32 1.0, %v1471
        %v1474 = vsub.f32 1.0, %v1472
        %vm1475 = vcmp.ge.f32.partialorder %v1429, 0.0
        %vm1476 = vcmp.ge.f32.partialorder %v1430, 0.0
        %v1477 = vsub.f32 0.0, %v1473
        %v1478 = vsub.f32 0.0, %v1474
        %v1479 = vsel %vm1475, %v1473, %v1477
        %v1480 = vsel %vm1476, %v1474, %v1478
        %v1481 = vadd.f32 %v1479, 1.0
        %v1482 = vadd.f32 %v1480, 1.0
        %v1483 = vmul.f32 %v1427, %v1481
        %v1484 = vmul.f32 %v1428, %v1482
        %s1485 = scalar_lea.vmem %s215, 192 [#allocation9]
        %1486 = vst.msk [vmem:[%s1485] sm:$0xff] %vm336, %v1483
        %1487 = vst.msk [vmem:[%s1485 + $0x8] sm:$0xff] %vm336, %v1484
        %s1488 = sld [smem:[#allocation7 + $0xd]]
        %s1489 = sld [smem:[#allocation6 + $0x34]]
        %v1490 = vstv %s1489
        %v1491 = vmul.f32 %v1367, %v1490
        %v1492 = vmul.f32 %v1368, %v1490
        %v1493 = vstv %s1488
        %v1494 = vadd.f32 %v1493, %v1491
        %v1495 = vadd.f32 %v1493, %v1492
        %s1496 = sld [smem:[#allocation6 + $0x35]]
        %v1497 = vstv %s1496
        %v1498 = vmul.f32 %v1383, %v1497
        %v1499 = vmul.f32 %v1384, %v1497
        %v1500 = vadd.f32 %v1494, %v1498
        %v1501 = vadd.f32 %v1495, %v1499
        %s1502 = sld [smem:[#allocation6 + $0x36]]
        %v1503 = vstv %s1502
        %v1504 = vmul.f32 %v1387, %v1503
        %v1505 = vmul.f32 %v1391, %v1503
        %v1506 = vadd.f32 %v1500, %v1504
        %v1507 = vadd.f32 %v1501, %v1505
        %s1508 = sld [smem:[#allocation6 + $0x37]]
        %v1509 = vstv %s1508
        %v1510 = vmul.f32 %v1396, %v1509
        %v1511 = vmul.f32 %v1400, %v1509
        %v1512 = vadd.f32 %v1506, %v1510
        %v1513 = vadd.f32 %v1507, %v1511
        %v1514 = vmul.f32 %v1512, 0.5
        %v1515 = vmul.f32 %v1513, 0.5
        %v1516 = vmul.f32 %v1512, 0.70710677
        %v1517 = vmul.f32 %v1513, 0.70710677
        %v1518 = vand.u32 2147483647, %v1516
        %v1519 = vand.u32 2147483647, %v1517
        %v1520 = vmul.f32 %v1518, 0.3275911
        %v1521 = vmul.f32 %v1519, 0.3275911
        %v1522 = vadd.f32 %v1520, 1.0
        %v1523 = vadd.f32 %v1521, 1.0
        %v1524 = vrcp.pop %v1522
        %v1525 = vrcp.pop %v1523
        %v1526 = vmul.f32 %v1522, %v1524
        %v1527 = vmul.f32 %v1523, %v1525
        %v1528 = vsub.f32 2.0, %v1526
        %v1529 = vsub.f32 2.0, %v1527
        %v1530 = vmul.f32 %v1524, %v1528
        %v1531 = vmul.f32 %v1525, %v1529
        %v1532 = vmul.f32 %v1530, 1.0614054
        %v1533 = vmul.f32 %v1531, 1.0614054
        %v1534 = vadd.f32 %v1532, -1.4531521
        %v1535 = vadd.f32 %v1533, -1.4531521
        %v1536 = vmul.f32 %v1534, %v1530
        %v1537 = vmul.f32 %v1535, %v1531
        %v1538 = vadd.f32 %v1536, 1.4214138
        %v1539 = vadd.f32 %v1537, 1.4214138
        %v1540 = vmul.f32 %v1538, %v1530
        %v1541 = vmul.f32 %v1539, %v1531
        %v1542 = vadd.f32 %v1540, -0.28449672
        %v1543 = vadd.f32 %v1541, -0.28449672
        %v1544 = vmul.f32 %v1542, %v1530
        %v1545 = vmul.f32 %v1543, %v1531
        %v1546 = vadd.f32 %v1544, 0.2548296
        %v1547 = vadd.f32 %v1545, 0.2548296
        %v1548 = vmul.f32 %v1546, %v1530
        %v1549 = vmul.f32 %v1547, %v1531
        %v1550 = vsub.f32 0.0, %v1516
        %v1551 = vsub.f32 0.0, %v1517
        %v1552 = vmul.f32 %v1550, %v1516
        %v1553 = vmul.f32 %v1551, %v1517
        %v1554 = vmul.f32 %v1552, 1.442695
        %v1555 = vpow.pop %v1554
        %v1556 = vmul.f32 %v1553, 1.442695
        %v1557 = vpow.pop %v1556
        %v1558 = vmul.f32 %v1548, %v1555
        %v1559 = vmul.f32 %v1549, %v1557
        %v1560 = vsub.f32 1.0, %v1558
        %v1561 = vsub.f32 1.0, %v1559
        %vm1562 = vcmp.ge.f32.partialorder %v1516, 0.0
        %vm1563 = vcmp.ge.f32.partialorder %v1517, 0.0
        %v1564 = vsub.f32 0.0, %v1560
        %v1565 = vsub.f32 0.0, %v1561
        %v1566 = vsel %vm1562, %v1560, %v1564
        %v1567 = vsel %vm1563, %v1561, %v1565
        %v1568 = vadd.f32 %v1566, 1.0
        %v1569 = vadd.f32 %v1567, 1.0
        %v1570 = vmul.f32 %v1514, %v1568
        %v1571 = vmul.f32 %v1515, %v1569
        %s1572 = scalar_lea.vmem %s215, 208 [#allocation9]
        %1573 = vst.msk [vmem:[%s1572] sm:$0xff] %vm336, %v1570
        %1574 = vst.msk [vmem:[%s1572 + $0x8] sm:$0xff] %vm336, %v1571
        %s1575 = sld [smem:[#allocation7 + $0xe]]
        %s1576 = sld [smem:[#allocation6 + $0x38]]
        %v1577 = vstv %s1576
        %v1578 = vmul.f32 %v1367, %v1577
        %v1579 = vmul.f32 %v1368, %v1577
        %v1580 = vstv %s1575
        %v1581 = vadd.f32 %v1580, %v1578
        %v1582 = vadd.f32 %v1580, %v1579
        %s1583 = sld [smem:[#allocation6 + $0x39]]
        %v1584 = vstv %s1583
        %v1585 = vmul.f32 %v1383, %v1584
        %v1586 = vmul.f32 %v1384, %v1584
        %v1587 = vadd.f32 %v1581, %v1585
        %v1588 = vadd.f32 %v1582, %v1586
        %s1589 = sld [smem:[#allocation6 + $0x3a]]
        %v1590 = vstv %s1589
        %v1591 = vmul.f32 %v1387, %v1590
        %v1592 = vmul.f32 %v1391, %v1590
        %v1593 = vadd.f32 %v1587, %v1591
        %v1594 = vadd.f32 %v1588, %v1592
        %s1595 = sld [smem:[#allocation6 + $0x3b]]
        %v1596 = vstv %s1595
        %v1597 = vmul.f32 %v1396, %v1596
        %v1598 = vmul.f32 %v1400, %v1596
        %v1599 = vadd.f32 %v1593, %v1597
        %v1600 = vadd.f32 %v1594, %v1598
        %v1601 = vmul.f32 %v1599, 0.5
        %v1602 = vmul.f32 %v1600, 0.5
        %v1603 = vmul.f32 %v1599, 0.70710677
        %v1604 = vmul.f32 %v1600, 0.70710677
        %v1605 = vand.u32 2147483647, %v1603
        %v1606 = vand.u32 2147483647, %v1604
        %v1607 = vmul.f32 %v1605, 0.3275911
        %v1608 = vmul.f32 %v1606, 0.3275911
        %v1609 = vadd.f32 %v1607, 1.0
        %v1610 = vadd.f32 %v1608, 1.0
        %v1611 = vrcp.pop %v1609
        %v1612 = vrcp.pop %v1610
        %v1613 = vmul.f32 %v1609, %v1611
        %v1614 = vmul.f32 %v1610, %v1612
        %v1615 = vsub.f32 2.0, %v1613
        %v1616 = vsub.f32 2.0, %v1614
        %v1617 = vmul.f32 %v1611, %v1615
        %v1618 = vmul.f32 %v1612, %v1616
        %v1619 = vmul.f32 %v1617, 1.0614054
        %v1620 = vmul.f32 %v1618, 1.0614054
        %v1621 = vadd.f32 %v1619, -1.4531521
        %v1622 = vadd.f32 %v1620, -1.4531521
        %v1623 = vmul.f32 %v1621, %v1617
        %v1624 = vmul.f32 %v1622, %v1618
        %v1625 = vadd.f32 %v1623, 1.4214138
        %v1626 = vadd.f32 %v1624, 1.4214138
        %v1627 = vmul.f32 %v1625, %v1617
        %v1628 = vmul.f32 %v1626, %v1618
        %v1629 = vadd.f32 %v1627, -0.28449672
        %v1630 = vadd.f32 %v1628, -0.28449672
        %v1631 = vmul.f32 %v1629, %v1617
        %v1632 = vmul.f32 %v1630, %v1618
        %v1633 = vadd.f32 %v1631, 0.2548296
        %v1634 = vadd.f32 %v1632, 0.2548296
        %v1635 = vmul.f32 %v1633, %v1617
        %v1636 = vmul.f32 %v1634, %v1618
        %v1637 = vsub.f32 0.0, %v1603
        %v1638 = vsub.f32 0.0, %v1604
        %v1639 = vmul.f32 %v1637, %v1603
        %v1640 = vmul.f32 %v1638, %v1604
        %v1641 = vmul.f32 %v1639, 1.442695
        %v1642 = vpow.pop %v1641
        %v1643 = vmul.f32 %v1640, 1.442695
        %v1644 = vpow.pop %v1643
        %v1645 = vmul.f32 %v1635, %v1642
        %v1646 = vmul.f32 %v1636, %v1644
        %v1647 = vsub.f32 1.0, %v1645
        %v1648 = vsub.f32 1.0, %v1646
        %vm1649 = vcmp.ge.f32.partialorder %v1603, 0.0
        %vm1650 = vcmp.ge.f32.partialorder %v1604, 0.0
        %v1651 = vsub.f32 0.0, %v1647
        %v1652 = vsub.f32 0.0, %v1648
        %v1653 = vsel %vm1649, %v1647, %v1651
        %v1654 = vsel %vm1650, %v1648, %v1652
        %v1655 = vadd.f32 %v1653, 1.0
        %v1656 = vadd.f32 %v1654, 1.0
        %v1657 = vmul.f32 %v1601, %v1655
        %v1658 = vmul.f32 %v1602, %v1656
        %s1659 = scalar_lea.vmem %s215, 224 [#allocation9]
        %1660 = vst.msk [vmem:[%s1659] sm:$0xff] %vm336, %v1657
        %1661 = vst.msk [vmem:[%s1659 + $0x8] sm:$0xff] %vm336, %v1658
        %s1662 = sld [smem:[#allocation7 + $0xf]]
        %s1663 = sld [smem:[#allocation6 + $0x3c]]
        %v1664 = vstv %s1663
        %v1665 = vmul.f32 %v1367, %v1664
        %v1666 = vmul.f32 %v1368, %v1664
        %v1667 = vstv %s1662
        %v1668 = vadd.f32 %v1667, %v1665
        %v1669 = vadd.f32 %v1667, %v1666
        %s1670 = sld [smem:[#allocation6 + $0x3d]]
        %v1671 = vstv %s1670
        %v1672 = vmul.f32 %v1383, %v1671
        %v1673 = vmul.f32 %v1384, %v1671
        %v1674 = vadd.f32 %v1668, %v1672
        %v1675 = vadd.f32 %v1669, %v1673
        %s1676 = sld [smem:[#allocation6 + $0x3e]]
        %v1677 = vstv %s1676
        %v1678 = vmul.f32 %v1387, %v1677
        %v1679 = vmul.f32 %v1391, %v1677
        %v1680 = vadd.f32 %v1674, %v1678
        %v1681 = vadd.f32 %v1675, %v1679
        %s1682 = sld [smem:[#allocation6 + $0x3f]]
        %v1683 = vstv %s1682
        %v1684 = vmul.f32 %v1396, %v1683
        %v1685 = vmul.f32 %v1400, %v1683
        %v1686 = vadd.f32 %v1680, %v1684
        %v1687 = vadd.f32 %v1681, %v1685
        %v1688 = vmul.f32 %v1686, 0.5
        %v1689 = vmul.f32 %v1687, 0.5
        %v1690 = vmul.f32 %v1686, 0.70710677
        %v1691 = vmul.f32 %v1687, 0.70710677
        %v1692 = vand.u32 2147483647, %v1690
        %v1693 = vand.u32 2147483647, %v1691
        %v1694 = vmul.f32 %v1692, 0.3275911
        %v1695 = vmul.f32 %v1693, 0.3275911
        %v1696 = vadd.f32 %v1694, 1.0
        %v1697 = vadd.f32 %v1695, 1.0
        %v1698 = vrcp.pop %v1696
        %v1699 = vrcp.pop %v1697
        %v1700 = vmul.f32 %v1696, %v1698
        %v1701 = vmul.f32 %v1697, %v1699
        %v1702 = vsub.f32 2.0, %v1700
        %v1703 = vsub.f32 2.0, %v1701
        %v1704 = vmul.f32 %v1698, %v1702
        %v1705 = vmul.f32 %v1699, %v1703
        %v1706 = vmul.f32 %v1704, 1.0614054
        %v1707 = vmul.f32 %v1705, 1.0614054
        %v1708 = vadd.f32 %v1706, -1.4531521
        %v1709 = vadd.f32 %v1707, -1.4531521
        %v1710 = vmul.f32 %v1708, %v1704
        %v1711 = vmul.f32 %v1709, %v1705
        %v1712 = vadd.f32 %v1710, 1.4214138
        %v1713 = vadd.f32 %v1711, 1.4214138
        %v1714 = vmul.f32 %v1712, %v1704
        %v1715 = vmul.f32 %v1713, %v1705
        %v1716 = vadd.f32 %v1714, -0.28449672
        %v1717 = vadd.f32 %v1715, -0.28449672
        %v1718 = vmul.f32 %v1716, %v1704
        %v1719 = vmul.f32 %v1717, %v1705
        %v1720 = vadd.f32 %v1718, 0.2548296
        %v1721 = vadd.f32 %v1719, 0.2548296
        %v1722 = vmul.f32 %v1720, %v1704
        %v1723 = vmul.f32 %v1721, %v1705
        %v1724 = vsub.f32 0.0, %v1690
        %v1725 = vsub.f32 0.0, %v1691
        %v1726 = vmul.f32 %v1724, %v1690
        %v1727 = vmul.f32 %v1725, %v1691
        %v1728 = vmul.f32 %v1726, 1.442695
        %v1729 = vpow.pop %v1728
        %v1730 = vmul.f32 %v1727, 1.442695
        %v1731 = vpow.pop %v1730
        %v1732 = vmul.f32 %v1722, %v1729
        %v1733 = vmul.f32 %v1723, %v1731
        %v1734 = vsub.f32 1.0, %v1732
        %v1735 = vsub.f32 1.0, %v1733
        %vm1736 = vcmp.ge.f32.partialorder %v1690, 0.0
        %vm1737 = vcmp.ge.f32.partialorder %v1691, 0.0
        %v1738 = vsub.f32 0.0, %v1734
        %v1739 = vsub.f32 0.0, %v1735
        %v1740 = vsel %vm1736, %v1734, %v1738
        %v1741 = vsel %vm1737, %v1735, %v1739
        %v1742 = vadd.f32 %v1740, 1.0
        %v1743 = vadd.f32 %v1741, 1.0
        %v1744 = vmul.f32 %v1688, %v1742
        %v1745 = vmul.f32 %v1689, %v1743
        %s1746 = scalar_lea.vmem %s215, 240 [#allocation9]
        %1747 = vst.msk [vmem:[%s1746] sm:$0xff] %vm336, %v1744
        %1748 = vst.msk [vmem:[%s1746 + $0x8] sm:$0xff] %vm336, %v1745
        %s1749 = sand.u32 %s98, 1
        %s1750 = scalar_lea.sflag [#allocation4], %s1749
        %s1751 = sand.u32 %s98, 1
        %s1752 = smul.addr %s1751, 256
        %s1753 = scalar_lea.vmem [#allocation9], %s1752
        // Predicated region
        $region45: #{tpu_custom_call.1} parent=31 // pred_check
          %p1754 = pneg %p108
        $region46: #{tpu_custom_call.1} parent=31 // pred_check_branch
          %1756 = sbr.rel (%p1754) target = $region48
        $region47: #{tpu_custom_call.1} parent=31 // pred_region
          %s1758 = ssub.s32 4096, 4096
          %1759 = vsyncadd %s1750, %s1758
          %s1760 = smul.addr %s22, 32
          %s1761 = smul.addr %s1760, 128
          %s1762 = scalar_lea.hbm %s3, %s1761
          %s1763 = sshll.u32 %s1753, 4
          %s1764 = int_to_ptr.vmem [resolvable:$true] %s1763
          %1769 = dma.vmem_to_hbm [thread:$0]  %s1764, 4096, %s1762, %s1750, 128, 128, 8
        $region48: #{tpu_custom_call.1} parent=31 // pred_fallthru
          _
      $region32: #{tpu_custom_call.1} parent=5 // pred_fallthru
        _
      %p1770 = scmp.le.s32.totalorder 2, %s17
      // Predicated region
      $region49: #{tpu_custom_call.1} parent=5 // pred_check
        %p1771 = pneg %p1770
      $region50: #{tpu_custom_call.1} parent=5 // pred_check_branch
        %1773 = sbr.rel (%p1771) target = $region52
      $region51: #{tpu_custom_call.1} parent=5 // pred_region
        %s1774 = ssub.s32 %s17, 2
        // Predicated region
        $region53: #{tpu_custom_call.1} parent=51 // pred_check
          %p1775 = pneg %p114
        $region54: #{tpu_custom_call.1} parent=51 // pred_check_branch
          %1777 = sbr.rel (%p1775) target = $region56
        $region55: #{tpu_custom_call.1} parent=51 // pred_region
          %s1778 = sand.u32 %s99, 1
          %s1779 = scalar_lea.sflag [#allocation4], %s1778
          %s1780 = sand.u32 %s99, 1
          %s1781 = smul.addr %s1780, 256
          %s1782 = scalar_lea.vmem [#allocation9], %s1781
          %1783 = dma.done %s1779, 4096
        $region56: #{tpu_custom_call.1} parent=51 // pred_fallthru
          _
      $region52: #{tpu_custom_call.1} parent=5 // pred_fallthru
        _
    $region6: #{tpu_custom_call.1} parent=1 // loop_footer
      %s21 = sadd.s32 1, %s17
    $region7: #{tpu_custom_call.1} parent=1 // loop_footer_branch
      %16 = sbr.rel target = $region3
    $region8: #{tpu_custom_call.1} parent=1 // loop_exit
      _
    %1784 = vsyncpa [#allocation3], 1
    %s1785 = scalar_lea.sflag [#allocation3], 1
    %1786 = vsyncpa %s1785, 1
    %1787 = vsyncpa [#allocation4], 1
    %s1788 = scalar_lea.sflag [#allocation4], 1
    %1789 = vsyncpa %s1788, 1
    %1790 = vsyncpa [#allocation5], 1
    %s1791 = scalar_lea.sflag [#allocation5], 1
    %1792 = vsyncpa %s1791, 1
    %1793 = vsyncpa [#allocation8], 1

</llo_original>
